<compile_context>
chip_gen: v7x
topology: tpu7x:2x2x1
jax: 0.10.0
libtpu: 0.0.40
codegen_flags: <defaults>
</compile_context>

<pallas_src>
import math

import jax
import jax.numpy as jnp
from jax.experimental import pallas as pl
from jax.experimental.pallas import tpu as pltpu

_GELU_C = math.sqrt(2.0 / math.pi)


def _new_gelu(x):
    # Identical to the BERT/GPT tanh-approx GELU in the reference module.
    # x*x*x (two VPU multiplies) instead of pow(x, 3.0), which can lower to exp/log
    # on the single EUP port that tanh already occupies.
    return 0.5 * x * (1.0 + jnp.tanh(_GELU_C * (x + 0.044715 * (x * x * x))))


def _round_up(a, b):
    return (a + b - 1) // b * b


def _device_kind():
    try:
        return jax.devices()[0].device_kind.lower()
    except Exception:
        return ""


def _vmem_capacity_bytes(kind):
    try:
        cap = int(pltpu.get_tpu_info().vmem_capacity_bytes)
        if cap >= (16 << 20):
            return cap
    except Exception:
        pass
    # v7x has 64 MiB VMEM per TensorCore; v5e / v6e have 128 MiB.
    return (64 << 20) if "v7" in kind else (128 << 20)


def _pick_gelu_dtype(kind=None):
    # bf16 VALU/EUP exist on v6e/v7x (double VPU/EUP throughput, half vreg pressure);
    # pre-v6 chips have no bf16 vector units, so keep the GELU chain in f32 there.
    kind = _device_kind() if kind is None else kind
    pre_v6 = any(f"v{g}" in kind for g in (2, 3, 4, 5))
    return jnp.float32 if pre_v6 else jnp.bfloat16


def _weight_spec(shape, index_map, extra_buffering):
    # Deeper weight pipeline (Buffered(3)) hides per-step DMA burstiness on v5e in the
    # streamed regime; fall back gracefully if this jax version lacks pipeline_mode.
    if extra_buffering:
        try:
            return pl.BlockSpec(shape, index_map, pipeline_mode=pl.Buffered(3))
        except TypeError:
            pass
    return pl.BlockSpec(shape, index_map)


# ----------------------------------------------------------------------------------
# Kernels
# ----------------------------------------------------------------------------------
def _make_resident_kernel(gelu_dtype):
    # grid = (row tiles,)  — both weight matrices live in VMEM for the whole call.
    def kernel(x_ref, w_fc_ref, b_fc_ref, w_pr_ref, b_pr_ref, o_ref):
        h = jnp.dot(x_ref[...], w_fc_ref[...],
                    preferred_element_type=jnp.float32) + b_fc_ref[...]
        h = _new_gelu(h.astype(gelu_dtype))
        y = jnp.dot(h.astype(w_pr_ref.dtype), w_pr_ref[...],
                    preferred_element_type=jnp.float32) + b_pr_ref[...]
        # TODO(synk): dropout is identity at inference (p applied only in training);
        # stochastic dropout would use pltpu.prng_seed/prng_random_bits with a seed input.
        o_ref[...] = y.astype(o_ref.dtype)

    return kernel


def _make_streamed_kernel(tk, gelu_dtype):
    # grid = (row tiles [parallel], hidden tiles [arbitrary / reduction])
    def kernel(x_ref, w_fc_ref, b_fc_ref, w_pr_ref, b_pr_ref, o_ref, acc_ref):
        k = pl.program_id(1)

        @pl.when(k == 0)
        def _init():
            # Seed the accumulator with the projection bias.
            acc_ref[...] = jnp.broadcast_to(b_pr_ref[...], acc_ref.shape)

        start = k * tk
        if tk % 128 == 0:
            start = pl.multiple_of(start, 128)
        b_fc = b_fc_ref[:, pl.ds(start, tk)]          # b_fc is fully resident (1, H)

        h = jnp.dot(x_ref[...], w_fc_ref[...],
                    preferred_element_type=jnp.float32) + b_fc
        h = _new_gelu(h.astype(gelu_dtype))
        acc_ref[...] += jnp.dot(h.astype(w_pr_ref.dtype), w_pr_ref[...],
                                preferred_element_type=jnp.float32)

        # TODO(synk): dropout is identity at inference; see resident kernel note.
        @pl.when(k == pl.num_programs(1) - 1)
        def _finalize():
            o_ref[...] = acc_ref[...].astype(o_ref.dtype)

    return kernel


# ----------------------------------------------------------------------------------
# Wrapper
# ----------------------------------------------------------------------------------
def mlp_forward(x, w_fc, b_fc, w_proj, b_proj, *, out_dtype=None):
    """x: (B, T, n_embd). Weights as (in, out). Returns (B, T, n_embd)."""
    B, T, C = x.shape
    H = w_fc.shape[1]
    M = B * T
    out_dtype = x.dtype if out_dtype is None else jnp.dtype(out_dtype)
    out_isz = jnp.dtype(out_dtype).itemsize

    kind = _device_kind()
    vmem_cap = _vmem_capacity_bytes(kind)
    vmem_budget = int(vmem_cap * 0.75)             # ~48 MiB on v7x, ~96 MiB on v5e/v6e
    is_pre_v6 = any(f"v{g}" in kind for g in (2, 3, 4, 5))
    is_v7 = "v7" in kind
    gelu_dtype = _pick_gelu_dtype(kind)

    # ---- regime & tile selection ---------------------------------------------
    # Resident regime: both bf16 weights stay in VMEM (counted conservatively at
    # 2 buffers each) and are DMA'd from HBM exactly once.
    def resident_est(tm_):
        return (2 * 2 * (C * H * 2)                          # w_fc + w_proj, bf16, 2 bufs
                + 2 * tm_ * C * 2 + 2 * tm_ * C * out_isz    # x / out tiles (dbl-buffered)
                + (H + C) * 4                                # biases (f32)
                + tm_ * H * 10)                              # h f32 + bf16 cast + temps

    tm = max(8, min(256, _round_up(M, 8)))
    resident = resident_est(tm) <= vmem_budget

    n_wbuf = 2
    if resident:
        tk = H
        est = resident_est(tm)
    else:
        # Streamed regime: arithmetic intensity is ~tm flops per weight byte, so push tm
        # toward the compute-bound knee (v6e ~650 fl/B, v7x ~310, v5e ~240 fl/B).
        tm = 256 if is_pre_v6 else 512
        tm = max(8, min(tm, _round_up(M, 8)))
        n_wbuf = 3 if is_pre_v6 else 2       # v5e: deeper weight pipeline hides DMA bursts

        if H % 128 != 0:
            tk = H                            # fallback: whole hidden dim per step
        else:
            tk = max(128, (min(512, H) // 128) * 128)
            while H % tk != 0:
                tk -= 128

        def stream_est(tm_, tk_):
            return (2 * tm_ * C * 2 + 2 * tm_ * C * out_isz  # x / out tiles
                    + n_wbuf * 2 * (C * tk_ * 2)             # w_fc + w_proj tiles (bf16)
                    + (H + 2 * C) * 4                        # resident b_fc + b_proj
                    + tm_ * C * 4                            # f32 accumulator scratch
                    + tm_ * tk_ * 10)                        # h f32 + bf16 cast + temps

        # Shrink tk, then tm, until the estimate fits the generation VMEM budget.
        while stream_est(tm, tk) > vmem_budget and H % 128 == 0 and tk > 128:
            nt = tk - 128
            while nt >= 128 and H % nt != 0:
                nt -= 128
            if nt < 128:
                break
            tk = nt
        while stream_est(tm, tk) > vmem_budget and tm > 64:
            tm = max(8, _round_up(tm // 2, 8))
        est = stream_est(tm, tk)
        # TODO(synk): for very large C on v7x, additionally tile the output/N dimension
        # instead of holding a full (tm, C) f32 accumulator and (tk, C) w_proj block.

    # Ensure >=2 row tiles so the "parallel" axis shards across v7x's two TensorCores.
    if is_v7 and M > 8 and _round_up(M, tm) // tm < 2:
        tm = max(8, _round_up((M + 1) // 2, 8))
    Mp = _round_up(M, tm)
    n_row = Mp // tm

    # ---- operands: bf16 for the MXU, f32 accumulation ------------------------
    x2 = x.reshape(M, C).astype(jnp.bfloat16)
    if Mp != M:
        x2 = jnp.pad(x2, ((0, Mp - M), (0, 0)))
    w_fc_b = w_fc.astype(jnp.bfloat16)
    w_pr_b = w_proj.astype(jnp.bfloat16)
    b_fc2 = b_fc.reshape(1, H).astype(jnp.float32)
    b_pr2 = b_proj.reshape(1, C).astype(jnp.float32)

    vmem_limit = int(min(max(est * 1.3 + (4 << 20), 32 << 20), vmem_budget))

    w_bytes_hbm = 2 * C * H * 2 * (1 if resident else n_row)
    cost = pl.CostEstimate(
        flops=4 * Mp * C * H,                    # two matmuls of 2*M*C*H each
        transcendentals=Mp * H,                  # tanh per hidden activation
        bytes_accessed=int(Mp * C * 2 + Mp * C * out_isz + w_bytes_hbm + (H + C) * 4),
    )

    if resident:
        kernel = _make_resident_kernel(gelu_dtype)
        grid_spec = pltpu.PrefetchScalarGridSpec(
            num_scalar_prefetch=0,
            grid=(n_row,),
            in_specs=[
                pl.BlockSpec((tm, C), lambda i: (i, 0)),   # activation row tile
                pl.BlockSpec((C, H), lambda i: (0, 0)),    # w_fc: resident, DMA'd once
                pl.BlockSpec((1, H), lambda i: (0, 0)),    # b_fc: resident
                pl.BlockSpec((H, C), lambda i: (0, 0)),    # w_proj: resident, DMA'd once
                pl.BlockSpec((1, C), lambda i: (0, 0)),    # b_proj: resident
            ],
            out_specs=pl.BlockSpec((tm, C), lambda i: (i, 0)),
        )
        dim_sem = ("parallel",)
    else:
        kernel = _make_streamed_kernel(tk, gelu_dtype)
        extra_buf = n_wbuf > 2
        grid_spec = pltpu.PrefetchScalarGridSpec(
            num_scalar_prefetch=0,
            grid=(n_row, H // tk),
            in_specs=[
                pl.BlockSpec((tm, C), lambda i, k: (i, 0)),          # activations
                _weight_spec((C, tk), lambda i, k: (0, k), extra_buf),  # w_fc k-tile
                pl.BlockSpec((1, H), lambda i, k: (0, 0)),           # b_fc resident
                _weight_spec((tk, C), lambda i, k: (k, 0), extra_buf),  # w_proj k-tile
                pl.BlockSpec((1, C), lambda i, k: (0, 0)),           # b_proj resident
            ],
            out_specs=pl.BlockSpec((tm, C), lambda i, k: (i, 0)),
            scratch_shapes=[pltpu.VMEM((tm, C), jnp.float32)],
        )
        dim_sem = ("parallel", "arbitrary")

    out = pl.pallas_call(
        kernel,
        out_shape=jax.ShapeDtypeStruct((Mp, C), out_dtype),
        grid_spec=grid_spec,
        compiler_params=pltpu.CompilerParams(
            dimension_semantics=dim_sem,
            vmem_limit_bytes=vmem_limit,
        ),
        cost_estimate=cost,
    )(x2, w_fc_b, b_fc2, w_pr_b, b_pr2)

    return out[:M].reshape(B, T, C)


if __name__ == "__main__":
    # Config implied by the module: n_embd, expansion=4, bias=True, dropout=0.0 (eval).
    # Lane-dense (C multiple of 128) small shapes; weights fit VMEM -> resident path.
    B, T, n_embd, expansion = 2, 256, 256, 4
    hidden = expansion * n_embd

    key = jax.random.PRNGKey(0)
    k_x, k_wfc, k_bfc, k_wpr, k_bpr = jax.random.split(key, 5)

    x = jax.random.normal(k_x, (B, T, n_embd), dtype=jnp.float32)
    # Parameters stored transposed as (in, out) relative to nn.Linear's weight.
    w_fc = jax.random.normal(k_wfc, (n_embd, hidden), dtype=jnp.float32) * 0.02
    b_fc = jax.random.normal(k_bfc, (hidden,), dtype=jnp.float32) * 0.02
    w_proj = jax.random.normal(k_wpr, (hidden, n_embd), dtype=jnp.float32) * 0.02
    b_proj = jax.random.normal(k_bpr, (n_embd,), dtype=jnp.float32) * 0.02

    y = mlp_forward(x, w_fc, b_fc, w_proj, b_proj)
    jax.block_until_ready(y)

    # Pure-JAX reference using the same bf16 MXU operands / f32 accumulation and the
    # same GELU compute dtype the kernel picked for this chip generation.
    gdt = _pick_gelu_dtype()
    xb = x.reshape(-1, n_embd).astype(jnp.bfloat16)
    h_ref = jnp.dot(xb, w_fc.astype(jnp.bfloat16),
                    preferred_element_type=jnp.float32) + b_fc
    h_ref = _new_gelu(h_ref.astype(gdt)).astype(jnp.bfloat16)
    ref = jnp.dot(h_ref, w_proj.astype(jnp.bfloat16),
                  preferred_element_type=jnp.float32) + b_proj
    ref = ref.reshape(B, T, n_embd).astype(y.dtype)

    assert jnp.allclose(y, ref, atol=1e-2, rtol=1e-2), "mismatch vs reference"

    print("KERNEL_OK")
</pallas_src>

<mosaic_0001>
module attributes {stable_mosaic.version = 11 : i64} {
  func.func @kernel(%arg0: i32, %arg1: memref<256x256xbf16, #tpu.memory_space<vmem>>, %arg2: memref<256x1024xbf16, #tpu.memory_space<vmem>>, %arg3: memref<1x1024xf32, #tpu.memory_space<vmem>>, %arg4: memref<1024x256xbf16, #tpu.memory_space<vmem>>, %arg5: memref<1x256xf32, #tpu.memory_space<vmem>>, %arg6: memref<256x256xf32, #tpu.memory_space<vmem>>) attributes {dimension_semantics = [#tpu.dimension_semantics<parallel>], iteration_bounds = array<i64: 2>, scalar_prefetch = 0 : i64, scratch_operands = 0 : i64, tpu.core_type = #tpu.core_type<tc>, window_params = [{transform_indices = @transform_0, window_bounds = array<i64: 256, 256>}, {pipeline_mode = #tpu.pipeline_mode<synchronous>, transform_indices = @transform_1, window_bounds = array<i64: 256, 1024>}, {pipeline_mode = #tpu.pipeline_mode<synchronous>, transform_indices = @transform_2, window_bounds = array<i64: 1, 1024>}, {pipeline_mode = #tpu.pipeline_mode<synchronous>, transform_indices = @transform_3, window_bounds = array<i64: 1024, 256>}, {pipeline_mode = #tpu.pipeline_mode<synchronous>, transform_indices = @transform_4, window_bounds = array<i64: 1, 256>}, {transform_indices = @transform_5, window_bounds = array<i64: 256, 256>}]} {
    %c0 = arith.constant 0 : index
    %c0_0 = arith.constant 0 : index
    %0 = vector.load %arg1[%c0, %c0_0] : memref<256x256xbf16, #tpu.memory_space<vmem>>, vector<256x256xbf16>
    %c0_1 = arith.constant 0 : index
    %c0_2 = arith.constant 0 : index
    %1 = vector.load %arg2[%c0_1, %c0_2] : memref<256x1024xbf16, #tpu.memory_space<vmem>>, vector<256x1024xbf16>
    %cst = arith.constant dense<0.000000e+00> : vector<256x1024xf32>
    %2 = tpu.matmul %0, %1, %cst {dimension_numbers = #tpu.dot_dimension_numbers<[1], [0], [0], [1], [0, 0, 1, 1], [], []>} : vector<256x256xbf16>, vector<256x1024xbf16>, vector<256x1024xf32> -> vector<256x1024xf32>
    %c0_3 = arith.constant 0 : index
    %c0_4 = arith.constant 0 : index
    %3 = vector.load %arg3[%c0_3, %c0_4] : memref<1x1024xf32, #tpu.memory_space<vmem>>, vector<1x1024xf32>
    %4 = vector.broadcast %3 : vector<1x1024xf32> to vector<256x1024xf32>
    %5 = arith.addf %2, %4 : vector<256x1024xf32>
    %6 = arith.truncf %5 : vector<256x1024xf32> to vector<256x1024xbf16>
    %cst_5 = arith.constant 5.000000e-01 : bf16
    %7 = vector.broadcast %cst_5 : bf16 to vector<256x1024xbf16>
    %8 = arith.mulf %7, %6 : vector<256x1024xbf16>
    %9 = arith.mulf %6, %6 : vector<256x1024xbf16>
    %10 = arith.mulf %9, %6 : vector<256x1024xbf16>
    %cst_6 = arith.constant 4.467770e-02 : bf16
    %11 = vector.broadcast %cst_6 : bf16 to vector<256x1024xbf16>
    %12 = arith.mulf %11, %10 : vector<256x1024xbf16>
    %13 = arith.addf %6, %12 : vector<256x1024xbf16>
    %cst_7 = arith.constant 7.968750e-01 : bf16
    %14 = vector.broadcast %cst_7 : bf16 to vector<256x1024xbf16>
    %15 = arith.mulf %14, %13 : vector<256x1024xbf16>
    %16 = math.tanh %15 : vector<256x1024xbf16>
    %cst_8 = arith.constant 1.000000e+00 : bf16
    %17 = vector.broadcast %cst_8 : bf16 to vector<256x1024xbf16>
    %18 = arith.addf %17, %16 : vector<256x1024xbf16>
    %19 = arith.mulf %8, %18 : vector<256x1024xbf16>
    %c0_9 = arith.constant 0 : index
    %c0_10 = arith.constant 0 : index
    %20 = vector.load %arg4[%c0_9, %c0_10] : memref<1024x256xbf16, #tpu.memory_space<vmem>>, vector<1024x256xbf16>
    %cst_11 = arith.constant dense<0.000000e+00> : vector<256x256xf32>
    %21 = tpu.matmul %19, %20, %cst_11 {dimension_numbers = #tpu.dot_dimension_numbers<[1], [0], [0], [1], [0, 0, 1, 1], [], []>} : vector<256x1024xbf16>, vector<1024x256xbf16>, vector<256x256xf32> -> vector<256x256xf32>
    %c0_12 = arith.constant 0 : index
    %c0_13 = arith.constant 0 : index
    %22 = vector.load %arg5[%c0_12, %c0_13] : memref<1x256xf32, #tpu.memory_space<vmem>>, vector<1x256xf32>
    %23 = vector.broadcast %22 : vector<1x256xf32> to vector<256x256xf32>
    %24 = arith.addf %21, %23 : vector<256x256xf32>
    %c0_14 = arith.constant 0 : index
    %c0_15 = arith.constant 0 : index
    %25 = vector.load %arg6[%c0_14, %c0_15] : memref<256x256xf32, #tpu.memory_space<vmem>>, vector<256x256xf32>
    tpu.vector_store %arg6[%c0_14, %c0_15], %24 {strides = array<i32>} : memref<256x256xf32, #tpu.memory_space<vmem>>, vector<256x256xf32>,
    return
  }
  func.func @transform_0(%arg0: i32) -> (i32, i32) {
    %c0_i32 = arith.constant 0 : i32
    %c0_i32_0 = arith.constant 0 : i32
    return %arg0, %c0_i32 : i32, i32
  }
  func.func @transform_1(%arg0: i32) -> (i32, i32) {
    %c0_i32 = arith.constant 0 : i32
    %c0_i32_0 = arith.constant 0 : i32
    %c0_i32_1 = arith.constant 0 : i32
    return %c0_i32, %c0_i32_0 : i32, i32
  }
  func.func @transform_2(%arg0: i32) -> (i32, i32) {
    %c0_i32 = arith.constant 0 : i32
    %c0_i32_0 = arith.constant 0 : i32
    %c0_i32_1 = arith.constant 0 : i32
    return %c0_i32, %c0_i32_0 : i32, i32
  }
  func.func @transform_3(%arg0: i32) -> (i32, i32) {
    %c0_i32 = arith.constant 0 : i32
    %c0_i32_0 = arith.constant 0 : i32
    %c0_i32_1 = arith.constant 0 : i32
    return %c0_i32, %c0_i32_0 : i32, i32
  }
  func.func @transform_4(%arg0: i32) -> (i32, i32) {
    %c0_i32 = arith.constant 0 : i32
    %c0_i32_0 = arith.constant 0 : i32
    %c0_i32_1 = arith.constant 0 : i32
    return %c0_i32, %c0_i32_0 : i32, i32
  }
  func.func @transform_5(%arg0: i32) -> (i32, i32) {
    %c0_i32 = arith.constant 0 : i32
    %c0_i32_0 = arith.constant 0 : i32
    return %arg0, %c0_i32 : i32, i32
  }
}

</mosaic_0001>

<llo_original>
// kernel: tpu_custom_call.1
$region0: #{tpu_custom_call.1}
  #allocation0 [shape = 'u32[]', space=smem, size = 0x4, offset = 0x4, fixed_abs, tag = 'smem constant byte address 0x4 - core index']
  #allocation1 [shape = 'u32[144,128]{1,0:T(1,128)}', space=vmem, size = 0x12000, scoped, tag = 'internal scratch']
  %s0 = inlined_call_operand.hbm [shape: bf16[512,256], index: 0, kind: input, shape index: {}]
  %s1 = inlined_call_operand.hbm [shape: bf16[256,1024], index: 1, kind: input, shape index: {}]
  %s2 = inlined_call_operand.hbm [shape: f32[1,1024], index: 2, kind: input, shape index: {}]
  %s3 = inlined_call_operand.hbm [shape: bf16[1024,256], index: 3, kind: input, shape index: {}]
  %s4 = inlined_call_operand.vmem [shape: f32[1,256], index: 4, kind: input, shape index: {}]
  %s5 = inlined_call_operand.hbm [shape: f32[512,256], index: 5, kind: output, shape index: {}]
  %s6 = sld [smem:[#allocation0]]
  $region69: #{tpu_custom_call.1} parent=0
    _
  %s8 = ssub.s32 1, %s6
  %s9 = scalar_select 0, %s8, %s6
  $region1: #{tpu_custom_call.1} parent=0
    #allocation2 [shape = 'u8[262144]{0}', space=vmem, size = 0x40000, scoped, tag = 'input window, operand 0']
    #allocation3 [shape = 's32[2]{0}', space=sflag, size = 0x8, scoped, tag = 'scoped memory for tpu_custom_call.1']
    #allocation4 [shape = 's32[2]{0}', space=sflag, size = 0x8, scoped, tag = 'scoped memory for tpu_custom_call.1']
    #allocation5 [shape = 'u8[524288]{0}', space=vmem, size = 0x80000, scoped, tag = 'input window, operand 1, single buffered']
    #allocation6 [shape = 's32[1]{0}', space=sflag, size = 0x4, scoped, tag = 'scoped memory for tpu_custom_call.1']
    #allocation7 [shape = 'u8[4096]{0}', space=vmem, size = 0x1000, scoped, tag = 'input window, operand 2, single buffered']
    #allocation8 [shape = 'u8[524288]{0}', space=vmem, size = 0x80000, scoped, tag = 'input window, operand 3, single buffered']
    #allocation9 [shape = 's32[1]{0}', space=sflag, size = 0x4, scoped, tag = 'scoped memory for tpu_custom_call.1']
    #allocation10 [shape = 'u8[524288]{0}', space=vmem, size = 0x80000, scoped, tag = 'output window, operand 0']
    %10 = vsyncpa [#allocation3], 0
    %s11 = scalar_lea.sflag [#allocation3], 1
    %12 = vsyncpa %s11, 0
    %13 = vsyncpa [#allocation6], 0
    %14 = vsyncpa [#allocation9], 0
    %15 = vsyncpa [#allocation4], 0
    %s16 = scalar_lea.sflag [#allocation4], 1
    %17 = vsyncpa %s16, 0
    loop: start=0, step=1, limit=4
    $region2: #{tpu_custom_call.1} parent=1 // loop_pre_header
      _
    $region3: #{tpu_custom_call.1} parent=1 // loop_header
      %s19 = sphi 0, %s23
      %p20 = scmp.ge.s32.totalorder %s19, 4
      %s29 = sphi 0, %s31
      %s32 = sphi 0, %s29
      %s33 = sphi 0, %s32
      %s49 = sphi 0, %s33
      %s53 = sphi 0, %s53
      %s55 = sphi 0, %s53
      %s56 = sphi 0, %s55
      %s70 = sphi 0, %s56
      %s74 = sphi 0, %s74
      %s76 = sphi 0, %s74
      %s77 = sphi 0, %s76
      %s91 = sphi 0, %s77
      %s95 = sphi 0, %s95
      %s97 = sphi 0, %s95
      %s98 = sphi 0, %s97
      %s112 = sphi 0, %s98
      %s116 = sphi 0, %s116
      %s118 = sphi 0, %s116
      %s119 = sphi 0, %s118
      %s133 = sphi 0, %s119
      %s139 = sphi 0, %s141
      %s142 = sphi 0, %s139
      %s143 = sphi 0, %s142
      %s159 = sphi 0, %s143
    $region4: #{tpu_custom_call.1} parent=1 // loop_header_branch
      %22 = sbr.rel (%p20) target = $region8
    $region5: #{tpu_custom_call.1} parent=1 // loop_body
      %s24 = ssub.s32 %s19, 1
      %s25 = ssub.s32 %s19, 2
      %s26 = sadd.s32 %s19, 1
      %s27 = ssub.s32 %s19, %s26
      %p28 = scmp.eq.s32.totalorder %s27, 0
      %s30 = sadd.s32 %s29, 1
      %s31 = scalar_select %p28, %s29, %s30
      %p34 = pneg %p28
      %p35 = scmp.eq.s32.totalorder %s19, 1
      %p36 = por %p34, %p35
      %p37 = scmp.ne.s32.totalorder %s29, %s32
      %p38 = scmp.eq.s32.totalorder %s19, 0
      %p39 = por %p37, %p38
      %p40 = scmp.ne.s32.totalorder %s29, %s32
      %p41 = scmp.eq.s32.totalorder %s24, 1
      %p42 = por %p40, %p41
      %p43 = scmp.ne.s32.totalorder %s32, %s33
      %p44 = scmp.eq.s32.totalorder %s24, 0
      %p45 = por %p43, %p44
      %p46 = scmp.ne.s32.totalorder %s32, %s33
      %p47 = scmp.eq.s32.totalorder %s25, 1
      %p48 = por %p46, %p47
      %p50 = scmp.ne.s32.totalorder %s33, %s49
      %p51 = scmp.eq.s32.totalorder %s25, 0
      %p52 = por %p50, %p51
      %s54 = sadd.s32 %s53, 1
      %p57 = scmp.eq.s32.totalorder %s19, 1
      %p58 = scmp.ne.s32.totalorder %s53, %s55
      %p59 = scmp.eq.s32.totalorder %s19, 0
      %p60 = por %p58, %p59
      %p61 = scmp.ne.s32.totalorder %s53, %s55
      %p62 = scmp.eq.s32.totalorder %s24, 1
      %p63 = por %p61, %p62
      %p64 = scmp.ne.s32.totalorder %s55, %s56
      %p65 = scmp.eq.s32.totalorder %s24, 0
      %p66 = por %p64, %p65
      %p67 = scmp.ne.s32.totalorder %s55, %s56
      %p68 = scmp.eq.s32.totalorder %s25, 1
      %p69 = por %p67, %p68
      %p71 = scmp.ne.s32.totalorder %s56, %s70
      %p72 = scmp.eq.s32.totalorder %s25, 0
      %p73 = por %p71, %p72
      %s75 = sadd.s32 %s74, 1
      %p78 = scmp.eq.s32.totalorder %s19, 1
      %p79 = scmp.ne.s32.totalorder %s74, %s76
      %p80 = scmp.eq.s32.totalorder %s19, 0
      %p81 = por %p79, %p80
      %p82 = scmp.ne.s32.totalorder %s74, %s76
      %p83 = scmp.eq.s32.totalorder %s24, 1
      %p84 = por %p82, %p83
      %p85 = scmp.ne.s32.totalorder %s76, %s77
      %p86 = scmp.eq.s32.totalorder %s24, 0
      %p87 = por %p85, %p86
      %p88 = scmp.ne.s32.totalorder %s76, %s77
      %p89 = scmp.eq.s32.totalorder %s25, 1
      %p90 = por %p88, %p89
      %p92 = scmp.ne.s32.totalorder %s77, %s91
      %p93 = scmp.eq.s32.totalorder %s25, 0
      %p94 = por %p92, %p93
      %s96 = sadd.s32 %s95, 1
      %p99 = scmp.eq.s32.totalorder %s19, 1
      %p100 = scmp.ne.s32.totalorder %s95, %s97
      %p101 = scmp.eq.s32.totalorder %s19, 0
      %p102 = por %p100, %p101
      %p103 = scmp.ne.s32.totalorder %s95, %s97
      %p104 = scmp.eq.s32.totalorder %s24, 1
      %p105 = por %p103, %p104
      %p106 = scmp.ne.s32.totalorder %s97, %s98
      %p107 = scmp.eq.s32.totalorder %s24, 0
      %p108 = por %p106, %p107
      %p109 = scmp.ne.s32.totalorder %s97, %s98
      %p110 = scmp.eq.s32.totalorder %s25, 1
      %p111 = por %p109, %p110
      %p113 = scmp.ne.s32.totalorder %s98, %s112
      %p114 = scmp.eq.s32.totalorder %s25, 0
      %p115 = por %p113, %p114
      %s117 = sadd.s32 %s116, 1
      %p120 = scmp.eq.s32.totalorder %s19, 1
      %p121 = scmp.ne.s32.totalorder %s116, %s118
      %p122 = scmp.eq.s32.totalorder %s19, 0
      %p123 = por %p121, %p122
      %p124 = scmp.ne.s32.totalorder %s116, %s118
      %p125 = scmp.eq.s32.totalorder %s24, 1
      %p126 = por %p124, %p125
      %p127 = scmp.ne.s32.totalorder %s118, %s119
      %p128 = scmp.eq.s32.totalorder %s24, 0
      %p129 = por %p127, %p128
      %p130 = scmp.ne.s32.totalorder %s118, %s119
      %p131 = scmp.eq.s32.totalorder %s25, 1
      %p132 = por %p130, %p131
      %p134 = scmp.ne.s32.totalorder %s119, %s133
      %p135 = scmp.eq.s32.totalorder %s25, 0
      %p136 = por %p134, %p135
      %s137 = ssub.s32 %s19, %s26
      %p138 = scmp.eq.s32.totalorder %s137, 0
      %s140 = sadd.s32 %s139, 1
      %s141 = scalar_select %p138, %s139, %s140
      %p144 = pneg %p138
      %p145 = scmp.eq.s32.totalorder %s19, 1
      %p146 = por %p144, %p145
      %p147 = scmp.ne.s32.totalorder %s139, %s142
      %p148 = scmp.eq.s32.totalorder %s19, 0
      %p149 = por %p147, %p148
      %p150 = scmp.ne.s32.totalorder %s139, %s142
      %p151 = scmp.eq.s32.totalorder %s24, 1
      %p152 = por %p150, %p151
      %p153 = scmp.ne.s32.totalorder %s142, %s143
      %p154 = scmp.eq.s32.totalorder %s24, 0
      %p155 = por %p153, %p154
      %p156 = scmp.ne.s32.totalorder %s142, %s143
      %p157 = scmp.eq.s32.totalorder %s25, 1
      %p158 = por %p156, %p157
      %p160 = scmp.ne.s32.totalorder %s143, %s159
      %p161 = scmp.eq.s32.totalorder %s25, 0
      %p162 = por %p160, %p161
      %p163 = scmp.le.s32.totalorder 1, %s19
      %p164 = scmp.lt.s32.totalorder %s19, 3
      %p165 = pnand %p163, %p164
      %p166 = pneg %p165
      // Predicated region
      $region9: #{tpu_custom_call.1} parent=5 // pred_check
        _
      $region10: #{tpu_custom_call.1} parent=5 // pred_check_branch
        %168 = sbr.rel (%p165) target = $region12
      $region11: #{tpu_custom_call.1} parent=5 // pred_region
        %s169 = ssub.s32 %s19, 1
        // Predicated region
        $region13: #{tpu_custom_call.1} parent=11 // pred_check
          %p170 = pneg %p66
        $region14: #{tpu_custom_call.1} parent=11 // pred_check_branch
          %172 = sbr.rel (%p170) target = $region16
        $region15: #{tpu_custom_call.1} parent=11 // pred_region
          %s174 = ssub.s32 16384, 16384
          %175 = vsyncadd [#allocation6], %s174
          %s176 = sshll.u32 [#allocation5], 4
          %s177 = int_to_ptr.vmem [resolvable:$true] %s176
          %182 = dma.hbm_to_vmem [thread:$0]  %s1, 16384, %s177, [#allocation6], 512, 512, 32
        $region16: #{tpu_custom_call.1} parent=11 // pred_fallthru
          _
        // Predicated region
        $region17: #{tpu_custom_call.1} parent=11 // pred_check
          %p183 = pneg %p87
        $region18: #{tpu_custom_call.1} parent=11 // pred_check_branch
          %185 = sbr.rel (%p183) target = $region20
        $region19: #{tpu_custom_call.1} parent=11 // pred_region
          %s187 = ssub.s32 128, 128
          %188 = vsyncadd [#allocation6], %s187
          %s190 = sshll.u32 [#allocation7], 4
          %s191 = int_to_ptr.vmem [resolvable:$true] %s190
          %193 = dma.hbm_to_vmem [thread:$0]  %s2, 128, %s191, [#allocation6]
        $region20: #{tpu_custom_call.1} parent=11 // pred_fallthru
          _
        // Predicated region
        $region21: #{tpu_custom_call.1} parent=11 // pred_check
          %p194 = pneg %p108
        $region22: #{tpu_custom_call.1} parent=11 // pred_check_branch
          %196 = sbr.rel (%p194) target = $region24
        $region23: #{tpu_custom_call.1} parent=11 // pred_region
          %s198 = ssub.s32 16384, 16384
          %199 = vsyncadd [#allocation9], %s198
          %s200 = sshll.u32 [#allocation8], 4
          %s201 = int_to_ptr.vmem [resolvable:$true] %s200
          %206 = dma.hbm_to_vmem [thread:$0]  %s3, 16384, %s201, [#allocation9], 128, 128, 8
        $region24: #{tpu_custom_call.1} parent=11 // pred_fallthru
          _
        // Predicated region
        $region25: #{tpu_custom_call.1} parent=11 // pred_check
          %p207 = pneg %p129
        $region26: #{tpu_custom_call.1} parent=11 // pred_check_branch
          %209 = sbr.rel (%p207) target = $region28
        $region27: #{tpu_custom_call.1} parent=11 // pred_region
          _
        $region28: #{tpu_custom_call.1} parent=11 // pred_fallthru
          _
      $region12: #{tpu_custom_call.1} parent=5 // pred_fallthru
        _
      %p210 = scmp.lt.s32.totalorder %s19, 2
      // Predicated region
      $region29: #{tpu_custom_call.1} parent=5 // pred_check
        %p211 = pneg %p210
      $region30: #{tpu_custom_call.1} parent=5 // pred_check_branch
        %213 = sbr.rel (%p211) target = $region32
      $region31: #{tpu_custom_call.1} parent=5 // pred_region
        // Predicated region
        $region33: #{tpu_custom_call.1} parent=31 // pred_check
          %p214 = pneg %p39
        $region34: #{tpu_custom_call.1} parent=31 // pred_check_branch
          %216 = sbr.rel (%p214) target = $region36
        $region35: #{tpu_custom_call.1} parent=31 // pred_region
          %s217 = sand.u32 %s29, 1
          %s218 = scalar_lea.sflag [#allocation3], %s217
          %s219 = sand.u32 %s29, 1
          %s220 = smul.addr %s219, 256
          %s221 = scalar_lea.vmem [#allocation2], %s220
          %s222 = smul.u32 32, %s19
          %s224 = ssub.s32 4096, 4096
          %225 = vsyncadd %s218, %s224
          %s226 = smul.addr %s222, 2
          %s227 = smul.addr %s226, 64
          %s228 = scalar_lea.hbm %s0, %s227
          %s229 = sshll.u32 %s221, 4
          %s230 = int_to_ptr.vmem [resolvable:$true] %s229
          %235 = dma.hbm_to_vmem [thread:$0]  %s228, 4096, %s230, %s218, 128, 128, 8
        $region36: #{tpu_custom_call.1} parent=31 // pred_fallthru
          _
      $region32: #{tpu_custom_call.1} parent=5 // pred_fallthru
        _
      %p236 = scmp.le.s32.totalorder 1, %s19
      %p237 = scmp.lt.s32.totalorder %s19, 3
      %p238 = pnand %p236, %p237
      %p239 = pneg %p238
      // Predicated region
      $region37: #{tpu_custom_call.1} parent=5 // pred_check
        _
      $region38: #{tpu_custom_call.1} parent=5 // pred_check_branch
        %241 = sbr.rel (%p238) target = $region40
      $region39: #{tpu_custom_call.1} parent=5 // pred_region
        %s242 = ssub.s32 %s19, 1
        %s243 = sand.u32 %s32, 1
        %s244 = scalar_lea.sflag [#allocation3], %s243
        %s245 = sand.u32 %s32, 1
        %s246 = smul.addr %s245, 256
        %s247 = scalar_lea.vmem [#allocation2], %s246
        // Predicated region
        $region41: #{tpu_custom_call.1} parent=39 // pred_check
          %p248 = pneg %p45
        $region42: #{tpu_custom_call.1} parent=39 // pred_check_branch
          %250 = sbr.rel (%p248) target = $region44
        $region43: #{tpu_custom_call.1} parent=39 // pred_region
          %251 = dma.done %s244, 4096
        $region44: #{tpu_custom_call.1} parent=39 // pred_fallthru
          _
        // Predicated region
        $region45: #{tpu_custom_call.1} parent=39 // pred_check
          %p252 = pneg %p66
        $region46: #{tpu_custom_call.1} parent=39 // pred_check_branch
          %254 = sbr.rel (%p252) target = $region48
        $region47: #{tpu_custom_call.1} parent=39 // pred_region
          %255 = dma.done [#allocation6], 16384
        $region48: #{tpu_custom_call.1} parent=39 // pred_fallthru
          _
        // Predicated region
        $region49: #{tpu_custom_call.1} parent=39 // pred_check
          %p256 = pneg %p87
        $region50: #{tpu_custom_call.1} parent=39 // pred_check_branch
          %258 = sbr.rel (%p256) target = $region52
        $region51: #{tpu_custom_call.1} parent=39 // pred_region
          %259 = dma.done [#allocation6], 128
        $region52: #{tpu_custom_call.1} parent=39 // pred_fallthru
          _
        // Predicated region
        $region53: #{tpu_custom_call.1} parent=39 // pred_check
          %p260 = pneg %p108
        $region54: #{tpu_custom_call.1} parent=39 // pred_check_branch
          %262 = sbr.rel (%p260) target = $region56
        $region55: #{tpu_custom_call.1} parent=39 // pred_region
          %263 = dma.done [#allocation9], 16384
        $region56: #{tpu_custom_call.1} parent=39 // pred_fallthru
          _
        %s264 = sand.u32 %s32, 1
        %s265 = scalar_lea.sflag [#allocation3], %s264
        %s266 = sand.u32 %s32, 1
        %s267 = smul.addr %s266, 256
        %s268 = scalar_lea.vmem [#allocation2], %s267
        %p269 = pneg %p45
        %p270 = pneg %p42
        %p271 = pneg %p66
        %p272 = pneg %p63
        %p273 = pneg %p87
        %p274 = pneg %p84
        %p275 = pneg %p108
        %p276 = pneg %p105
        %p277 = pneg %p129
        %p278 = pneg %p126
        %p279 = pneg %p155
        %p280 = pneg %p152
        %s281 = sand.u32 %s142, 1
        %s282 = scalar_lea.sflag [#allocation4], %s281
        %s283 = sand.u32 %s142, 1
        %s284 = smul.addr %s283, 512
        %s285 = scalar_lea.vmem [#allocation10], %s284
        %s286 = smul.u32 32, %s24
        %s287 = smul.u32 32, %s24
        %v292 = vld [vmem:[%s247] sm:$0xff]
        %v293 = vld [vmem:[%s247 + $0x8] sm:$0xff]
        %v294 = vld [vmem:[%s247 + $0x10] sm:$0xff]
        %v295 = vld [vmem:[%s247 + $0x18] sm:$0xff]
        %v296 = vld [vmem:[%s247 + $0x20] sm:$0xff]
        %v297 = vld [vmem:[%s247 + $0x28] sm:$0xff]
        %v298 = vld [vmem:[%s247 + $0x30] sm:$0xff]
        %v299 = vld [vmem:[%s247 + $0x38] sm:$0xff]
        %v300 = vld [vmem:[%s247 + $0x40] sm:$0xff]
        %v301 = vld [vmem:[%s247 + $0x48] sm:$0xff]
        %v302 = vld [vmem:[%s247 + $0x50] sm:$0xff]
        %v303 = vld [vmem:[%s247 + $0x58] sm:$0xff]
        %v304 = vld [vmem:[%s247 + $0x60] sm:$0xff]
        %v305 = vld [vmem:[%s247 + $0x68] sm:$0xff]
        %v306 = vld [vmem:[%s247 + $0x70] sm:$0xff]
        %v307 = vld [vmem:[%s247 + $0x78] sm:$0xff]
        %v308 = vld [vmem:[%s247 + $0x80] sm:$0xff]
        %v309 = vld [vmem:[%s247 + $0x88] sm:$0xff]
        %v310 = vld [vmem:[%s247 + $0x90] sm:$0xff]
        %v311 = vld [vmem:[%s247 + $0x98] sm:$0xff]
        %v312 = vld [vmem:[%s247 + $0xa0] sm:$0xff]
        %v313 = vld [vmem:[%s247 + $0xa8] sm:$0xff]
        %v314 = vld [vmem:[%s247 + $0xb0] sm:$0xff]
        %v315 = vld [vmem:[%s247 + $0xb8] sm:$0xff]
        %v316 = vld [vmem:[%s247 + $0xc0] sm:$0xff]
        %v317 = vld [vmem:[%s247 + $0xc8] sm:$0xff]
        %v318 = vld [vmem:[%s247 + $0xd0] sm:$0xff]
        %v319 = vld [vmem:[%s247 + $0xd8] sm:$0xff]
        %v320 = vld [vmem:[%s247 + $0xe0] sm:$0xff]
        %v321 = vld [vmem:[%s247 + $0xe8] sm:$0xff]
        %v322 = vld [vmem:[%s247 + $0xf0] sm:$0xff]
        %v323 = vld [vmem:[%s247 + $0xf8] sm:$0xff]
        %v324 = vld [vmem:[#allocation5] sm:$0xff]
        %v325 = vld [vmem:[#allocation5 + $0x8] sm:$0xff]
        %v326 = vld [vmem:[#allocation5 + $0x10] sm:$0xff]
        %v327 = vld [vmem:[#allocation5 + $0x18] sm:$0xff]
        %v328 = vld [vmem:[#allocation5 + $0x20] sm:$0xff]
        %v329 = vld [vmem:[#allocation5 + $0x28] sm:$0xff]
        %v330 = vld [vmem:[#allocation5 + $0x30] sm:$0xff]
        %v331 = vld [vmem:[#allocation5 + $0x38] sm:$0xff]
        %v332 = vld [vmem:[#allocation5 + $0x40] sm:$0xff]
        %v333 = vld [vmem:[#allocation5 + $0x48] sm:$0xff]
        %v334 = vld [vmem:[#allocation5 + $0x50] sm:$0xff]
        %v335 = vld [vmem:[#allocation5 + $0x58] sm:$0xff]
        %v336 = vld [vmem:[#allocation5 + $0x60] sm:$0xff]
        %v337 = vld [vmem:[#allocation5 + $0x68] sm:$0xff]
        %v338 = vld [vmem:[#allocation5 + $0x70] sm:$0xff]
        %v339 = vld [vmem:[#allocation5 + $0x78] sm:$0xff]
        %v340 = vld [vmem:[#allocation5 + $0x80] sm:$0xff]
        %v341 = vld [vmem:[#allocation5 + $0x88] sm:$0xff]
        %v342 = vld [vmem:[#allocation5 + $0x90] sm:$0xff]
        %v343 = vld [vmem:[#allocation5 + $0x98] sm:$0xff]
        %v344 = vld [vmem:[#allocation5 + $0xa0] sm:$0xff]
        %v345 = vld [vmem:[#allocation5 + $0xa8] sm:$0xff]
        %v346 = vld [vmem:[#allocation5 + $0xb0] sm:$0xff]
        %v347 = vld [vmem:[#allocation5 + $0xb8] sm:$0xff]
        %v348 = vld [vmem:[#allocation5 + $0xc0] sm:$0xff]
        %v349 = vld [vmem:[#allocation5 + $0xc8] sm:$0xff]
        %v350 = vld [vmem:[#allocation5 + $0xd0] sm:$0xff]
        %v351 = vld [vmem:[#allocation5 + $0xd8] sm:$0xff]
        %v352 = vld [vmem:[#allocation5 + $0xe0] sm:$0xff]
        %v353 = vld [vmem:[#allocation5 + $0xe8] sm:$0xff]
        %v354 = vld [vmem:[#allocation5 + $0xf0] sm:$0xff]
        %v355 = vld [vmem:[#allocation5 + $0xf8] sm:$0xff]
        %v356 = vld [vmem:[#allocation5 + $0x100] sm:$0xff]
        %v357 = vld [vmem:[#allocation5 + $0x108] sm:$0xff]
        %v358 = vld [vmem:[#allocation5 + $0x110] sm:$0xff]
        %v359 = vld [vmem:[#allocation5 + $0x118] sm:$0xff]
        %v360 = vld [vmem:[#allocation5 + $0x120] sm:$0xff]
        %v361 = vld [vmem:[#allocation5 + $0x128] sm:$0xff]
        %v362 = vld [vmem:[#allocation5 + $0x130] sm:$0xff]
        %v363 = vld [vmem:[#allocation5 + $0x138] sm:$0xff]
        %v364 = vld [vmem:[#allocation5 + $0x140] sm:$0xff]
        %v365 = vld [vmem:[#allocation5 + $0x148] sm:$0xff]
        %v366 = vld [vmem:[#allocation5 + $0x150] sm:$0xff]
        %v367 = vld [vmem:[#allocation5 + $0x158] sm:$0xff]
        %v368 = vld [vmem:[#allocation5 + $0x160] sm:$0xff]
        %v369 = vld [vmem:[#allocation5 + $0x168] sm:$0xff]
        %v370 = vld [vmem:[#allocation5 + $0x170] sm:$0xff]
        %v371 = vld [vmem:[#allocation5 + $0x178] sm:$0xff]
        %v372 = vld [vmem:[#allocation5 + $0x180] sm:$0xff]
        %v373 = vld [vmem:[#allocation5 + $0x188] sm:$0xff]
        %v374 = vld [vmem:[#allocation5 + $0x190] sm:$0xff]
        %v375 = vld [vmem:[#allocation5 + $0x198] sm:$0xff]
        %v376 = vld [vmem:[#allocation5 + $0x1a0] sm:$0xff]
        %v377 = vld [vmem:[#allocation5 + $0x1a8] sm:$0xff]
        %v378 = vld [vmem:[#allocation5 + $0x1b0] sm:$0xff]
        %v379 = vld [vmem:[#allocation5 + $0x1b8] sm:$0xff]
        %v380 = vld [vmem:[#allocation5 + $0x1c0] sm:$0xff]
        %v381 = vld [vmem:[#allocation5 + $0x1c8] sm:$0xff]
        %v382 = vld [vmem:[#allocation5 + $0x1d0] sm:$0xff]
        %v383 = vld [vmem:[#allocation5 + $0x1d8] sm:$0xff]
        %v384 = vld [vmem:[#allocation5 + $0x1e0] sm:$0xff]
        %v385 = vld [vmem:[#allocation5 + $0x1e8] sm:$0xff]
        %v386 = vld [vmem:[#allocation5 + $0x1f0] sm:$0xff]
        %v387 = vld [vmem:[#allocation5 + $0x1f8] sm:$0xff]
        %v388 = vld [vmem:[#allocation5 + $0x200] sm:$0xff]
        %v389 = vld [vmem:[#allocation5 + $0x208] sm:$0xff]
        %v390 = vld [vmem:[#allocation5 + $0x210] sm:$0xff]
        %v391 = vld [vmem:[#allocation5 + $0x218] sm:$0xff]
        %v392 = vld [vmem:[#allocation5 + $0x220] sm:$0xff]
        %v393 = vld [vmem:[#allocation5 + $0x228] sm:$0xff]
        %v394 = vld [vmem:[#allocation5 + $0x230] sm:$0xff]
        %v395 = vld [vmem:[#allocation5 + $0x238] sm:$0xff]
        %v396 = vld [vmem:[#allocation5 + $0x240] sm:$0xff]
        %v397 = vld [vmem:[#allocation5 + $0x248] sm:$0xff]
        %v398 = vld [vmem:[#allocation5 + $0x250] sm:$0xff]
        %v399 = vld [vmem:[#allocation5 + $0x258] sm:$0xff]
        %v400 = vld [vmem:[#allocation5 + $0x260] sm:$0xff]
        %v401 = vld [vmem:[#allocation5 + $0x268] sm:$0xff]
        %v402 = vld [vmem:[#allocation5 + $0x270] sm:$0xff]
        %v403 = vld [vmem:[#allocation5 + $0x278] sm:$0xff]
        %v404 = vld [vmem:[#allocation5 + $0x280] sm:$0xff]
        %v405 = vld [vmem:[#allocation5 + $0x288] sm:$0xff]
        %v406 = vld [vmem:[#allocation5 + $0x290] sm:$0xff]
        %v407 = vld [vmem:[#allocation5 + $0x298] sm:$0xff]
        %v408 = vld [vmem:[#allocation5 + $0x2a0] sm:$0xff]
        %v409 = vld [vmem:[#allocation5 + $0x2a8] sm:$0xff]
        %v410 = vld [vmem:[#allocation5 + $0x2b0] sm:$0xff]
        %v411 = vld [vmem:[#allocation5 + $0x2b8] sm:$0xff]
        %v412 = vld [vmem:[#allocation5 + $0x2c0] sm:$0xff]
        %v413 = vld [vmem:[#allocation5 + $0x2c8] sm:$0xff]
        %v414 = vld [vmem:[#allocation5 + $0x2d0] sm:$0xff]
        %v415 = vld [vmem:[#allocation5 + $0x2d8] sm:$0xff]
        %v416 = vld [vmem:[#allocation5 + $0x2e0] sm:$0xff]
        %v417 = vld [vmem:[#allocation5 + $0x2e8] sm:$0xff]
        %v418 = vld [vmem:[#allocation5 + $0x2f0] sm:$0xff]
        %v419 = vld [vmem:[#allocation5 + $0x2f8] sm:$0xff]
        %v420 = vld [vmem:[#allocation5 + $0x300] sm:$0xff]
        %v421 = vld [vmem:[#allocation5 + $0x308] sm:$0xff]
        %v422 = vld [vmem:[#allocation5 + $0x310] sm:$0xff]
        %v423 = vld [vmem:[#allocation5 + $0x318] sm:$0xff]
        %v424 = vld [vmem:[#allocation5 + $0x320] sm:$0xff]
        %v425 = vld [vmem:[#allocation5 + $0x328] sm:$0xff]
        %v426 = vld [vmem:[#allocation5 + $0x330] sm:$0xff]
        %v427 = vld [vmem:[#allocation5 + $0x338] sm:$0xff]
        %v428 = vld [vmem:[#allocation5 + $0x340] sm:$0xff]
        %v429 = vld [vmem:[#allocation5 + $0x348] sm:$0xff]
        %v430 = vld [vmem:[#allocation5 + $0x350] sm:$0xff]
        %v431 = vld [vmem:[#allocation5 + $0x358] sm:$0xff]
        %v432 = vld [vmem:[#allocation5 + $0x360] sm:$0xff]
        %v433 = vld [vmem:[#allocation5 + $0x368] sm:$0xff]
        %v434 = vld [vmem:[#allocation5 + $0x370] sm:$0xff]
        %v435 = vld [vmem:[#allocation5 + $0x378] sm:$0xff]
        %v436 = vld [vmem:[#allocation5 + $0x380] sm:$0xff]
        %v437 = vld [vmem:[#allocation5 + $0x388] sm:$0xff]
        %v438 = vld [vmem:[#allocation5 + $0x390] sm:$0xff]
        %v439 = vld [vmem:[#allocation5 + $0x398] sm:$0xff]
        %v440 = vld [vmem:[#allocation5 + $0x3a0] sm:$0xff]
        %v441 = vld [vmem:[#allocation5 + $0x3a8] sm:$0xff]
        %v442 = vld [vmem:[#allocation5 + $0x3b0] sm:$0xff]
        %v443 = vld [vmem:[#allocation5 + $0x3b8] sm:$0xff]
        %v444 = vld [vmem:[#allocation5 + $0x3c0] sm:$0xff]
        %v445 = vld [vmem:[#allocation5 + $0x3c8] sm:$0xff]
        %v446 = vld [vmem:[#allocation5 + $0x3d0] sm:$0xff]
        %v447 = vld [vmem:[#allocation5 + $0x3d8] sm:$0xff]
        %v448 = vld [vmem:[#allocation5 + $0x3e0] sm:$0xff]
        %v449 = vld [vmem:[#allocation5 + $0x3e8] sm:$0xff]
        %v450 = vld [vmem:[#allocation5 + $0x3f0] sm:$0xff]
        %v451 = vld [vmem:[#allocation5 + $0x3f8] sm:$0xff]
        %v452 = vld [vmem:[#allocation7] sm:$0xff]
        %v454 = vlaneseq
        %v455 = vshrl.u32 %v454, 7
        %v456 = vsub.s32 0, %v455
        %v457 = vrot.slane %v452, %v456
        %v458 = vlaneseq
        %v459 = vshrl.u32 %v458, 7
        %v460 = vsub.s32 1, %v459
        %v461 = vrot.slane %v452, %v460
        %v462 = vlaneseq
        %v463 = vshrl.u32 %v462, 7
        %v464 = vsub.s32 2, %v463
        %v465 = vrot.slane %v452, %v464
        %v466 = vlaneseq
        %v467 = vshrl.u32 %v466, 7
        %v468 = vsub.s32 3, %v467
        %v469 = vrot.slane %v452, %v468
        %v470 = vlaneseq
        %v471 = vshrl.u32 %v470, 7
        %v472 = vsub.s32 4, %v471
        %v473 = vrot.slane %v452, %v472
        %v474 = vlaneseq
        %v475 = vshrl.u32 %v474, 7
        %v476 = vsub.s32 5, %v475
        %v477 = vrot.slane %v452, %v476
        %v478 = vlaneseq
        %v479 = vshrl.u32 %v478, 7
        %v480 = vsub.s32 6, %v479
        %v481 = vrot.slane %v452, %v480
        %v482 = vlaneseq
        %v483 = vshrl.u32 %v482, 7
        %v484 = vsub.s32 7, %v483
        %v485 = vrot.slane %v452, %v484
        %v526 = vunpack.c.l.b16 %v292
        %v527 = vunpack.c.h.b16 %v292
        %v528 = vunpack.c.l.b16 %v293
        %v529 = vunpack.c.h.b16 %v293
        %v530 = vunpack.c.l.b16 %v294
        %v531 = vunpack.c.h.b16 %v294
        %v532 = vunpack.c.l.b16 %v295
        %v533 = vunpack.c.h.b16 %v295
        %v534 = vunpack.c.l.b16 %v296
        %v535 = vunpack.c.h.b16 %v296
        %v536 = vunpack.c.l.b16 %v297
        %v537 = vunpack.c.h.b16 %v297
        %v538 = vunpack.c.l.b16 %v298
        %v539 = vunpack.c.h.b16 %v298
        %v540 = vunpack.c.l.b16 %v299
        %v541 = vunpack.c.h.b16 %v299
        %v542 = vunpack.c.l.b16 %v300
        %v543 = vunpack.c.h.b16 %v300
        %v544 = vunpack.c.l.b16 %v301
        %v545 = vunpack.c.h.b16 %v301
        %v546 = vunpack.c.l.b16 %v302
        %v547 = vunpack.c.h.b16 %v302
        %v548 = vunpack.c.l.b16 %v303
        %v549 = vunpack.c.h.b16 %v303
        %v550 = vunpack.c.l.b16 %v304
        %v551 = vunpack.c.h.b16 %v304
        %v552 = vunpack.c.l.b16 %v305
        %v553 = vunpack.c.h.b16 %v305
        %v554 = vunpack.c.l.b16 %v306
        %v555 = vunpack.c.h.b16 %v306
        %v556 = vunpack.c.l.b16 %v307
        %v557 = vunpack.c.h.b16 %v307
        %v558 = vunpack.c.l.b16 %v308
        %v559 = vunpack.c.h.b16 %v308
        %v560 = vunpack.c.l.b16 %v309
        %v561 = vunpack.c.h.b16 %v309
        %v562 = vunpack.c.l.b16 %v310
        %v563 = vunpack.c.h.b16 %v310
        %v564 = vunpack.c.l.b16 %v311
        %v565 = vunpack.c.h.b16 %v311
        %v566 = vunpack.c.l.b16 %v312
        %v567 = vunpack.c.h.b16 %v312
        %v568 = vunpack.c.l.b16 %v313
        %v569 = vunpack.c.h.b16 %v313
        %v570 = vunpack.c.l.b16 %v314
        %v571 = vunpack.c.h.b16 %v314
        %v572 = vunpack.c.l.b16 %v315
        %v573 = vunpack.c.h.b16 %v315
        %v574 = vunpack.c.l.b16 %v316
        %v575 = vunpack.c.h.b16 %v316
        %v576 = vunpack.c.l.b16 %v317
        %v577 = vunpack.c.h.b16 %v317
        %v578 = vunpack.c.l.b16 %v318
        %v579 = vunpack.c.h.b16 %v318
        %v580 = vunpack.c.l.b16 %v319
        %v581 = vunpack.c.h.b16 %v319
        %v582 = vunpack.c.l.b16 %v320
        %v583 = vunpack.c.h.b16 %v320
        %v584 = vunpack.c.l.b16 %v321
        %v585 = vunpack.c.h.b16 %v321
        %v586 = vunpack.c.l.b16 %v322
        %v587 = vunpack.c.h.b16 %v322
        %v588 = vunpack.c.l.b16 %v323
        %v589 = vunpack.c.h.b16 %v323
        %v590 = vpack.c.b16 %v528, %v526
        %v591 = vpack.c.b16 %v529, %v527
        %v592 = vpack.c.b16 %v532, %v530
        %v593 = vpack.c.b16 %v533, %v531
        %v594 = vpack.c.b16 %v536, %v534
        %v595 = vpack.c.b16 %v537, %v535
        %v596 = vpack.c.b16 %v540, %v538
        %v597 = vpack.c.b16 %v541, %v539
        %v598 = vpack.c.b16 %v544, %v542
        %v599 = vpack.c.b16 %v545, %v543
        %v600 = vpack.c.b16 %v548, %v546
        %v601 = vpack.c.b16 %v549, %v547
        %v602 = vpack.c.b16 %v552, %v550
        %v603 = vpack.c.b16 %v553, %v551
        %v604 = vpack.c.b16 %v556, %v554
        %v605 = vpack.c.b16 %v557, %v555
        %v606 = vpack.c.b16 %v560, %v558
        %v607 = vpack.c.b16 %v561, %v559
        %v608 = vpack.c.b16 %v564, %v562
        %v609 = vpack.c.b16 %v565, %v563
        %v610 = vpack.c.b16 %v568, %v566
        %v611 = vpack.c.b16 %v569, %v567
        %v612 = vpack.c.b16 %v572, %v570
        %v613 = vpack.c.b16 %v573, %v571
        %v614 = vpack.c.b16 %v576, %v574
        %v615 = vpack.c.b16 %v577, %v575
        %v616 = vpack.c.b16 %v580, %v578
        %v617 = vpack.c.b16 %v581, %v579
        %v618 = vpack.c.b16 %v584, %v582
        %v619 = vpack.c.b16 %v585, %v583
        %v620 = vpack.c.b16 %v588, %v586
        %v621 = vpack.c.b16 %v589, %v587
        %v782 = vunpack.c.l.b16 %v324
        %v783 = vunpack.c.h.b16 %v324
        %v784 = vunpack.c.l.b16 %v325
        %v785 = vunpack.c.h.b16 %v325
        %v786 = vunpack.c.l.b16 %v326
        %v787 = vunpack.c.h.b16 %v326
        %v788 = vunpack.c.l.b16 %v327
        %v789 = vunpack.c.h.b16 %v327
        %v790 = vunpack.c.l.b16 %v328
        %v791 = vunpack.c.h.b16 %v328
        %v792 = vunpack.c.l.b16 %v329
        %v793 = vunpack.c.h.b16 %v329
        %v794 = vunpack.c.l.b16 %v330
        %v795 = vunpack.c.h.b16 %v330
        %v796 = vunpack.c.l.b16 %v331
        %v797 = vunpack.c.h.b16 %v331
        %v798 = vunpack.c.l.b16 %v332
        %v799 = vunpack.c.h.b16 %v332
        %v800 = vunpack.c.l.b16 %v333
        %v801 = vunpack.c.h.b16 %v333
        %v802 = vunpack.c.l.b16 %v334
        %v803 = vunpack.c.h.b16 %v334
        %v804 = vunpack.c.l.b16 %v335
        %v805 = vunpack.c.h.b16 %v335
        %v806 = vunpack.c.l.b16 %v336
        %v807 = vunpack.c.h.b16 %v336
        %v808 = vunpack.c.l.b16 %v337
        %v809 = vunpack.c.h.b16 %v337
        %v810 = vunpack.c.l.b16 %v338
        %v811 = vunpack.c.h.b16 %v338
        %v812 = vunpack.c.l.b16 %v339
        %v813 = vunpack.c.h.b16 %v339
        %v814 = vunpack.c.l.b16 %v340
        %v815 = vunpack.c.h.b16 %v340
        %v816 = vunpack.c.l.b16 %v341
        %v817 = vunpack.c.h.b16 %v341
        %v818 = vunpack.c.l.b16 %v342
        %v819 = vunpack.c.h.b16 %v342
        %v820 = vunpack.c.l.b16 %v343
        %v821 = vunpack.c.h.b16 %v343
        %v822 = vunpack.c.l.b16 %v344
        %v823 = vunpack.c.h.b16 %v344
        %v824 = vunpack.c.l.b16 %v345
        %v825 = vunpack.c.h.b16 %v345
        %v826 = vunpack.c.l.b16 %v346
        %v827 = vunpack.c.h.b16 %v346
        %v828 = vunpack.c.l.b16 %v347
        %v829 = vunpack.c.h.b16 %v347
        %v830 = vunpack.c.l.b16 %v348
        %v831 = vunpack.c.h.b16 %v348
        %v832 = vunpack.c.l.b16 %v349
        %v833 = vunpack.c.h.b16 %v349
        %v834 = vunpack.c.l.b16 %v350
        %v835 = vunpack.c.h.b16 %v350
        %v836 = vunpack.c.l.b16 %v351
        %v837 = vunpack.c.h.b16 %v351
        %v838 = vunpack.c.l.b16 %v352
        %v839 = vunpack.c.h.b16 %v352
        %v840 = vunpack.c.l.b16 %v353
        %v841 = vunpack.c.h.b16 %v353
        %v842 = vunpack.c.l.b16 %v354
        %v843 = vunpack.c.h.b16 %v354
        %v844 = vunpack.c.l.b16 %v355
        %v845 = vunpack.c.h.b16 %v355
        %v846 = vunpack.c.l.b16 %v356
        %v847 = vunpack.c.h.b16 %v356
        %v848 = vunpack.c.l.b16 %v357
        %v849 = vunpack.c.h.b16 %v357
        %v850 = vunpack.c.l.b16 %v358
        %v851 = vunpack.c.h.b16 %v358
        %v852 = vunpack.c.l.b16 %v359
        %v853 = vunpack.c.h.b16 %v359
        %v854 = vunpack.c.l.b16 %v360
        %v855 = vunpack.c.h.b16 %v360
        %v856 = vunpack.c.l.b16 %v361
        %v857 = vunpack.c.h.b16 %v361
        %v858 = vunpack.c.l.b16 %v362
        %v859 = vunpack.c.h.b16 %v362
        %v860 = vunpack.c.l.b16 %v363
        %v861 = vunpack.c.h.b16 %v363
        %v862 = vunpack.c.l.b16 %v364
        %v863 = vunpack.c.h.b16 %v364
        %v864 = vunpack.c.l.b16 %v365
        %v865 = vunpack.c.h.b16 %v365
        %v866 = vunpack.c.l.b16 %v366
        %v867 = vunpack.c.h.b16 %v366
        %v868 = vunpack.c.l.b16 %v367
        %v869 = vunpack.c.h.b16 %v367
        %v870 = vunpack.c.l.b16 %v368
        %v871 = vunpack.c.h.b16 %v368
        %v872 = vunpack.c.l.b16 %v369
        %v873 = vunpack.c.h.b16 %v369
        %v874 = vunpack.c.l.b16 %v370
        %v875 = vunpack.c.h.b16 %v370
        %v876 = vunpack.c.l.b16 %v371
        %v877 = vunpack.c.h.b16 %v371
        %v878 = vunpack.c.l.b16 %v372
        %v879 = vunpack.c.h.b16 %v372
        %v880 = vunpack.c.l.b16 %v373
        %v881 = vunpack.c.h.b16 %v373
        %v882 = vunpack.c.l.b16 %v374
        %v883 = vunpack.c.h.b16 %v374
        %v884 = vunpack.c.l.b16 %v375
        %v885 = vunpack.c.h.b16 %v375
        %v886 = vunpack.c.l.b16 %v376
        %v887 = vunpack.c.h.b16 %v376
        %v888 = vunpack.c.l.b16 %v377
        %v889 = vunpack.c.h.b16 %v377
        %v890 = vunpack.c.l.b16 %v378
        %v891 = vunpack.c.h.b16 %v378
        %v892 = vunpack.c.l.b16 %v379
        %v893 = vunpack.c.h.b16 %v379
        %v894 = vunpack.c.l.b16 %v380
        %v895 = vunpack.c.h.b16 %v380
        %v896 = vunpack.c.l.b16 %v381
        %v897 = vunpack.c.h.b16 %v381
        %v898 = vunpack.c.l.b16 %v382
        %v899 = vunpack.c.h.b16 %v382
        %v900 = vunpack.c.l.b16 %v383
        %v901 = vunpack.c.h.b16 %v383
        %v902 = vunpack.c.l.b16 %v384
        %v903 = vunpack.c.h.b16 %v384
        %v904 = vunpack.c.l.b16 %v385
        %v905 = vunpack.c.h.b16 %v385
        %v906 = vunpack.c.l.b16 %v386
        %v907 = vunpack.c.h.b16 %v386
        %v908 = vunpack.c.l.b16 %v387
        %v909 = vunpack.c.h.b16 %v387
        %v910 = vunpack.c.l.b16 %v388
        %v911 = vunpack.c.h.b16 %v388
        %v912 = vunpack.c.l.b16 %v389
        %v913 = vunpack.c.h.b16 %v389
        %v914 = vunpack.c.l.b16 %v390
        %v915 = vunpack.c.h.b16 %v390
        %v916 = vunpack.c.l.b16 %v391
        %v917 = vunpack.c.h.b16 %v391
        %v918 = vunpack.c.l.b16 %v392
        %v919 = vunpack.c.h.b16 %v392
        %v920 = vunpack.c.l.b16 %v393
        %v921 = vunpack.c.h.b16 %v393
        %v922 = vunpack.c.l.b16 %v394
        %v923 = vunpack.c.h.b16 %v394
        %v924 = vunpack.c.l.b16 %v395
        %v925 = vunpack.c.h.b16 %v395
        %v926 = vunpack.c.l.b16 %v396
        %v927 = vunpack.c.h.b16 %v396
        %v928 = vunpack.c.l.b16 %v397
        %v929 = vunpack.c.h.b16 %v397
        %v930 = vunpack.c.l.b16 %v398
        %v931 = vunpack.c.h.b16 %v398
        %v932 = vunpack.c.l.b16 %v399
        %v933 = vunpack.c.h.b16 %v399
        %v934 = vunpack.c.l.b16 %v400
        %v935 = vunpack.c.h.b16 %v400
        %v936 = vunpack.c.l.b16 %v401
        %v937 = vunpack.c.h.b16 %v401
        %v938 = vunpack.c.l.b16 %v402
        %v939 = vunpack.c.h.b16 %v402
        %v940 = vunpack.c.l.b16 %v403
        %v941 = vunpack.c.h.b16 %v403
        %v942 = vunpack.c.l.b16 %v404
        %v943 = vunpack.c.h.b16 %v404
        %v944 = vunpack.c.l.b16 %v405
        %v945 = vunpack.c.h.b16 %v405
        %v946 = vunpack.c.l.b16 %v406
        %v947 = vunpack.c.h.b16 %v406
        %v948 = vunpack.c.l.b16 %v407
        %v949 = vunpack.c.h.b16 %v407
        %v950 = vunpack.c.l.b16 %v408
        %v951 = vunpack.c.h.b16 %v408
        %v952 = vunpack.c.l.b16 %v409
        %v953 = vunpack.c.h.b16 %v409
        %v954 = vunpack.c.l.b16 %v410
        %v955 = vunpack.c.h.b16 %v410
        %v956 = vunpack.c.l.b16 %v411
        %v957 = vunpack.c.h.b16 %v411
        %v958 = vunpack.c.l.b16 %v412
        %v959 = vunpack.c.h.b16 %v412
        %v960 = vunpack.c.l.b16 %v413
        %v961 = vunpack.c.h.b16 %v413
        %v962 = vunpack.c.l.b16 %v414
        %v963 = vunpack.c.h.b16 %v414
        %v964 = vunpack.c.l.b16 %v415
        %v965 = vunpack.c.h.b16 %v415
        %v966 = vunpack.c.l.b16 %v416
        %v967 = vunpack.c.h.b16 %v416
        %v968 = vunpack.c.l.b16 %v417
        %v969 = vunpack.c.h.b16 %v417
        %v970 = vunpack.c.l.b16 %v418
        %v971 = vunpack.c.h.b16 %v418
        %v972 = vunpack.c.l.b16 %v419
        %v973 = vunpack.c.h.b16 %v419
        %v974 = vunpack.c.l.b16 %v420
        %v975 = vunpack.c.h.b16 %v420
        %v976 = vunpack.c.l.b16 %v421
        %v977 = vunpack.c.h.b16 %v421
        %v978 = vunpack.c.l.b16 %v422
        %v979 = vunpack.c.h.b16 %v422
        %v980 = vunpack.c.l.b16 %v423
        %v981 = vunpack.c.h.b16 %v423
        %v982 = vunpack.c.l.b16 %v424
        %v983 = vunpack.c.h.b16 %v424
        %v984 = vunpack.c.l.b16 %v425
        %v985 = vunpack.c.h.b16 %v425
        %v986 = vunpack.c.l.b16 %v426
        %v987 = vunpack.c.h.b16 %v426
        %v988 = vunpack.c.l.b16 %v427
        %v989 = vunpack.c.h.b16 %v427
        %v990 = vunpack.c.l.b16 %v428
        %v991 = vunpack.c.h.b16 %v428
        %v992 = vunpack.c.l.b16 %v429
        %v993 = vunpack.c.h.b16 %v429
        %v994 = vunpack.c.l.b16 %v430
        %v995 = vunpack.c.h.b16 %v430
        %v996 = vunpack.c.l.b16 %v431
        %v997 = vunpack.c.h.b16 %v431
        %v998 = vunpack.c.l.b16 %v432
        %v999 = vunpack.c.h.b16 %v432
        %v1000 = vunpack.c.l.b16 %v433
        %v1001 = vunpack.c.h.b16 %v433
        %v1002 = vunpack.c.l.b16 %v434
        %v1003 = vunpack.c.h.b16 %v434
        %v1004 = vunpack.c.l.b16 %v435
        %v1005 = vunpack.c.h.b16 %v435
        %v1006 = vunpack.c.l.b16 %v436
        %v1007 = vunpack.c.h.b16 %v436
        %v1008 = vunpack.c.l.b16 %v437
        %v1009 = vunpack.c.h.b16 %v437
        %v1010 = vunpack.c.l.b16 %v438
        %v1011 = vunpack.c.h.b16 %v438
        %v1012 = vunpack.c.l.b16 %v439
        %v1013 = vunpack.c.h.b16 %v439
        %v1014 = vunpack.c.l.b16 %v440
        %v1015 = vunpack.c.h.b16 %v440
        %v1016 = vunpack.c.l.b16 %v441
        %v1017 = vunpack.c.h.b16 %v441
        %v1018 = vunpack.c.l.b16 %v442
        %v1019 = vunpack.c.h.b16 %v442
        %v1020 = vunpack.c.l.b16 %v443
        %v1021 = vunpack.c.h.b16 %v443
        %v1022 = vunpack.c.l.b16 %v444
        %v1023 = vunpack.c.h.b16 %v444
        %v1024 = vunpack.c.l.b16 %v445
        %v1025 = vunpack.c.h.b16 %v445
        %v1026 = vunpack.c.l.b16 %v446
        %v1027 = vunpack.c.h.b16 %v446
        %v1028 = vunpack.c.l.b16 %v447
        %v1029 = vunpack.c.h.b16 %v447
        %v1030 = vunpack.c.l.b16 %v448
        %v1031 = vunpack.c.h.b16 %v448
        %v1032 = vunpack.c.l.b16 %v449
        %v1033 = vunpack.c.h.b16 %v449
        %v1034 = vunpack.c.l.b16 %v450
        %v1035 = vunpack.c.h.b16 %v450
        %v1036 = vunpack.c.l.b16 %v451
        %v1037 = vunpack.c.h.b16 %v451
        %v1038 = vpack.c.b16 %v790, %v782
        %v1039 = vpack.c.b16 %v791, %v783
        %v1040 = vpack.c.b16 %v792, %v784
        %v1041 = vpack.c.b16 %v793, %v785
        %v1042 = vpack.c.b16 %v794, %v786
        %v1043 = vpack.c.b16 %v795, %v787
        %v1044 = vpack.c.b16 %v796, %v788
        %v1045 = vpack.c.b16 %v797, %v789
        %v1046 = vpack.c.b16 %v806, %v798
        %v1047 = vpack.c.b16 %v807, %v799
        %v1048 = vpack.c.b16 %v808, %v800
        %v1049 = vpack.c.b16 %v809, %v801
        %v1050 = vpack.c.b16 %v810, %v802
        %v1051 = vpack.c.b16 %v811, %v803
        %v1052 = vpack.c.b16 %v812, %v804
        %v1053 = vpack.c.b16 %v813, %v805
        %v1054 = vpack.c.b16 %v822, %v814
        %v1055 = vpack.c.b16 %v823, %v815
        %v1056 = vpack.c.b16 %v824, %v816
        %v1057 = vpack.c.b16 %v825, %v817
        %v1058 = vpack.c.b16 %v826, %v818
        %v1059 = vpack.c.b16 %v827, %v819
        %v1060 = vpack.c.b16 %v828, %v820
        %v1061 = vpack.c.b16 %v829, %v821
        %v1062 = vpack.c.b16 %v838, %v830
        %v1063 = vpack.c.b16 %v839, %v831
        %v1064 = vpack.c.b16 %v840, %v832
        %v1065 = vpack.c.b16 %v841, %v833
        %v1066 = vpack.c.b16 %v842, %v834
        %v1067 = vpack.c.b16 %v843, %v835
        %v1068 = vpack.c.b16 %v844, %v836
        %v1069 = vpack.c.b16 %v845, %v837
        %v1070 = vpack.c.b16 %v854, %v846
        %v1071 = vpack.c.b16 %v855, %v847
        %v1072 = vpack.c.b16 %v856, %v848
        %v1073 = vpack.c.b16 %v857, %v849
        %v1074 = vpack.c.b16 %v858, %v850
        %v1075 = vpack.c.b16 %v859, %v851
        %v1076 = vpack.c.b16 %v860, %v852
        %v1077 = vpack.c.b16 %v861, %v853
        %v1078 = vpack.c.b16 %v870, %v862
        %v1079 = vpack.c.b16 %v871, %v863
        %v1080 = vpack.c.b16 %v872, %v864
        %v1081 = vpack.c.b16 %v873, %v865
        %v1082 = vpack.c.b16 %v874, %v866
        %v1083 = vpack.c.b16 %v875, %v867
        %v1084 = vpack.c.b16 %v876, %v868
        %v1085 = vpack.c.b16 %v877, %v869
        %v1086 = vpack.c.b16 %v886, %v878
        %v1087 = vpack.c.b16 %v887, %v879
        %v1088 = vpack.c.b16 %v888, %v880
        %v1089 = vpack.c.b16 %v889, %v881
        %v1090 = vpack.c.b16 %v890, %v882
        %v1091 = vpack.c.b16 %v891, %v883
        %v1092 = vpack.c.b16 %v892, %v884
        %v1093 = vpack.c.b16 %v893, %v885
        %v1094 = vpack.c.b16 %v902, %v894
        %v1095 = vpack.c.b16 %v903, %v895
        %v1096 = vpack.c.b16 %v904, %v896
        %v1097 = vpack.c.b16 %v905, %v897
        %v1098 = vpack.c.b16 %v906, %v898
        %v1099 = vpack.c.b16 %v907, %v899
        %v1100 = vpack.c.b16 %v908, %v900
        %v1101 = vpack.c.b16 %v909, %v901
        %v1102 = vpack.c.b16 %v918, %v910
        %v1103 = vpack.c.b16 %v919, %v911
        %v1104 = vpack.c.b16 %v920, %v912
        %v1105 = vpack.c.b16 %v921, %v913
        %v1106 = vpack.c.b16 %v922, %v914
        %v1107 = vpack.c.b16 %v923, %v915
        %v1108 = vpack.c.b16 %v924, %v916
        %v1109 = vpack.c.b16 %v925, %v917
        %v1110 = vpack.c.b16 %v934, %v926
        %v1111 = vpack.c.b16 %v935, %v927
        %v1112 = vpack.c.b16 %v936, %v928
        %v1113 = vpack.c.b16 %v937, %v929
        %v1114 = vpack.c.b16 %v938, %v930
        %v1115 = vpack.c.b16 %v939, %v931
        %v1116 = vpack.c.b16 %v940, %v932
        %v1117 = vpack.c.b16 %v941, %v933
        %v1118 = vpack.c.b16 %v950, %v942
        %v1119 = vpack.c.b16 %v951, %v943
        %v1120 = vpack.c.b16 %v952, %v944
        %v1121 = vpack.c.b16 %v953, %v945
        %v1122 = vpack.c.b16 %v954, %v946
        %v1123 = vpack.c.b16 %v955, %v947
        %v1124 = vpack.c.b16 %v956, %v948
        %v1125 = vpack.c.b16 %v957, %v949
        %v1126 = vpack.c.b16 %v966, %v958
        %v1127 = vpack.c.b16 %v967, %v959
        %v1128 = vpack.c.b16 %v968, %v960
        %v1129 = vpack.c.b16 %v969, %v961
        %v1130 = vpack.c.b16 %v970, %v962
        %v1131 = vpack.c.b16 %v971, %v963
        %v1132 = vpack.c.b16 %v972, %v964
        %v1133 = vpack.c.b16 %v973, %v965
        %v1134 = vpack.c.b16 %v982, %v974
        %v1135 = vpack.c.b16 %v983, %v975
        %v1136 = vpack.c.b16 %v984, %v976
        %v1137 = vpack.c.b16 %v985, %v977
        %v1138 = vpack.c.b16 %v986, %v978
        %v1139 = vpack.c.b16 %v987, %v979
        %v1140 = vpack.c.b16 %v988, %v980
        %v1141 = vpack.c.b16 %v989, %v981
        %v1142 = vpack.c.b16 %v998, %v990
        %v1143 = vpack.c.b16 %v999, %v991
        %v1144 = vpack.c.b16 %v1000, %v992
        %v1145 = vpack.c.b16 %v1001, %v993
        %v1146 = vpack.c.b16 %v1002, %v994
        %v1147 = vpack.c.b16 %v1003, %v995
        %v1148 = vpack.c.b16 %v1004, %v996
        %v1149 = vpack.c.b16 %v1005, %v997
        %v1150 = vpack.c.b16 %v1014, %v1006
        %v1151 = vpack.c.b16 %v1015, %v1007
        %v1152 = vpack.c.b16 %v1016, %v1008
        %v1153 = vpack.c.b16 %v1017, %v1009
        %v1154 = vpack.c.b16 %v1018, %v1010
        %v1155 = vpack.c.b16 %v1019, %v1011
        %v1156 = vpack.c.b16 %v1020, %v1012
        %v1157 = vpack.c.b16 %v1021, %v1013
        %v1158 = vpack.c.b16 %v1030, %v1022
        %v1159 = vpack.c.b16 %v1031, %v1023
        %v1160 = vpack.c.b16 %v1032, %v1024
        %v1161 = vpack.c.b16 %v1033, %v1025
        %v1162 = vpack.c.b16 %v1034, %v1026
        %v1163 = vpack.c.b16 %v1035, %v1027
        %v1164 = vpack.c.b16 %v1036, %v1028
        %v1165 = vpack.c.b16 %v1037, %v1029
        %1294 = vmatprep.subr.bf16.mxu0 %v1039
        %1295 = vmatpush1.bf16.msra.mxu0 %v1038
        %1296 = vmatprep.subr.bf16.mxu0 %v1047
        %1297 = vmatpush1.bf16.msra.mxu0 %v1046
        %1298 = vmatprep.subr.bf16.mxu0 %v1055
        %1299 = vmatpush1.bf16.msra.mxu0 %v1054
        %1300 = vmatprep.subr.bf16.mxu0 %v1063
        %1301 = vmatpush1.bf16.msra.mxu0 %v1062
        %1302 = vmatprep.subr.bf16.mxu0 %v1071
        %1303 = vmatpush1.bf16.msra.mxu0 %v1070
        %1304 = vmatprep.subr.bf16.mxu0 %v1079
        %1305 = vmatpush1.bf16.msra.mxu0 %v1078
        %1306 = vmatprep.subr.bf16.mxu0 %v1087
        %1307 = vmatpush1.bf16.msra.mxu0 %v1086
        %1308 = vmatprep.subr.bf16.mxu0 %v1095
        %1309 = vmatpush1.bf16.msra.mxu0 %v1094
        %1310 = vmatprep.subr.bf16.mxu0 %v1103
        %1311 = vmatpush1.bf16.msra.mxu0 %v1102
        %1312 = vmatprep.subr.bf16.mxu0 %v1111
        %1313 = vmatpush1.bf16.msra.mxu0 %v1110
        %1314 = vmatprep.subr.bf16.mxu0 %v1119
        %1315 = vmatpush1.bf16.msra.mxu0 %v1118
        %1316 = vmatprep.subr.bf16.mxu0 %v1127
        %1317 = vmatpush1.bf16.msra.mxu0 %v1126
        %1318 = vmatprep.subr.bf16.mxu0 %v1135
        %1319 = vmatpush1.bf16.msra.mxu0 %v1134
        %1320 = vmatprep.subr.bf16.mxu0 %v1143
        %1321 = vmatpush1.bf16.msra.mxu0 %v1142
        %1322 = vmatprep.subr.bf16.mxu0 %v1151
        %1323 = vmatpush1.bf16.msra.mxu0 %v1150
        %1324 = vmatprep.subr.bf16.mxu0 %v1159
        %1325 = vmatpush1.bf16.msra.mxu0 %v1158
        %1326 = vmatprep.mubr.bf16.mxu0 %v591
        %1327 = vmatmul.mubr.bf16.gmra.mrb[0].mxu0 %v590
        %v1328 = vpop.f32.mrb[0].mxu0
        %v1329 = vadd.f32 %v457, %v1328
        %v1330 = vpop.f32.mrb[0].mxu0
        %v1331 = vadd.f32 %v461, %v1330
        %v1332 = vpop.f32.mrb[0].mxu0
        %v1333 = vadd.f32 %v457, %v1332
        %v1334 = vpop.f32.mrb[0].mxu0
        %v1335 = vadd.f32 %v461, %v1334
        %1336 = vmatprep.mubr.bf16.mxu0 %v593
        %1337 = vmatmul.mubr.bf16.gmra.mrb[0].mxu0 %v592
        %v1338 = vpop.f32.mrb[0].mxu0
        %v1339 = vadd.f32 %v457, %v1338
        %v1340 = vpop.f32.mrb[0].mxu0
        %v1341 = vadd.f32 %v461, %v1340
        %v1342 = vpop.f32.mrb[0].mxu0
        %v1343 = vadd.f32 %v457, %v1342
        %v1344 = vpop.f32.mrb[0].mxu0
        %v1345 = vadd.f32 %v461, %v1344
        %1346 = vmatprep.mubr.bf16.mxu0 %v595
        %1347 = vmatmul.mubr.bf16.gmra.mrb[0].mxu0 %v594
        %v1348 = vpop.f32.mrb[0].mxu0
        %v1349 = vadd.f32 %v457, %v1348
        %v1350 = vpop.f32.mrb[0].mxu0
        %v1351 = vadd.f32 %v461, %v1350
        %v1352 = vpop.f32.mrb[0].mxu0
        %v1353 = vadd.f32 %v457, %v1352
        %v1354 = vpop.f32.mrb[0].mxu0
        %v1355 = vadd.f32 %v461, %v1354
        %1356 = vmatprep.mubr.bf16.mxu0 %v597
        %1357 = vmatmul.mubr.bf16.gmra.mrb[0].mxu0 %v596
        %v1358 = vpop.f32.mrb[0].mxu0
        %v1359 = vadd.f32 %v457, %v1358
        %v1360 = vpop.f32.mrb[0].mxu0
        %v1361 = vadd.f32 %v461, %v1360
        %v1362 = vpop.f32.mrb[0].mxu0
        %v1363 = vadd.f32 %v457, %v1362
        %v1364 = vpop.f32.mrb[0].mxu0
        %v1365 = vadd.f32 %v461, %v1364
        %1366 = vmatprep.mubr.bf16.mxu0 %v599
        %1367 = vmatmul.mubr.bf16.gmra.mrb[0].mxu0 %v598
        %v1368 = vpop.f32.mrb[0].mxu0
        %v1369 = vadd.f32 %v457, %v1368
        %v1370 = vpop.f32.mrb[0].mxu0
        %v1371 = vadd.f32 %v461, %v1370
        %v1372 = vpop.f32.mrb[0].mxu0
        %v1373 = vadd.f32 %v457, %v1372
        %v1374 = vpop.f32.mrb[0].mxu0
        %v1375 = vadd.f32 %v461, %v1374
        %1376 = vmatprep.mubr.bf16.mxu0 %v601
        %1377 = vmatmul.mubr.bf16.gmra.mrb[0].mxu0 %v600
        %v1378 = vpop.f32.mrb[0].mxu0
        %v1379 = vadd.f32 %v457, %v1378
        %v1380 = vpop.f32.mrb[0].mxu0
        %v1381 = vadd.f32 %v461, %v1380
        %v1382 = vpop.f32.mrb[0].mxu0
        %v1383 = vadd.f32 %v457, %v1382
        %v1384 = vpop.f32.mrb[0].mxu0
        %v1385 = vadd.f32 %v461, %v1384
        %1386 = vmatprep.mubr.bf16.mxu0 %v603
        %1387 = vmatmul.mubr.bf16.gmra.mrb[0].mxu0 %v602
        %v1388 = vpop.f32.mrb[0].mxu0
        %v1389 = vadd.f32 %v457, %v1388
        %v1390 = vpop.f32.mrb[0].mxu0
        %v1391 = vadd.f32 %v461, %v1390
        %v1392 = vpop.f32.mrb[0].mxu0
        %v1393 = vadd.f32 %v457, %v1392
        %v1394 = vpop.f32.mrb[0].mxu0
        %v1395 = vadd.f32 %v461, %v1394
        %1396 = vmatprep.mubr.bf16.mxu0 %v605
        %1397 = vmatmul.mubr.bf16.gmra.mrb[0].mxu0 %v604
        %v1398 = vpop.f32.mrb[0].mxu0
        %v1399 = vadd.f32 %v457, %v1398
        %v1400 = vpop.f32.mrb[0].mxu0
        %v1401 = vadd.f32 %v461, %v1400
        %v1402 = vpop.f32.mrb[0].mxu0
        %v1403 = vadd.f32 %v457, %v1402
        %v1404 = vpop.f32.mrb[0].mxu0
        %v1405 = vadd.f32 %v461, %v1404
        %1406 = vmatprep.mubr.bf16.mxu0 %v607
        %1407 = vmatmul.mubr.bf16.gmra.mrb[0].mxu0 %v606
        %v1408 = vpop.f32.mrb[0].mxu0
        %v1409 = vadd.f32 %v457, %v1408
        %v1410 = vpop.f32.mrb[0].mxu0
        %v1411 = vadd.f32 %v461, %v1410
        %v1412 = vpop.f32.mrb[0].mxu0
        %v1413 = vadd.f32 %v457, %v1412
        %v1414 = vpop.f32.mrb[0].mxu0
        %v1415 = vadd.f32 %v461, %v1414
        %1416 = vmatprep.mubr.bf16.mxu0 %v609
        %1417 = vmatmul.mubr.bf16.gmra.mrb[0].mxu0 %v608
        %v1418 = vpop.f32.mrb[0].mxu0
        %v1419 = vadd.f32 %v457, %v1418
        %v1420 = vpop.f32.mrb[0].mxu0
        %v1421 = vadd.f32 %v461, %v1420
        %v1422 = vpop.f32.mrb[0].mxu0
        %v1423 = vadd.f32 %v457, %v1422
        %v1424 = vpop.f32.mrb[0].mxu0
        %v1425 = vadd.f32 %v461, %v1424
        %1426 = vmatprep.mubr.bf16.mxu0 %v611
        %1427 = vmatmul.mubr.bf16.gmra.mrb[0].mxu0 %v610
        %v1428 = vpop.f32.mrb[0].mxu0
        %v1429 = vadd.f32 %v457, %v1428
        %v1430 = vpop.f32.mrb[0].mxu0
        %v1431 = vadd.f32 %v461, %v1430
        %v1432 = vpop.f32.mrb[0].mxu0
        %v1433 = vadd.f32 %v457, %v1432
        %v1434 = vpop.f32.mrb[0].mxu0
        %v1435 = vadd.f32 %v461, %v1434
        %1436 = vmatprep.mubr.bf16.mxu0 %v613
        %1437 = vmatmul.mubr.bf16.gmra.mrb[0].mxu0 %v612
        %v1438 = vpop.f32.mrb[0].mxu0
        %v1439 = vadd.f32 %v457, %v1438
        %v1440 = vpop.f32.mrb[0].mxu0
        %v1441 = vadd.f32 %v461, %v1440
        %v1442 = vpop.f32.mrb[0].mxu0
        %v1443 = vadd.f32 %v457, %v1442
        %v1444 = vpop.f32.mrb[0].mxu0
        %v1445 = vadd.f32 %v461, %v1444
        %1446 = vmatprep.mubr.bf16.mxu0 %v615
        %1447 = vmatmul.mubr.bf16.gmra.mrb[0].mxu0 %v614
        %v1448 = vpop.f32.mrb[0].mxu0
        %v1449 = vadd.f32 %v457, %v1448
        %v1450 = vpop.f32.mrb[0].mxu0
        %v1451 = vadd.f32 %v461, %v1450
        %v1452 = vpop.f32.mrb[0].mxu0
        %v1453 = vadd.f32 %v457, %v1452
        %v1454 = vpop.f32.mrb[0].mxu0
        %v1455 = vadd.f32 %v461, %v1454
        %1456 = vmatprep.mubr.bf16.mxu0 %v617
        %1457 = vmatmul.mubr.bf16.gmra.mrb[0].mxu0 %v616
        %v1458 = vpop.f32.mrb[0].mxu0
        %v1459 = vadd.f32 %v457, %v1458
        %v1460 = vpop.f32.mrb[0].mxu0
        %v1461 = vadd.f32 %v461, %v1460
        %v1462 = vpop.f32.mrb[0].mxu0
        %v1463 = vadd.f32 %v457, %v1462
        %v1464 = vpop.f32.mrb[0].mxu0
        %v1465 = vadd.f32 %v461, %v1464
        %1466 = vmatprep.mubr.bf16.mxu0 %v619
        %1467 = vmatmul.mubr.bf16.gmra.mrb[0].mxu0 %v618
        %v1468 = vpop.f32.mrb[0].mxu0
        %v1469 = vadd.f32 %v457, %v1468
        %v1470 = vpop.f32.mrb[0].mxu0
        %v1471 = vadd.f32 %v461, %v1470
        %v1472 = vpop.f32.mrb[0].mxu0
        %v1473 = vadd.f32 %v457, %v1472
        %v1474 = vpop.f32.mrb[0].mxu0
        %v1475 = vadd.f32 %v461, %v1474
        %1476 = vmatprep.mubr.bf16.mxu0 %v621
        %1477 = vmatmul.mubr.bf16.gmra.mrb[0].mxu0 %v620
        %v1478 = vpop.f32.mrb[0].mxu0
        %v1479 = vadd.f32 %v457, %v1478
        %v1480 = vpop.f32.mrb[0].mxu0
        %v1481 = vadd.f32 %v461, %v1480
        %v1482 = vpop.f32.mrb[0].mxu0
        %v1483 = vadd.f32 %v457, %v1482
        %v1484 = vpop.f32.mrb[0].mxu0
        %v1485 = vadd.f32 %v461, %v1484
        %1486 = vdwg.mxu0
        %1487 = vmatprep.subr.bf16.mxu0 %v1041
        %1488 = vmatpush1.bf16.msra.mxu0 %v1040
        %1489 = vmatprep.subr.bf16.mxu0 %v1049
        %1490 = vmatpush1.bf16.msra.mxu0 %v1048
        %1491 = vmatprep.subr.bf16.mxu0 %v1057
        %1492 = vmatpush1.bf16.msra.mxu0 %v1056
        %1493 = vmatprep.subr.bf16.mxu0 %v1065
        %1494 = vmatpush1.bf16.msra.mxu0 %v1064
        %1495 = vmatprep.subr.bf16.mxu0 %v1073
        %1496 = vmatpush1.bf16.msra.mxu0 %v1072
        %1497 = vmatprep.subr.bf16.mxu0 %v1081
        %1498 = vmatpush1.bf16.msra.mxu0 %v1080
        %1499 = vmatprep.subr.bf16.mxu0 %v1089
        %1500 = vmatpush1.bf16.msra.mxu0 %v1088
        %1501 = vmatprep.subr.bf16.mxu0 %v1097
        %1502 = vmatpush1.bf16.msra.mxu0 %v1096
        %1503 = vmatprep.subr.bf16.mxu0 %v1105
        %1504 = vmatpush1.bf16.msra.mxu0 %v1104
        %1505 = vmatprep.subr.bf16.mxu0 %v1113
        %1506 = vmatpush1.bf16.msra.mxu0 %v1112
        %1507 = vmatprep.subr.bf16.mxu0 %v1121
        %1508 = vmatpush1.bf16.msra.mxu0 %v1120
        %1509 = vmatprep.subr.bf16.mxu0 %v1129
        %1510 = vmatpush1.bf16.msra.mxu0 %v1128
        %1511 = vmatprep.subr.bf16.mxu0 %v1137
        %1512 = vmatpush1.bf16.msra.mxu0 %v1136
        %1513 = vmatprep.subr.bf16.mxu0 %v1145
        %1514 = vmatpush1.bf16.msra.mxu0 %v1144
        %1515 = vmatprep.subr.bf16.mxu0 %v1153
        %1516 = vmatpush1.bf16.msra.mxu0 %v1152
        %1517 = vmatprep.subr.bf16.mxu0 %v1161
        %1518 = vmatpush1.bf16.msra.mxu0 %v1160
        %1519 = vmatprep.mubr.bf16.mxu0 %v591
        %1520 = vmatmul.mubr.bf16.gmra.mrb[0].mxu0 %v590
        %v1521 = vpop.f32.mrb[0].mxu0
        %v1522 = vadd.f32 %v465, %v1521
        %v1523 = vpop.f32.mrb[0].mxu0
        %v1524 = vadd.f32 %v469, %v1523
        %v1525 = vpop.f32.mrb[0].mxu0
        %v1526 = vadd.f32 %v465, %v1525
        %v1527 = vpop.f32.mrb[0].mxu0
        %v1528 = vadd.f32 %v469, %v1527
        %1529 = vmatprep.mubr.bf16.mxu0 %v593
        %1530 = vmatmul.mubr.bf16.gmra.mrb[0].mxu0 %v592
        %v1531 = vpop.f32.mrb[0].mxu0
        %v1532 = vadd.f32 %v465, %v1531
        %v1533 = vpop.f32.mrb[0].mxu0
        %v1534 = vadd.f32 %v469, %v1533
        %v1535 = vpop.f32.mrb[0].mxu0
        %v1536 = vadd.f32 %v465, %v1535
        %v1537 = vpop.f32.mrb[0].mxu0
        %v1538 = vadd.f32 %v469, %v1537
        %1539 = vmatprep.mubr.bf16.mxu0 %v595
        %1540 = vmatmul.mubr.bf16.gmra.mrb[0].mxu0 %v594
        %v1541 = vpop.f32.mrb[0].mxu0
        %v1542 = vadd.f32 %v465, %v1541
        %v1543 = vpop.f32.mrb[0].mxu0
        %v1544 = vadd.f32 %v469, %v1543
        %v1545 = vpop.f32.mrb[0].mxu0
        %v1546 = vadd.f32 %v465, %v1545
        %v1547 = vpop.f32.mrb[0].mxu0
        %v1548 = vadd.f32 %v469, %v1547
        %1549 = vmatprep.mubr.bf16.mxu0 %v597
        %1550 = vmatmul.mubr.bf16.gmra.mrb[0].mxu0 %v596
        %v1551 = vpop.f32.mrb[0].mxu0
        %v1552 = vadd.f32 %v465, %v1551
        %v1553 = vpop.f32.mrb[0].mxu0
        %v1554 = vadd.f32 %v469, %v1553
        %v1555 = vpop.f32.mrb[0].mxu0
        %v1556 = vadd.f32 %v465, %v1555
        %v1557 = vpop.f32.mrb[0].mxu0
        %v1558 = vadd.f32 %v469, %v1557
        %1559 = vmatprep.mubr.bf16.mxu0 %v599
        %1560 = vmatmul.mubr.bf16.gmra.mrb[0].mxu0 %v598
        %v1561 = vpop.f32.mrb[0].mxu0
        %v1562 = vadd.f32 %v465, %v1561
        %v1563 = vpop.f32.mrb[0].mxu0
        %v1564 = vadd.f32 %v469, %v1563
        %v1565 = vpop.f32.mrb[0].mxu0
        %v1566 = vadd.f32 %v465, %v1565
        %v1567 = vpop.f32.mrb[0].mxu0
        %v1568 = vadd.f32 %v469, %v1567
        %1569 = vmatprep.mubr.bf16.mxu0 %v601
        %1570 = vmatmul.mubr.bf16.gmra.mrb[0].mxu0 %v600
        %v1571 = vpop.f32.mrb[0].mxu0
        %v1572 = vadd.f32 %v465, %v1571
        %v1573 = vpop.f32.mrb[0].mxu0
        %v1574 = vadd.f32 %v469, %v1573
        %v1575 = vpop.f32.mrb[0].mxu0
        %v1576 = vadd.f32 %v465, %v1575
        %v1577 = vpop.f32.mrb[0].mxu0
        %v1578 = vadd.f32 %v469, %v1577
        %1579 = vmatprep.mubr.bf16.mxu0 %v603
        %1580 = vmatmul.mubr.bf16.gmra.mrb[0].mxu0 %v602
        %v1581 = vpop.f32.mrb[0].mxu0
        %v1582 = vadd.f32 %v465, %v1581
        %v1583 = vpop.f32.mrb[0].mxu0
        %v1584 = vadd.f32 %v469, %v1583
        %v1585 = vpop.f32.mrb[0].mxu0
        %v1586 = vadd.f32 %v465, %v1585
        %v1587 = vpop.f32.mrb[0].mxu0
        %v1588 = vadd.f32 %v469, %v1587
        %1589 = vmatprep.mubr.bf16.mxu0 %v605
        %1590 = vmatmul.mubr.bf16.gmra.mrb[0].mxu0 %v604
        %v1591 = vpop.f32.mrb[0].mxu0
        %v1592 = vadd.f32 %v465, %v1591
        %v1593 = vpop.f32.mrb[0].mxu0
        %v1594 = vadd.f32 %v469, %v1593
        %v1595 = vpop.f32.mrb[0].mxu0
        %v1596 = vadd.f32 %v465, %v1595
        %v1597 = vpop.f32.mrb[0].mxu0
        %v1598 = vadd.f32 %v469, %v1597
        %1599 = vmatprep.mubr.bf16.mxu0 %v607
        %1600 = vmatmul.mubr.bf16.gmra.mrb[0].mxu0 %v606
        %v1601 = vpop.f32.mrb[0].mxu0
        %v1602 = vadd.f32 %v465, %v1601
        %v1603 = vpop.f32.mrb[0].mxu0
        %v1604 = vadd.f32 %v469, %v1603
        %v1605 = vpop.f32.mrb[0].mxu0
        %v1606 = vadd.f32 %v465, %v1605
        %v1607 = vpop.f32.mrb[0].mxu0
        %v1608 = vadd.f32 %v469, %v1607
        %1609 = vmatprep.mubr.bf16.mxu0 %v609
        %1610 = vmatmul.mubr.bf16.gmra.mrb[0].mxu0 %v608
        %v1611 = vpop.f32.mrb[0].mxu0
        %v1612 = vadd.f32 %v465, %v1611
        %v1613 = vpop.f32.mrb[0].mxu0
        %v1614 = vadd.f32 %v469, %v1613
        %v1615 = vpop.f32.mrb[0].mxu0
        %v1616 = vadd.f32 %v465, %v1615
        %v1617 = vpop.f32.mrb[0].mxu0
        %v1618 = vadd.f32 %v469, %v1617
        %1619 = vmatprep.mubr.bf16.mxu0 %v611
        %1620 = vmatmul.mubr.bf16.gmra.mrb[0].mxu0 %v610
        %v1621 = vpop.f32.mrb[0].mxu0
        %v1622 = vadd.f32 %v465, %v1621
        %v1623 = vpop.f32.mrb[0].mxu0
        %v1624 = vadd.f32 %v469, %v1623
        %v1625 = vpop.f32.mrb[0].mxu0
        %v1626 = vadd.f32 %v465, %v1625
        %v1627 = vpop.f32.mrb[0].mxu0
        %v1628 = vadd.f32 %v469, %v1627
        %1629 = vmatprep.mubr.bf16.mxu0 %v613
        %1630 = vmatmul.mubr.bf16.gmra.mrb[0].mxu0 %v612
        %v1631 = vpop.f32.mrb[0].mxu0
        %v1632 = vadd.f32 %v465, %v1631
        %v1633 = vpop.f32.mrb[0].mxu0
        %v1634 = vadd.f32 %v469, %v1633
        %v1635 = vpop.f32.mrb[0].mxu0
        %v1636 = vadd.f32 %v465, %v1635
        %v1637 = vpop.f32.mrb[0].mxu0
        %v1638 = vadd.f32 %v469, %v1637
        %1639 = vmatprep.mubr.bf16.mxu0 %v615
        %1640 = vmatmul.mubr.bf16.gmra.mrb[0].mxu0 %v614
        %v1641 = vpop.f32.mrb[0].mxu0
        %v1642 = vadd.f32 %v465, %v1641
        %v1643 = vpop.f32.mrb[0].mxu0
        %v1644 = vadd.f32 %v469, %v1643
        %v1645 = vpop.f32.mrb[0].mxu0
        %v1646 = vadd.f32 %v465, %v1645
        %v1647 = vpop.f32.mrb[0].mxu0
        %v1648 = vadd.f32 %v469, %v1647
        %1649 = vmatprep.mubr.bf16.mxu0 %v617
        %1650 = vmatmul.mubr.bf16.gmra.mrb[0].mxu0 %v616
        %v1651 = vpop.f32.mrb[0].mxu0
        %v1652 = vadd.f32 %v465, %v1651
        %v1653 = vpop.f32.mrb[0].mxu0
        %v1654 = vadd.f32 %v469, %v1653
        %v1655 = vpop.f32.mrb[0].mxu0
        %v1656 = vadd.f32 %v465, %v1655
        %v1657 = vpop.f32.mrb[0].mxu0
        %v1658 = vadd.f32 %v469, %v1657
        %1659 = vmatprep.mubr.bf16.mxu0 %v619
        %1660 = vmatmul.mubr.bf16.gmra.mrb[0].mxu0 %v618
        %v1661 = vpop.f32.mrb[0].mxu0
        %v1662 = vadd.f32 %v465, %v1661
        %v1663 = vpop.f32.mrb[0].mxu0
        %v1664 = vadd.f32 %v469, %v1663
        %v1665 = vpop.f32.mrb[0].mxu0
        %v1666 = vadd.f32 %v465, %v1665
        %v1667 = vpop.f32.mrb[0].mxu0
        %v1668 = vadd.f32 %v469, %v1667
        %1669 = vmatprep.mubr.bf16.mxu0 %v621
        %1670 = vmatmul.mubr.bf16.gmra.mrb[0].mxu0 %v620
        %v1671 = vpop.f32.mrb[0].mxu0
        %v1672 = vadd.f32 %v465, %v1671
        %v1673 = vpop.f32.mrb[0].mxu0
        %v1674 = vadd.f32 %v469, %v1673
        %v1675 = vpop.f32.mrb[0].mxu0
        %v1676 = vadd.f32 %v465, %v1675
        %v1677 = vpop.f32.mrb[0].mxu0
        %v1678 = vadd.f32 %v469, %v1677
        %1679 = vdwg.mxu0
        %1680 = vmatprep.subr.bf16.mxu0 %v1043
        %1681 = vmatpush1.bf16.msra.mxu0 %v1042
        %1682 = vmatprep.subr.bf16.mxu0 %v1051
        %1683 = vmatpush1.bf16.msra.mxu0 %v1050
        %1684 = vmatprep.subr.bf16.mxu0 %v1059
        %1685 = vmatpush1.bf16.msra.mxu0 %v1058
        %1686 = vmatprep.subr.bf16.mxu0 %v1067
        %1687 = vmatpush1.bf16.msra.mxu0 %v1066
        %1688 = vmatprep.subr.bf16.mxu0 %v1075
        %1689 = vmatpush1.bf16.msra.mxu0 %v1074
        %1690 = vmatprep.subr.bf16.mxu0 %v1083
        %1691 = vmatpush1.bf16.msra.mxu0 %v1082
        %1692 = vmatprep.subr.bf16.mxu0 %v1091
        %1693 = vmatpush1.bf16.msra.mxu0 %v1090
        %1694 = vmatprep.subr.bf16.mxu0 %v1099
        %1695 = vmatpush1.bf16.msra.mxu0 %v1098
        %1696 = vmatprep.subr.bf16.mxu0 %v1107
        %1697 = vmatpush1.bf16.msra.mxu0 %v1106
        %1698 = vmatprep.subr.bf16.mxu0 %v1115
        %1699 = vmatpush1.bf16.msra.mxu0 %v1114
        %1700 = vmatprep.subr.bf16.mxu0 %v1123
        %1701 = vmatpush1.bf16.msra.mxu0 %v1122
        %1702 = vmatprep.subr.bf16.mxu0 %v1131
        %1703 = vmatpush1.bf16.msra.mxu0 %v1130
        %1704 = vmatprep.subr.bf16.mxu0 %v1139
        %1705 = vmatpush1.bf16.msra.mxu0 %v1138
        %1706 = vmatprep.subr.bf16.mxu0 %v1147
        %1707 = vmatpush1.bf16.msra.mxu0 %v1146
        %1708 = vmatprep.subr.bf16.mxu0 %v1155
        %1709 = vmatpush1.bf16.msra.mxu0 %v1154
        %1710 = vmatprep.subr.bf16.mxu0 %v1163
        %1711 = vmatpush1.bf16.msra.mxu0 %v1162
        %1712 = vmatprep.mubr.bf16.mxu0 %v591
        %1713 = vmatmul.mubr.bf16.gmra.mrb[0].mxu0 %v590
        %v1714 = vpop.f32.mrb[0].mxu0
        %v1715 = vadd.f32 %v473, %v1714
        %v1716 = vpop.f32.mrb[0].mxu0
        %v1717 = vadd.f32 %v477, %v1716
        %v1718 = vpop.f32.mrb[0].mxu0
        %v1719 = vadd.f32 %v473, %v1718
        %v1720 = vpop.f32.mrb[0].mxu0
        %v1721 = vadd.f32 %v477, %v1720
        %1722 = vmatprep.mubr.bf16.mxu0 %v593
        %1723 = vmatmul.mubr.bf16.gmra.mrb[0].mxu0 %v592
        %v1724 = vpop.f32.mrb[0].mxu0
        %v1725 = vadd.f32 %v473, %v1724
        %v1726 = vpop.f32.mrb[0].mxu0
        %v1727 = vadd.f32 %v477, %v1726
        %v1728 = vpop.f32.mrb[0].mxu0
        %v1729 = vadd.f32 %v473, %v1728
        %v1730 = vpop.f32.mrb[0].mxu0
        %v1731 = vadd.f32 %v477, %v1730
        %1732 = vmatprep.mubr.bf16.mxu0 %v595
        %1733 = vmatmul.mubr.bf16.gmra.mrb[0].mxu0 %v594
        %v1734 = vpop.f32.mrb[0].mxu0
        %v1735 = vadd.f32 %v473, %v1734
        %v1736 = vpop.f32.mrb[0].mxu0
        %v1737 = vadd.f32 %v477, %v1736
        %v1738 = vpop.f32.mrb[0].mxu0
        %v1739 = vadd.f32 %v473, %v1738
        %v1740 = vpop.f32.mrb[0].mxu0
        %v1741 = vadd.f32 %v477, %v1740
        %1742 = vmatprep.mubr.bf16.mxu0 %v597
        %1743 = vmatmul.mubr.bf16.gmra.mrb[0].mxu0 %v596
        %v1744 = vpop.f32.mrb[0].mxu0
        %v1745 = vadd.f32 %v473, %v1744
        %v1746 = vpop.f32.mrb[0].mxu0
        %v1747 = vadd.f32 %v477, %v1746
        %v1748 = vpop.f32.mrb[0].mxu0
        %v1749 = vadd.f32 %v473, %v1748
        %v1750 = vpop.f32.mrb[0].mxu0
        %v1751 = vadd.f32 %v477, %v1750
        %1752 = vmatprep.mubr.bf16.mxu0 %v599
        %1753 = vmatmul.mubr.bf16.gmra.mrb[0].mxu0 %v598
        %v1754 = vpop.f32.mrb[0].mxu0
        %v1755 = vadd.f32 %v473, %v1754
        %v1756 = vpop.f32.mrb[0].mxu0
        %v1757 = vadd.f32 %v477, %v1756
        %v1758 = vpop.f32.mrb[0].mxu0
        %v1759 = vadd.f32 %v473, %v1758
        %v1760 = vpop.f32.mrb[0].mxu0
        %v1761 = vadd.f32 %v477, %v1760
        %1762 = vmatprep.mubr.bf16.mxu0 %v601
        %1763 = vmatmul.mubr.bf16.gmra.mrb[0].mxu0 %v600
        %v1764 = vpop.f32.mrb[0].mxu0
        %v1765 = vadd.f32 %v473, %v1764
        %v1766 = vpop.f32.mrb[0].mxu0
        %v1767 = vadd.f32 %v477, %v1766
        %v1768 = vpop.f32.mrb[0].mxu0
        %v1769 = vadd.f32 %v473, %v1768
        %v1770 = vpop.f32.mrb[0].mxu0
        %v1771 = vadd.f32 %v477, %v1770
        %1772 = vmatprep.mubr.bf16.mxu0 %v603
        %1773 = vmatmul.mubr.bf16.gmra.mrb[0].mxu0 %v602
        %v1774 = vpop.f32.mrb[0].mxu0
        %v1775 = vadd.f32 %v473, %v1774
        %v1776 = vpop.f32.mrb[0].mxu0
        %v1777 = vadd.f32 %v477, %v1776
        %v1778 = vpop.f32.mrb[0].mxu0
        %v1779 = vadd.f32 %v473, %v1778
        %v1780 = vpop.f32.mrb[0].mxu0
        %v1781 = vadd.f32 %v477, %v1780
        %1782 = vmatprep.mubr.bf16.mxu0 %v605
        %1783 = vmatmul.mubr.bf16.gmra.mrb[0].mxu0 %v604
        %v1784 = vpop.f32.mrb[0].mxu0
        %v1785 = vadd.f32 %v473, %v1784
        %v1786 = vpop.f32.mrb[0].mxu0
        %v1787 = vadd.f32 %v477, %v1786
        %v1788 = vpop.f32.mrb[0].mxu0
        %v1789 = vadd.f32 %v473, %v1788
        %v1790 = vpop.f32.mrb[0].mxu0
        %v1791 = vadd.f32 %v477, %v1790
        %1792 = vmatprep.mubr.bf16.mxu0 %v607
        %1793 = vmatmul.mubr.bf16.gmra.mrb[0].mxu0 %v606
        %v1794 = vpop.f32.mrb[0].mxu0
        %v1795 = vadd.f32 %v473, %v1794
        %v1796 = vpop.f32.mrb[0].mxu0
        %v1797 = vadd.f32 %v477, %v1796
        %v1798 = vpop.f32.mrb[0].mxu0
        %v1799 = vadd.f32 %v473, %v1798
        %v1800 = vpop.f32.mrb[0].mxu0
        %v1801 = vadd.f32 %v477, %v1800
        %1802 = vmatprep.mubr.bf16.mxu0 %v609
        %1803 = vmatmul.mubr.bf16.gmra.mrb[0].mxu0 %v608
        %v1804 = vpop.f32.mrb[0].mxu0
        %v1805 = vadd.f32 %v473, %v1804
        %v1806 = vpop.f32.mrb[0].mxu0
        %v1807 = vadd.f32 %v477, %v1806
        %v1808 = vpop.f32.mrb[0].mxu0
        %v1809 = vadd.f32 %v473, %v1808
        %v1810 = vpop.f32.mrb[0].mxu0
        %v1811 = vadd.f32 %v477, %v1810
        %1812 = vmatprep.mubr.bf16.mxu0 %v611
        %1813 = vmatmul.mubr.bf16.gmra.mrb[0].mxu0 %v610
        %v1814 = vpop.f32.mrb[0].mxu0
        %v1815 = vadd.f32 %v473, %v1814
        %v1816 = vpop.f32.mrb[0].mxu0
        %v1817 = vadd.f32 %v477, %v1816
        %v1818 = vpop.f32.mrb[0].mxu0
        %v1819 = vadd.f32 %v473, %v1818
        %v1820 = vpop.f32.mrb[0].mxu0
        %v1821 = vadd.f32 %v477, %v1820
        %1822 = vmatprep.mubr.bf16.mxu0 %v613
        %1823 = vmatmul.mubr.bf16.gmra.mrb[0].mxu0 %v612
        %v1824 = vpop.f32.mrb[0].mxu0
        %v1825 = vadd.f32 %v473, %v1824
        %v1826 = vpop.f32.mrb[0].mxu0
        %v1827 = vadd.f32 %v477, %v1826
        %v1828 = vpop.f32.mrb[0].mxu0
        %v1829 = vadd.f32 %v473, %v1828
        %v1830 = vpop.f32.mrb[0].mxu0
        %v1831 = vadd.f32 %v477, %v1830
        %1832 = vmatprep.mubr.bf16.mxu0 %v615
        %1833 = vmatmul.mubr.bf16.gmra.mrb[0].mxu0 %v614
        %v1834 = vpop.f32.mrb[0].mxu0
        %v1835 = vadd.f32 %v473, %v1834
        %v1836 = vpop.f32.mrb[0].mxu0
        %v1837 = vadd.f32 %v477, %v1836
        %v1838 = vpop.f32.mrb[0].mxu0
        %v1839 = vadd.f32 %v473, %v1838
        %v1840 = vpop.f32.mrb[0].mxu0
        %v1841 = vadd.f32 %v477, %v1840
        %1842 = vmatprep.mubr.bf16.mxu0 %v617
        %1843 = vmatmul.mubr.bf16.gmra.mrb[0].mxu0 %v616
        %v1844 = vpop.f32.mrb[0].mxu0
        %v1845 = vadd.f32 %v473, %v1844
        %v1846 = vpop.f32.mrb[0].mxu0
        %v1847 = vadd.f32 %v477, %v1846
        %v1848 = vpop.f32.mrb[0].mxu0
        %v1849 = vadd.f32 %v473, %v1848
        %v1850 = vpop.f32.mrb[0].mxu0
        %v1851 = vadd.f32 %v477, %v1850
        %1852 = vmatprep.mubr.bf16.mxu0 %v619
        %1853 = vmatmul.mubr.bf16.gmra.mrb[0].mxu0 %v618
        %v1854 = vpop.f32.mrb[0].mxu0
        %v1855 = vadd.f32 %v473, %v1854
        %v1856 = vpop.f32.mrb[0].mxu0
        %v1857 = vadd.f32 %v477, %v1856
        %v1858 = vpop.f32.mrb[0].mxu0
        %v1859 = vadd.f32 %v473, %v1858
        %v1860 = vpop.f32.mrb[0].mxu0
        %v1861 = vadd.f32 %v477, %v1860
        %1862 = vmatprep.mubr.bf16.mxu0 %v621
        %1863 = vmatmul.mubr.bf16.gmra.mrb[0].mxu0 %v620
        %v1864 = vpop.f32.mrb[0].mxu0
        %v1865 = vadd.f32 %v473, %v1864
        %v1866 = vpop.f32.mrb[0].mxu0
        %v1867 = vadd.f32 %v477, %v1866
        %v1868 = vpop.f32.mrb[0].mxu0
        %v1869 = vadd.f32 %v473, %v1868
        %v1870 = vpop.f32.mrb[0].mxu0
        %v1871 = vadd.f32 %v477, %v1870
        %1872 = vdwg.mxu0
        %1873 = vmatprep.subr.bf16.mxu0 %v1045
        %1874 = vmatpush1.bf16.msra.mxu0 %v1044
        %1875 = vmatprep.subr.bf16.mxu0 %v1053
        %1876 = vmatpush1.bf16.msra.mxu0 %v1052
        %1877 = vmatprep.subr.bf16.mxu0 %v1061
        %1878 = vmatpush1.bf16.msra.mxu0 %v1060
        %1879 = vmatprep.subr.bf16.mxu0 %v1069
        %1880 = vmatpush1.bf16.msra.mxu0 %v1068
        %1881 = vmatprep.subr.bf16.mxu0 %v1077
        %1882 = vmatpush1.bf16.msra.mxu0 %v1076
        %1883 = vmatprep.subr.bf16.mxu0 %v1085
        %1884 = vmatpush1.bf16.msra.mxu0 %v1084
        %1885 = vmatprep.subr.bf16.mxu0 %v1093
        %1886 = vmatpush1.bf16.msra.mxu0 %v1092
        %1887 = vmatprep.subr.bf16.mxu0 %v1101
        %1888 = vmatpush1.bf16.msra.mxu0 %v1100
        %1889 = vmatprep.subr.bf16.mxu0 %v1109
        %1890 = vmatpush1.bf16.msra.mxu0 %v1108
        %1891 = vmatprep.subr.bf16.mxu0 %v1117
        %1892 = vmatpush1.bf16.msra.mxu0 %v1116
        %1893 = vmatprep.subr.bf16.mxu0 %v1125
        %1894 = vmatpush1.bf16.msra.mxu0 %v1124
        %1895 = vmatprep.subr.bf16.mxu0 %v1133
        %1896 = vmatpush1.bf16.msra.mxu0 %v1132
        %1897 = vmatprep.subr.bf16.mxu0 %v1141
        %1898 = vmatpush1.bf16.msra.mxu0 %v1140
        %1899 = vmatprep.subr.bf16.mxu0 %v1149
        %1900 = vmatpush1.bf16.msra.mxu0 %v1148
        %1901 = vmatprep.subr.bf16.mxu0 %v1157
        %1902 = vmatpush1.bf16.msra.mxu0 %v1156
        %1903 = vmatprep.subr.bf16.mxu0 %v1165
        %1904 = vmatpush1.bf16.msra.mxu0 %v1164
        %1905 = vmatprep.mubr.bf16.mxu0 %v591
        %1906 = vmatmul.mubr.bf16.gmra.mrb[0].mxu0 %v590
        %v1907 = vpop.f32.mrb[0].mxu0
        %v1908 = vadd.f32 %v481, %v1907
        %v1909 = vpop.f32.mrb[0].mxu0
        %v1910 = vadd.f32 %v485, %v1909
        %v1911 = vpop.f32.mrb[0].mxu0
        %v1912 = vadd.f32 %v481, %v1911
        %v1913 = vpop.f32.mrb[0].mxu0
        %v1914 = vadd.f32 %v485, %v1913
        %1915 = vmatprep.mubr.bf16.mxu0 %v593
        %1916 = vmatmul.mubr.bf16.gmra.mrb[0].mxu0 %v592
        %v1917 = vpop.f32.mrb[0].mxu0
        %v1918 = vadd.f32 %v481, %v1917
        %v1919 = vpop.f32.mrb[0].mxu0
        %v1920 = vadd.f32 %v485, %v1919
        %v1921 = vpop.f32.mrb[0].mxu0
        %v1922 = vadd.f32 %v481, %v1921
        %v1923 = vpop.f32.mrb[0].mxu0
        %v1924 = vadd.f32 %v485, %v1923
        %1925 = vmatprep.mubr.bf16.mxu0 %v595
        %1926 = vmatmul.mubr.bf16.gmra.mrb[0].mxu0 %v594
        %v1927 = vpop.f32.mrb[0].mxu0
        %v1928 = vadd.f32 %v481, %v1927
        %v1929 = vpop.f32.mrb[0].mxu0
        %v1930 = vadd.f32 %v485, %v1929
        %v1931 = vpop.f32.mrb[0].mxu0
        %v1932 = vadd.f32 %v481, %v1931
        %v1933 = vpop.f32.mrb[0].mxu0
        %v1934 = vadd.f32 %v485, %v1933
        %1935 = vmatprep.mubr.bf16.mxu0 %v597
        %1936 = vmatmul.mubr.bf16.gmra.mrb[0].mxu0 %v596
        %v1937 = vpop.f32.mrb[0].mxu0
        %v1938 = vadd.f32 %v481, %v1937
        %v1939 = vpop.f32.mrb[0].mxu0
        %v1940 = vadd.f32 %v485, %v1939
        %v1941 = vpop.f32.mrb[0].mxu0
        %v1942 = vadd.f32 %v481, %v1941
        %v1943 = vpop.f32.mrb[0].mxu0
        %v1944 = vadd.f32 %v485, %v1943
        %1945 = vmatprep.mubr.bf16.mxu0 %v599
        %1946 = vmatmul.mubr.bf16.gmra.mrb[0].mxu0 %v598
        %v1947 = vpop.f32.mrb[0].mxu0
        %v1948 = vadd.f32 %v481, %v1947
        %v1949 = vpop.f32.mrb[0].mxu0
        %v1950 = vadd.f32 %v485, %v1949
        %v1951 = vpop.f32.mrb[0].mxu0
        %v1952 = vadd.f32 %v481, %v1951
        %v1953 = vpop.f32.mrb[0].mxu0
        %v1954 = vadd.f32 %v485, %v1953
        %1955 = vmatprep.mubr.bf16.mxu0 %v601
        %1956 = vmatmul.mubr.bf16.gmra.mrb[0].mxu0 %v600
        %v1957 = vpop.f32.mrb[0].mxu0
        %v1958 = vadd.f32 %v481, %v1957
        %v1959 = vpop.f32.mrb[0].mxu0
        %v1960 = vadd.f32 %v485, %v1959
        %v1961 = vpop.f32.mrb[0].mxu0
        %v1962 = vadd.f32 %v481, %v1961
        %v1963 = vpop.f32.mrb[0].mxu0
        %v1964 = vadd.f32 %v485, %v1963
        %1965 = vmatprep.mubr.bf16.mxu0 %v603
        %1966 = vmatmul.mubr.bf16.gmra.mrb[0].mxu0 %v602
        %v1967 = vpop.f32.mrb[0].mxu0
        %v1968 = vadd.f32 %v481, %v1967
        %v1969 = vpop.f32.mrb[0].mxu0
        %v1970 = vadd.f32 %v485, %v1969
        %v1971 = vpop.f32.mrb[0].mxu0
        %v1972 = vadd.f32 %v481, %v1971
        %v1973 = vpop.f32.mrb[0].mxu0
        %v1974 = vadd.f32 %v485, %v1973
        %1975 = vmatprep.mubr.bf16.mxu0 %v605
        %1976 = vmatmul.mubr.bf16.gmra.mrb[0].mxu0 %v604
        %v1977 = vpop.f32.mrb[0].mxu0
        %v1978 = vadd.f32 %v481, %v1977
        %v1979 = vpop.f32.mrb[0].mxu0
        %v1980 = vadd.f32 %v485, %v1979
        %v1981 = vpop.f32.mrb[0].mxu0
        %v1982 = vadd.f32 %v481, %v1981
        %v1983 = vpop.f32.mrb[0].mxu0
        %v1984 = vadd.f32 %v485, %v1983
        %1985 = vmatprep.mubr.bf16.mxu0 %v607
        %1986 = vmatmul.mubr.bf16.gmra.mrb[0].mxu0 %v606
        %v1987 = vpop.f32.mrb[0].mxu0
        %v1988 = vadd.f32 %v481, %v1987
        %v1989 = vpop.f32.mrb[0].mxu0
        %v1990 = vadd.f32 %v485, %v1989
        %v1991 = vpop.f32.mrb[0].mxu0
        %v1992 = vadd.f32 %v481, %v1991
        %v1993 = vpop.f32.mrb[0].mxu0
        %v1994 = vadd.f32 %v485, %v1993
        %1995 = vmatprep.mubr.bf16.mxu0 %v609
        %1996 = vmatmul.mubr.bf16.gmra.mrb[0].mxu0 %v608
        %v1997 = vpop.f32.mrb[0].mxu0
        %v1998 = vadd.f32 %v481, %v1997
        %v1999 = vpop.f32.mrb[0].mxu0
        %v2000 = vadd.f32 %v485, %v1999
        %v2001 = vpop.f32.mrb[0].mxu0
        %v2002 = vadd.f32 %v481, %v2001
        %v2003 = vpop.f32.mrb[0].mxu0
        %v2004 = vadd.f32 %v485, %v2003
        %2005 = vmatprep.mubr.bf16.mxu0 %v611
        %2006 = vmatmul.mubr.bf16.gmra.mrb[0].mxu0 %v610
        %v2007 = vpop.f32.mrb[0].mxu0
        %v2008 = vadd.f32 %v481, %v2007
        %v2009 = vpop.f32.mrb[0].mxu0
        %v2010 = vadd.f32 %v485, %v2009
        %v2011 = vpop.f32.mrb[0].mxu0
        %v2012 = vadd.f32 %v481, %v2011
        %v2013 = vpop.f32.mrb[0].mxu0
        %v2014 = vadd.f32 %v485, %v2013
        %2015 = vmatprep.mubr.bf16.mxu0 %v613
        %2016 = vmatmul.mubr.bf16.gmra.mrb[0].mxu0 %v612
        %v2017 = vpop.f32.mrb[0].mxu0
        %v2018 = vadd.f32 %v481, %v2017
        %v2019 = vpop.f32.mrb[0].mxu0
        %v2020 = vadd.f32 %v485, %v2019
        %v2021 = vpop.f32.mrb[0].mxu0
        %v2022 = vadd.f32 %v481, %v2021
        %v2023 = vpop.f32.mrb[0].mxu0
        %v2024 = vadd.f32 %v485, %v2023
        %2025 = vmatprep.mubr.bf16.mxu0 %v615
        %2026 = vmatmul.mubr.bf16.gmra.mrb[0].mxu0 %v614
        %v2027 = vpop.f32.mrb[0].mxu0
        %v2028 = vadd.f32 %v481, %v2027
        %v2029 = vpop.f32.mrb[0].mxu0
        %v2030 = vadd.f32 %v485, %v2029
        %v2031 = vpop.f32.mrb[0].mxu0
        %v2032 = vadd.f32 %v481, %v2031
        %v2033 = vpop.f32.mrb[0].mxu0
        %v2034 = vadd.f32 %v485, %v2033
        %2035 = vmatprep.mubr.bf16.mxu0 %v617
        %2036 = vmatmul.mubr.bf16.gmra.mrb[0].mxu0 %v616
        %v2037 = vpop.f32.mrb[0].mxu0
        %v2038 = vadd.f32 %v481, %v2037
        %v2039 = vpop.f32.mrb[0].mxu0
        %v2040 = vadd.f32 %v485, %v2039
        %v2041 = vpop.f32.mrb[0].mxu0
        %v2042 = vadd.f32 %v481, %v2041
        %v2043 = vpop.f32.mrb[0].mxu0
        %v2044 = vadd.f32 %v485, %v2043
        %2045 = vmatprep.mubr.bf16.mxu0 %v619
        %2046 = vmatmul.mubr.bf16.gmra.mrb[0].mxu0 %v618
        %v2047 = vpop.f32.mrb[0].mxu0
        %v2048 = vadd.f32 %v481, %v2047
        %v2049 = vpop.f32.mrb[0].mxu0
        %v2050 = vadd.f32 %v485, %v2049
        %v2051 = vpop.f32.mrb[0].mxu0
        %v2052 = vadd.f32 %v481, %v2051
        %v2053 = vpop.f32.mrb[0].mxu0
        %v2054 = vadd.f32 %v485, %v2053
        %2055 = vmatprep.mubr.bf16.mxu0 %v621
        %2056 = vmatmul.mubr.bf16.gmra.mrb[0].mxu0 %v620
        %v2057 = vpop.f32.mrb[0].mxu0
        %v2058 = vadd.f32 %v481, %v2057
        %v2059 = vpop.f32.mrb[0].mxu0
        %v2060 = vadd.f32 %v485, %v2059
        %v2061 = vpop.f32.mrb[0].mxu0
        %v2062 = vadd.f32 %v481, %v2061
        %v2063 = vpop.f32.mrb[0].mxu0
        %v2064 = vadd.f32 %v485, %v2063
        %2065 = vdwg.mxu0
        %v2066 = vpack.c.bf16 %v1333, %v1329
        %v2067 = vpack.c.bf16 %v1335, %v1331
        %v2068 = vpack.c.bf16 %v1526, %v1522
        %v2069 = vpack.c.bf16 %v1528, %v1524
        %v2070 = vpack.c.bf16 %v1719, %v1715
        %v2071 = vpack.c.bf16 %v1721, %v1717
        %v2072 = vpack.c.bf16 %v1912, %v1908
        %v2073 = vpack.c.bf16 %v1914, %v1910
        %v2074 = vpack.c.bf16 %v1343, %v1339
        %v2075 = vpack.c.bf16 %v1345, %v1341
        %v2076 = vpack.c.bf16 %v1536, %v1532
        %v2077 = vpack.c.bf16 %v1538, %v1534
        %v2078 = vpack.c.bf16 %v1729, %v1725
        %v2079 = vpack.c.bf16 %v1731, %v1727
        %v2080 = vpack.c.bf16 %v1922, %v1918
        %v2081 = vpack.c.bf16 %v1924, %v1920
        %v2082 = vpack.c.bf16 %v1353, %v1349
        %v2083 = vpack.c.bf16 %v1355, %v1351
        %v2084 = vpack.c.bf16 %v1546, %v1542
        %v2085 = vpack.c.bf16 %v1548, %v1544
        %v2086 = vpack.c.bf16 %v1739, %v1735
        %v2087 = vpack.c.bf16 %v1741, %v1737
        %v2088 = vpack.c.bf16 %v1932, %v1928
        %v2089 = vpack.c.bf16 %v1934, %v1930
        %v2090 = vpack.c.bf16 %v1363, %v1359
        %v2091 = vpack.c.bf16 %v1365, %v1361
        %v2092 = vpack.c.bf16 %v1556, %v1552
        %v2093 = vpack.c.bf16 %v1558, %v1554
        %v2094 = vpack.c.bf16 %v1749, %v1745
        %v2095 = vpack.c.bf16 %v1751, %v1747
        %v2096 = vpack.c.bf16 %v1942, %v1938
        %v2097 = vpack.c.bf16 %v1944, %v1940
        %v2098 = vpack.c.bf16 %v1373, %v1369
        %v2099 = vpack.c.bf16 %v1375, %v1371
        %v2100 = vpack.c.bf16 %v1566, %v1562
        %v2101 = vpack.c.bf16 %v1568, %v1564
        %v2102 = vpack.c.bf16 %v1759, %v1755
        %v2103 = vpack.c.bf16 %v1761, %v1757
        %v2104 = vpack.c.bf16 %v1952, %v1948
        %v2105 = vpack.c.bf16 %v1954, %v1950
        %v2106 = vpack.c.bf16 %v1383, %v1379
        %v2107 = vpack.c.bf16 %v1385, %v1381
        %v2108 = vpack.c.bf16 %v1576, %v1572
        %v2109 = vpack.c.bf16 %v1578, %v1574
        %v2110 = vpack.c.bf16 %v1769, %v1765
        %v2111 = vpack.c.bf16 %v1771, %v1767
        %v2112 = vpack.c.bf16 %v1962, %v1958
        %v2113 = vpack.c.bf16 %v1964, %v1960
        %v2114 = vpack.c.bf16 %v1393, %v1389
        %v2115 = vpack.c.bf16 %v1395, %v1391
        %v2116 = vpack.c.bf16 %v1586, %v1582
        %v2117 = vpack.c.bf16 %v1588, %v1584
        %v2118 = vpack.c.bf16 %v1779, %v1775
        %v2119 = vpack.c.bf16 %v1781, %v1777
        %v2120 = vpack.c.bf16 %v1972, %v1968
        %v2121 = vpack.c.bf16 %v1974, %v1970
        %v2122 = vpack.c.bf16 %v1403, %v1399
        %v2123 = vpack.c.bf16 %v1405, %v1401
        %v2124 = vpack.c.bf16 %v1596, %v1592
        %v2125 = vpack.c.bf16 %v1598, %v1594
        %v2126 = vpack.c.bf16 %v1789, %v1785
        %v2127 = vpack.c.bf16 %v1791, %v1787
        %v2128 = vpack.c.bf16 %v1982, %v1978
        %v2129 = vpack.c.bf16 %v1984, %v1980
        %v2130 = vpack.c.bf16 %v1413, %v1409
        %v2131 = vpack.c.bf16 %v1415, %v1411
        %v2132 = vpack.c.bf16 %v1606, %v1602
        %v2133 = vpack.c.bf16 %v1608, %v1604
        %v2134 = vpack.c.bf16 %v1799, %v1795
        %v2135 = vpack.c.bf16 %v1801, %v1797
        %v2136 = vpack.c.bf16 %v1992, %v1988
        %v2137 = vpack.c.bf16 %v1994, %v1990
        %v2138 = vpack.c.bf16 %v1423, %v1419
        %v2139 = vpack.c.bf16 %v1425, %v1421
        %v2140 = vpack.c.bf16 %v1616, %v1612
        %v2141 = vpack.c.bf16 %v1618, %v1614
        %v2142 = vpack.c.bf16 %v1809, %v1805
        %v2143 = vpack.c.bf16 %v1811, %v1807
        %v2144 = vpack.c.bf16 %v2002, %v1998
        %v2145 = vpack.c.bf16 %v2004, %v2000
        %v2146 = vpack.c.bf16 %v1433, %v1429
        %v2147 = vpack.c.bf16 %v1435, %v1431
        %v2148 = vpack.c.bf16 %v1626, %v1622
        %v2149 = vpack.c.bf16 %v1628, %v1624
        %v2150 = vpack.c.bf16 %v1819, %v1815
        %v2151 = vpack.c.bf16 %v1821, %v1817
        %v2152 = vpack.c.bf16 %v2012, %v2008
        %v2153 = vpack.c.bf16 %v2014, %v2010
        %v2154 = vpack.c.bf16 %v1443, %v1439
        %v2155 = vpack.c.bf16 %v1445, %v1441
        %v2156 = vpack.c.bf16 %v1636, %v1632
        %v2157 = vpack.c.bf16 %v1638, %v1634
        %v2158 = vpack.c.bf16 %v1829, %v1825
        %v2159 = vpack.c.bf16 %v1831, %v1827
        %v2160 = vpack.c.bf16 %v2022, %v2018
        %v2161 = vpack.c.bf16 %v2024, %v2020
        %v2162 = vpack.c.bf16 %v1453, %v1449
        %v2163 = vpack.c.bf16 %v1455, %v1451
        %v2164 = vpack.c.bf16 %v1646, %v1642
        %v2165 = vpack.c.bf16 %v1648, %v1644
        %v2166 = vpack.c.bf16 %v1839, %v1835
        %v2167 = vpack.c.bf16 %v1841, %v1837
        %v2168 = vpack.c.bf16 %v2032, %v2028
        %v2169 = vpack.c.bf16 %v2034, %v2030
        %v2170 = vpack.c.bf16 %v1463, %v1459
        %v2171 = vpack.c.bf16 %v1465, %v1461
        %v2172 = vpack.c.bf16 %v1656, %v1652
        %v2173 = vpack.c.bf16 %v1658, %v1654
        %v2174 = vpack.c.bf16 %v1849, %v1845
        %v2175 = vpack.c.bf16 %v1851, %v1847
        %v2176 = vpack.c.bf16 %v2042, %v2038
        %v2177 = vpack.c.bf16 %v2044, %v2040
        %v2178 = vpack.c.bf16 %v1473, %v1469
        %v2179 = vpack.c.bf16 %v1475, %v1471
        %v2180 = vpack.c.bf16 %v1666, %v1662
        %v2181 = vpack.c.bf16 %v1668, %v1664
        %v2182 = vpack.c.bf16 %v1859, %v1855
        %v2183 = vpack.c.bf16 %v1861, %v1857
        %v2184 = vpack.c.bf16 %v2052, %v2048
        %v2185 = vpack.c.bf16 %v2054, %v2050
        %v2186 = vpack.c.bf16 %v1483, %v1479
        %v2187 = vpack.c.bf16 %v1485, %v1481
        %v2188 = vpack.c.bf16 %v1676, %v1672
        %v2189 = vpack.c.bf16 %v1678, %v1674
        %v2190 = vpack.c.bf16 %v1869, %v1865
        %v2191 = vpack.c.bf16 %v1871, %v1867
        %v2192 = vpack.c.bf16 %v2062, %v2058
        %v2193 = vpack.c.bf16 %v2064, %v2060
        %v2194 = vmul.bf16 %v2066, 1056980736
        %v2195 = vmul.bf16 %v2067, 1056980736
        %v2196 = vmul.bf16 %v2068, 1056980736
        %v2197 = vmul.bf16 %v2069, 1056980736
        %v2198 = vmul.bf16 %v2070, 1056980736
        %v2199 = vmul.bf16 %v2071, 1056980736
        %v2200 = vmul.bf16 %v2072, 1056980736
        %v2201 = vmul.bf16 %v2073, 1056980736
        %v2202 = vmul.bf16 %v2074, 1056980736
        %v2203 = vmul.bf16 %v2075, 1056980736
        %v2204 = vmul.bf16 %v2076, 1056980736
        %v2205 = vmul.bf16 %v2077, 1056980736
        %v2206 = vmul.bf16 %v2078, 1056980736
        %v2207 = vmul.bf16 %v2079, 1056980736
        %v2208 = vmul.bf16 %v2080, 1056980736
        %v2209 = vmul.bf16 %v2081, 1056980736
        %v2210 = vmul.bf16 %v2082, 1056980736
        %v2211 = vmul.bf16 %v2083, 1056980736
        %v2212 = vmul.bf16 %v2084, 1056980736
        %v2213 = vmul.bf16 %v2085, 1056980736
        %v2214 = vmul.bf16 %v2086, 1056980736
        %v2215 = vmul.bf16 %v2087, 1056980736
        %v2216 = vmul.bf16 %v2088, 1056980736
        %v2217 = vmul.bf16 %v2089, 1056980736
        %v2218 = vmul.bf16 %v2090, 1056980736
        %v2219 = vmul.bf16 %v2091, 1056980736
        %v2220 = vmul.bf16 %v2092, 1056980736
        %v2221 = vmul.bf16 %v2093, 1056980736
        %v2222 = vmul.bf16 %v2094, 1056980736
        %v2223 = vmul.bf16 %v2095, 1056980736
        %v2224 = vmul.bf16 %v2096, 1056980736
        %v2225 = vmul.bf16 %v2097, 1056980736
        %v2226 = vmul.bf16 %v2098, 1056980736
        %v2227 = vmul.bf16 %v2099, 1056980736
        %v2228 = vmul.bf16 %v2100, 1056980736
        %v2229 = vmul.bf16 %v2101, 1056980736
        %v2230 = vmul.bf16 %v2102, 1056980736
        %v2231 = vmul.bf16 %v2103, 1056980736
        %v2232 = vmul.bf16 %v2104, 1056980736
        %v2233 = vmul.bf16 %v2105, 1056980736
        %v2234 = vmul.bf16 %v2106, 1056980736
        %v2235 = vmul.bf16 %v2107, 1056980736
        %v2236 = vmul.bf16 %v2108, 1056980736
        %v2237 = vmul.bf16 %v2109, 1056980736
        %v2238 = vmul.bf16 %v2110, 1056980736
        %v2239 = vmul.bf16 %v2111, 1056980736
        %v2240 = vmul.bf16 %v2112, 1056980736
        %v2241 = vmul.bf16 %v2113, 1056980736
        %v2242 = vmul.bf16 %v2114, 1056980736
        %v2243 = vmul.bf16 %v2115, 1056980736
        %v2244 = vmul.bf16 %v2116, 1056980736
        %v2245 = vmul.bf16 %v2117, 1056980736
        %v2246 = vmul.bf16 %v2118, 1056980736
        %v2247 = vmul.bf16 %v2119, 1056980736
        %v2248 = vmul.bf16 %v2120, 1056980736
        %v2249 = vmul.bf16 %v2121, 1056980736
        %v2250 = vmul.bf16 %v2122, 1056980736
        %v2251 = vmul.bf16 %v2123, 1056980736
        %v2252 = vmul.bf16 %v2124, 1056980736
        %v2253 = vmul.bf16 %v2125, 1056980736
        %v2254 = vmul.bf16 %v2126, 1056980736
        %v2255 = vmul.bf16 %v2127, 1056980736
        %v2256 = vmul.bf16 %v2128, 1056980736
        %v2257 = vmul.bf16 %v2129, 1056980736
        %v2258 = vmul.bf16 %v2130, 1056980736
        %v2259 = vmul.bf16 %v2131, 1056980736
        %v2260 = vmul.bf16 %v2132, 1056980736
        %v2261 = vmul.bf16 %v2133, 1056980736
        %v2262 = vmul.bf16 %v2134, 1056980736
        %v2263 = vmul.bf16 %v2135, 1056980736
        %v2264 = vmul.bf16 %v2136, 1056980736
        %v2265 = vmul.bf16 %v2137, 1056980736
        %v2266 = vmul.bf16 %v2138, 1056980736
        %v2267 = vmul.bf16 %v2139, 1056980736
        %v2268 = vmul.bf16 %v2140, 1056980736
        %v2269 = vmul.bf16 %v2141, 1056980736
        %v2270 = vmul.bf16 %v2142, 1056980736
        %v2271 = vmul.bf16 %v2143, 1056980736
        %v2272 = vmul.bf16 %v2144, 1056980736
        %v2273 = vmul.bf16 %v2145, 1056980736
        %v2274 = vmul.bf16 %v2146, 1056980736
        %v2275 = vmul.bf16 %v2147, 1056980736
        %v2276 = vmul.bf16 %v2148, 1056980736
        %v2277 = vmul.bf16 %v2149, 1056980736
        %v2278 = vmul.bf16 %v2150, 1056980736
        %v2279 = vmul.bf16 %v2151, 1056980736
        %v2280 = vmul.bf16 %v2152, 1056980736
        %v2281 = vmul.bf16 %v2153, 1056980736
        %v2282 = vmul.bf16 %v2154, 1056980736
        %v2283 = vmul.bf16 %v2155, 1056980736
        %v2284 = vmul.bf16 %v2156, 1056980736
        %v2285 = vmul.bf16 %v2157, 1056980736
        %v2286 = vmul.bf16 %v2158, 1056980736
        %v2287 = vmul.bf16 %v2159, 1056980736
        %v2288 = vmul.bf16 %v2160, 1056980736
        %v2289 = vmul.bf16 %v2161, 1056980736
        %v2290 = vmul.bf16 %v2162, 1056980736
        %v2291 = vmul.bf16 %v2163, 1056980736
        %v2292 = vmul.bf16 %v2164, 1056980736
        %v2293 = vmul.bf16 %v2165, 1056980736
        %v2294 = vmul.bf16 %v2166, 1056980736
        %v2295 = vmul.bf16 %v2167, 1056980736
        %v2296 = vmul.bf16 %v2168, 1056980736
        %v2297 = vmul.bf16 %v2169, 1056980736
        %v2298 = vmul.bf16 %v2170, 1056980736
        %v2299 = vmul.bf16 %v2171, 1056980736
        %v2300 = vmul.bf16 %v2172, 1056980736
        %v2301 = vmul.bf16 %v2173, 1056980736
        %v2302 = vmul.bf16 %v2174, 1056980736
        %v2303 = vmul.bf16 %v2175, 1056980736
        %v2304 = vmul.bf16 %v2176, 1056980736
        %v2305 = vmul.bf16 %v2177, 1056980736
        %v2306 = vmul.bf16 %v2178, 1056980736
        %v2307 = vmul.bf16 %v2179, 1056980736
        %v2308 = vmul.bf16 %v2180, 1056980736
        %v2309 = vmul.bf16 %v2181, 1056980736
        %v2310 = vmul.bf16 %v2182, 1056980736
        %v2311 = vmul.bf16 %v2183, 1056980736
        %v2312 = vmul.bf16 %v2184, 1056980736
        %v2313 = vmul.bf16 %v2185, 1056980736
        %v2314 = vmul.bf16 %v2186, 1056980736
        %v2315 = vmul.bf16 %v2187, 1056980736
        %v2316 = vmul.bf16 %v2188, 1056980736
        %v2317 = vmul.bf16 %v2189, 1056980736
        %v2318 = vmul.bf16 %v2190, 1056980736
        %v2319 = vmul.bf16 %v2191, 1056980736
        %v2320 = vmul.bf16 %v2192, 1056980736
        %v2321 = vmul.bf16 %v2193, 1056980736
        %v2322 = vmul.bf16 %v2066, %v2066
        %v2323 = vmul.bf16 %v2067, %v2067
        %v2324 = vmul.bf16 %v2068, %v2068
        %v2325 = vmul.bf16 %v2069, %v2069
        %v2326 = vmul.bf16 %v2070, %v2070
        %v2327 = vmul.bf16 %v2071, %v2071
        %v2328 = vmul.bf16 %v2072, %v2072
        %v2329 = vmul.bf16 %v2073, %v2073
        %v2330 = vmul.bf16 %v2074, %v2074
        %v2331 = vmul.bf16 %v2075, %v2075
        %v2332 = vmul.bf16 %v2076, %v2076
        %v2333 = vmul.bf16 %v2077, %v2077
        %v2334 = vmul.bf16 %v2078, %v2078
        %v2335 = vmul.bf16 %v2079, %v2079
        %v2336 = vmul.bf16 %v2080, %v2080
        %v2337 = vmul.bf16 %v2081, %v2081
        %v2338 = vmul.bf16 %v2082, %v2082
        %v2339 = vmul.bf16 %v2083, %v2083
        %v2340 = vmul.bf16 %v2084, %v2084
        %v2341 = vmul.bf16 %v2085, %v2085
        %v2342 = vmul.bf16 %v2086, %v2086
        %v2343 = vmul.bf16 %v2087, %v2087
        %v2344 = vmul.bf16 %v2088, %v2088
        %v2345 = vmul.bf16 %v2089, %v2089
        %v2346 = vmul.bf16 %v2090, %v2090
        %v2347 = vmul.bf16 %v2091, %v2091
        %v2348 = vmul.bf16 %v2092, %v2092
        %v2349 = vmul.bf16 %v2093, %v2093
        %v2350 = vmul.bf16 %v2094, %v2094
        %v2351 = vmul.bf16 %v2095, %v2095
        %v2352 = vmul.bf16 %v2096, %v2096
        %v2353 = vmul.bf16 %v2097, %v2097
        %v2354 = vmul.bf16 %v2098, %v2098
        %v2355 = vmul.bf16 %v2099, %v2099
        %v2356 = vmul.bf16 %v2100, %v2100
        %v2357 = vmul.bf16 %v2101, %v2101
        %v2358 = vmul.bf16 %v2102, %v2102
        %v2359 = vmul.bf16 %v2103, %v2103
        %v2360 = vmul.bf16 %v2104, %v2104
        %v2361 = vmul.bf16 %v2105, %v2105
        %v2362 = vmul.bf16 %v2106, %v2106
        %v2363 = vmul.bf16 %v2107, %v2107
        %v2364 = vmul.bf16 %v2108, %v2108
        %v2365 = vmul.bf16 %v2109, %v2109
        %v2366 = vmul.bf16 %v2110, %v2110
        %v2367 = vmul.bf16 %v2111, %v2111
        %v2368 = vmul.bf16 %v2112, %v2112
        %v2369 = vmul.bf16 %v2113, %v2113
        %v2370 = vmul.bf16 %v2114, %v2114
        %v2371 = vmul.bf16 %v2115, %v2115
        %v2372 = vmul.bf16 %v2116, %v2116
        %v2373 = vmul.bf16 %v2117, %v2117
        %v2374 = vmul.bf16 %v2118, %v2118
        %v2375 = vmul.bf16 %v2119, %v2119
        %v2376 = vmul.bf16 %v2120, %v2120
        %v2377 = vmul.bf16 %v2121, %v2121
        %v2378 = vmul.bf16 %v2122, %v2122
        %v2379 = vmul.bf16 %v2123, %v2123
        %v2380 = vmul.bf16 %v2124, %v2124
        %v2381 = vmul.bf16 %v2125, %v2125
        %v2382 = vmul.bf16 %v2126, %v2126
        %v2383 = vmul.bf16 %v2127, %v2127
        %v2384 = vmul.bf16 %v2128, %v2128
        %v2385 = vmul.bf16 %v2129, %v2129
        %v2386 = vmul.bf16 %v2130, %v2130
        %v2387 = vmul.bf16 %v2131, %v2131
        %v2388 = vmul.bf16 %v2132, %v2132
        %v2389 = vmul.bf16 %v2133, %v2133
        %v2390 = vmul.bf16 %v2134, %v2134
        %v2391 = vmul.bf16 %v2135, %v2135
        %v2392 = vmul.bf16 %v2136, %v2136
        %v2393 = vmul.bf16 %v2137, %v2137
        %v2394 = vmul.bf16 %v2138, %v2138
        %v2395 = vmul.bf16 %v2139, %v2139
        %v2396 = vmul.bf16 %v2140, %v2140
        %v2397 = vmul.bf16 %v2141, %v2141
        %v2398 = vmul.bf16 %v2142, %v2142
        %v2399 = vmul.bf16 %v2143, %v2143
        %v2400 = vmul.bf16 %v2144, %v2144
        %v2401 = vmul.bf16 %v2145, %v2145
        %v2402 = vmul.bf16 %v2146, %v2146
        %v2403 = vmul.bf16 %v2147, %v2147
        %v2404 = vmul.bf16 %v2148, %v2148
        %v2405 = vmul.bf16 %v2149, %v2149
        %v2406 = vmul.bf16 %v2150, %v2150
        %v2407 = vmul.bf16 %v2151, %v2151
        %v2408 = vmul.bf16 %v2152, %v2152
        %v2409 = vmul.bf16 %v2153, %v2153
        %v2410 = vmul.bf16 %v2154, %v2154
        %v2411 = vmul.bf16 %v2155, %v2155
        %v2412 = vmul.bf16 %v2156, %v2156
        %v2413 = vmul.bf16 %v2157, %v2157
        %v2414 = vmul.bf16 %v2158, %v2158
        %v2415 = vmul.bf16 %v2159, %v2159
        %v2416 = vmul.bf16 %v2160, %v2160
        %v2417 = vmul.bf16 %v2161, %v2161
        %v2418 = vmul.bf16 %v2162, %v2162
        %v2419 = vmul.bf16 %v2163, %v2163
        %v2420 = vmul.bf16 %v2164, %v2164
        %v2421 = vmul.bf16 %v2165, %v2165
        %v2422 = vmul.bf16 %v2166, %v2166
        %v2423 = vmul.bf16 %v2167, %v2167
        %v2424 = vmul.bf16 %v2168, %v2168
        %v2425 = vmul.bf16 %v2169, %v2169
        %v2426 = vmul.bf16 %v2170, %v2170
        %v2427 = vmul.bf16 %v2171, %v2171
        %v2428 = vmul.bf16 %v2172, %v2172
        %v2429 = vmul.bf16 %v2173, %v2173
        %v2430 = vmul.bf16 %v2174, %v2174
        %v2431 = vmul.bf16 %v2175, %v2175
        %v2432 = vmul.bf16 %v2176, %v2176
        %v2433 = vmul.bf16 %v2177, %v2177
        %v2434 = vmul.bf16 %v2178, %v2178
        %v2435 = vmul.bf16 %v2179, %v2179
        %v2436 = vmul.bf16 %v2180, %v2180
        %v2437 = vmul.bf16 %v2181, %v2181
        %v2438 = vmul.bf16 %v2182, %v2182
        %v2439 = vmul.bf16 %v2183, %v2183
        %v2440 = vmul.bf16 %v2184, %v2184
        %v2441 = vmul.bf16 %v2185, %v2185
        %v2442 = vmul.bf16 %v2186, %v2186
        %v2443 = vmul.bf16 %v2187, %v2187
        %v2444 = vmul.bf16 %v2188, %v2188
        %v2445 = vmul.bf16 %v2189, %v2189
        %v2446 = vmul.bf16 %v2190, %v2190
        %v2447 = vmul.bf16 %v2191, %v2191
        %v2448 = vmul.bf16 %v2192, %v2192
        %v2449 = vmul.bf16 %v2193, %v2193
        %v2450 = vmul.bf16 %v2322, %v2066
        %v2451 = vmul.bf16 %v2323, %v2067
        %v2452 = vmul.bf16 %v2324, %v2068
        %v2453 = vmul.bf16 %v2325, %v2069
        %v2454 = vmul.bf16 %v2326, %v2070
        %v2455 = vmul.bf16 %v2327, %v2071
        %v2456 = vmul.bf16 %v2328, %v2072
        %v2457 = vmul.bf16 %v2329, %v2073
        %v2458 = vmul.bf16 %v2330, %v2074
        %v2459 = vmul.bf16 %v2331, %v2075
        %v2460 = vmul.bf16 %v2332, %v2076
        %v2461 = vmul.bf16 %v2333, %v2077
        %v2462 = vmul.bf16 %v2334, %v2078
        %v2463 = vmul.bf16 %v2335, %v2079
        %v2464 = vmul.bf16 %v2336, %v2080
        %v2465 = vmul.bf16 %v2337, %v2081
        %v2466 = vmul.bf16 %v2338, %v2082
        %v2467 = vmul.bf16 %v2339, %v2083
        %v2468 = vmul.bf16 %v2340, %v2084
        %v2469 = vmul.bf16 %v2341, %v2085
        %v2470 = vmul.bf16 %v2342, %v2086
        %v2471 = vmul.bf16 %v2343, %v2087
        %v2472 = vmul.bf16 %v2344, %v2088
        %v2473 = vmul.bf16 %v2345, %v2089
        %v2474 = vmul.bf16 %v2346, %v2090
        %v2475 = vmul.bf16 %v2347, %v2091
        %v2476 = vmul.bf16 %v2348, %v2092
        %v2477 = vmul.bf16 %v2349, %v2093
        %v2478 = vmul.bf16 %v2350, %v2094
        %v2479 = vmul.bf16 %v2351, %v2095
        %v2480 = vmul.bf16 %v2352, %v2096
        %v2481 = vmul.bf16 %v2353, %v2097
        %v2482 = vmul.bf16 %v2354, %v2098
        %v2483 = vmul.bf16 %v2355, %v2099
        %v2484 = vmul.bf16 %v2356, %v2100
        %v2485 = vmul.bf16 %v2357, %v2101
        %v2486 = vmul.bf16 %v2358, %v2102
        %v2487 = vmul.bf16 %v2359, %v2103
        %v2488 = vmul.bf16 %v2360, %v2104
        %v2489 = vmul.bf16 %v2361, %v2105
        %v2490 = vmul.bf16 %v2362, %v2106
        %v2491 = vmul.bf16 %v2363, %v2107
        %v2492 = vmul.bf16 %v2364, %v2108
        %v2493 = vmul.bf16 %v2365, %v2109
        %v2494 = vmul.bf16 %v2366, %v2110
        %v2495 = vmul.bf16 %v2367, %v2111
        %v2496 = vmul.bf16 %v2368, %v2112
        %v2497 = vmul.bf16 %v2369, %v2113
        %v2498 = vmul.bf16 %v2370, %v2114
        %v2499 = vmul.bf16 %v2371, %v2115
        %v2500 = vmul.bf16 %v2372, %v2116
        %v2501 = vmul.bf16 %v2373, %v2117
        %v2502 = vmul.bf16 %v2374, %v2118
        %v2503 = vmul.bf16 %v2375, %v2119
        %v2504 = vmul.bf16 %v2376, %v2120
        %v2505 = vmul.bf16 %v2377, %v2121
        %v2506 = vmul.bf16 %v2378, %v2122
        %v2507 = vmul.bf16 %v2379, %v2123
        %v2508 = vmul.bf16 %v2380, %v2124
        %v2509 = vmul.bf16 %v2381, %v2125
        %v2510 = vmul.bf16 %v2382, %v2126
        %v2511 = vmul.bf16 %v2383, %v2127
        %v2512 = vmul.bf16 %v2384, %v2128
        %v2513 = vmul.bf16 %v2385, %v2129
        %v2514 = vmul.bf16 %v2386, %v2130
        %v2515 = vmul.bf16 %v2387, %v2131
        %v2516 = vmul.bf16 %v2388, %v2132
        %v2517 = vmul.bf16 %v2389, %v2133
        %v2518 = vmul.bf16 %v2390, %v2134
        %v2519 = vmul.bf16 %v2391, %v2135
        %v2520 = vmul.bf16 %v2392, %v2136
        %v2521 = vmul.bf16 %v2393, %v2137
        %v2522 = vmul.bf16 %v2394, %v2138
        %v2523 = vmul.bf16 %v2395, %v2139
        %v2524 = vmul.bf16 %v2396, %v2140
        %v2525 = vmul.bf16 %v2397, %v2141
        %v2526 = vmul.bf16 %v2398, %v2142
        %v2527 = vmul.bf16 %v2399, %v2143
        %v2528 = vmul.bf16 %v2400, %v2144
        %v2529 = vmul.bf16 %v2401, %v2145
        %v2530 = vmul.bf16 %v2402, %v2146
        %v2531 = vmul.bf16 %v2403, %v2147
        %v2532 = vmul.bf16 %v2404, %v2148
        %v2533 = vmul.bf16 %v2405, %v2149
        %v2534 = vmul.bf16 %v2406, %v2150
        %v2535 = vmul.bf16 %v2407, %v2151
        %v2536 = vmul.bf16 %v2408, %v2152
        %v2537 = vmul.bf16 %v2409, %v2153
        %v2538 = vmul.bf16 %v2410, %v2154
        %v2539 = vmul.bf16 %v2411, %v2155
        %v2540 = vmul.bf16 %v2412, %v2156
        %v2541 = vmul.bf16 %v2413, %v2157
        %v2542 = vmul.bf16 %v2414, %v2158
        %v2543 = vmul.bf16 %v2415, %v2159
        %v2544 = vmul.bf16 %v2416, %v2160
        %v2545 = vmul.bf16 %v2417, %v2161
        %v2546 = vmul.bf16 %v2418, %v2162
        %v2547 = vmul.bf16 %v2419, %v2163
        %v2548 = vmul.bf16 %v2420, %v2164
        %v2549 = vmul.bf16 %v2421, %v2165
        %v2550 = vmul.bf16 %v2422, %v2166
        %v2551 = vmul.bf16 %v2423, %v2167
        %v2552 = vmul.bf16 %v2424, %v2168
        %v2553 = vmul.bf16 %v2425, %v2169
        %v2554 = vmul.bf16 %v2426, %v2170
        %v2555 = vmul.bf16 %v2427, %v2171
        %v2556 = vmul.bf16 %v2428, %v2172
        %v2557 = vmul.bf16 %v2429, %v2173
        %v2558 = vmul.bf16 %v2430, %v2174
        %v2559 = vmul.bf16 %v2431, %v2175
        %v2560 = vmul.bf16 %v2432, %v2176
        %v2561 = vmul.bf16 %v2433, %v2177
        %v2562 = vmul.bf16 %v2434, %v2178
        %v2563 = vmul.bf16 %v2435, %v2179
        %v2564 = vmul.bf16 %v2436, %v2180
        %v2565 = vmul.bf16 %v2437, %v2181
        %v2566 = vmul.bf16 %v2438, %v2182
        %v2567 = vmul.bf16 %v2439, %v2183
        %v2568 = vmul.bf16 %v2440, %v2184
        %v2569 = vmul.bf16 %v2441, %v2185
        %v2570 = vmul.bf16 %v2442, %v2186
        %v2571 = vmul.bf16 %v2443, %v2187
        %v2572 = vmul.bf16 %v2444, %v2188
        %v2573 = vmul.bf16 %v2445, %v2189
        %v2574 = vmul.bf16 %v2446, %v2190
        %v2575 = vmul.bf16 %v2447, %v2191
        %v2576 = vmul.bf16 %v2448, %v2192
        %v2577 = vmul.bf16 %v2449, %v2193
        %v2578 = vmul.bf16 %v2450, 1027030327
        %v2579 = vmul.bf16 %v2451, 1027030327
        %v2580 = vmul.bf16 %v2452, 1027030327
        %v2581 = vmul.bf16 %v2453, 1027030327
        %v2582 = vmul.bf16 %v2454, 1027030327
        %v2583 = vmul.bf16 %v2455, 1027030327
        %v2584 = vmul.bf16 %v2456, 1027030327
        %v2585 = vmul.bf16 %v2457, 1027030327
        %v2586 = vmul.bf16 %v2458, 1027030327
        %v2587 = vmul.bf16 %v2459, 1027030327
        %v2588 = vmul.bf16 %v2460, 1027030327
        %v2589 = vmul.bf16 %v2461, 1027030327
        %v2590 = vmul.bf16 %v2462, 1027030327
        %v2591 = vmul.bf16 %v2463, 1027030327
        %v2592 = vmul.bf16 %v2464, 1027030327
        %v2593 = vmul.bf16 %v2465, 1027030327
        %v2594 = vmul.bf16 %v2466, 1027030327
        %v2595 = vmul.bf16 %v2467, 1027030327
        %v2596 = vmul.bf16 %v2468, 1027030327
        %v2597 = vmul.bf16 %v2469, 1027030327
        %v2598 = vmul.bf16 %v2470, 1027030327
        %v2599 = vmul.bf16 %v2471, 1027030327
        %v2600 = vmul.bf16 %v2472, 1027030327
        %v2601 = vmul.bf16 %v2473, 1027030327
        %v2602 = vmul.bf16 %v2474, 1027030327
        %v2603 = vmul.bf16 %v2475, 1027030327
        %v2604 = vmul.bf16 %v2476, 1027030327
        %v2605 = vmul.bf16 %v2477, 1027030327
        %v2606 = vmul.bf16 %v2478, 1027030327
        %v2607 = vmul.bf16 %v2479, 1027030327
        %v2608 = vmul.bf16 %v2480, 1027030327
        %v2609 = vmul.bf16 %v2481, 1027030327
        %v2610 = vmul.bf16 %v2482, 1027030327
        %v2611 = vmul.bf16 %v2483, 1027030327
        %v2612 = vmul.bf16 %v2484, 1027030327
        %v2613 = vmul.bf16 %v2485, 1027030327
        %v2614 = vmul.bf16 %v2486, 1027030327
        %v2615 = vmul.bf16 %v2487, 1027030327
        %v2616 = vmul.bf16 %v2488, 1027030327
        %v2617 = vmul.bf16 %v2489, 1027030327
        %v2618 = vmul.bf16 %v2490, 1027030327
        %v2619 = vmul.bf16 %v2491, 1027030327
        %v2620 = vmul.bf16 %v2492, 1027030327
        %v2621 = vmul.bf16 %v2493, 1027030327
        %v2622 = vmul.bf16 %v2494, 1027030327
        %v2623 = vmul.bf16 %v2495, 1027030327
        %v2624 = vmul.bf16 %v2496, 1027030327
        %v2625 = vmul.bf16 %v2497, 1027030327
        %v2626 = vmul.bf16 %v2498, 1027030327
        %v2627 = vmul.bf16 %v2499, 1027030327
        %v2628 = vmul.bf16 %v2500, 1027030327
        %v2629 = vmul.bf16 %v2501, 1027030327
        %v2630 = vmul.bf16 %v2502, 1027030327
        %v2631 = vmul.bf16 %v2503, 1027030327
        %v2632 = vmul.bf16 %v2504, 1027030327
        %v2633 = vmul.bf16 %v2505, 1027030327
        %v2634 = vmul.bf16 %v2506, 1027030327
        %v2635 = vmul.bf16 %v2507, 1027030327
        %v2636 = vmul.bf16 %v2508, 1027030327
        %v2637 = vmul.bf16 %v2509, 1027030327
        %v2638 = vmul.bf16 %v2510, 1027030327
        %v2639 = vmul.bf16 %v2511, 1027030327
        %v2640 = vmul.bf16 %v2512, 1027030327
        %v2641 = vmul.bf16 %v2513, 1027030327
        %v2642 = vmul.bf16 %v2514, 1027030327
        %v2643 = vmul.bf16 %v2515, 1027030327
        %v2644 = vmul.bf16 %v2516, 1027030327
        %v2645 = vmul.bf16 %v2517, 1027030327
        %v2646 = vmul.bf16 %v2518, 1027030327
        %v2647 = vmul.bf16 %v2519, 1027030327
        %v2648 = vmul.bf16 %v2520, 1027030327
        %v2649 = vmul.bf16 %v2521, 1027030327
        %v2650 = vmul.bf16 %v2522, 1027030327
        %v2651 = vmul.bf16 %v2523, 1027030327
        %v2652 = vmul.bf16 %v2524, 1027030327
        %v2653 = vmul.bf16 %v2525, 1027030327
        %v2654 = vmul.bf16 %v2526, 1027030327
        %v2655 = vmul.bf16 %v2527, 1027030327
        %v2656 = vmul.bf16 %v2528, 1027030327
        %v2657 = vmul.bf16 %v2529, 1027030327
        %v2658 = vmul.bf16 %v2530, 1027030327
        %v2659 = vmul.bf16 %v2531, 1027030327
        %v2660 = vmul.bf16 %v2532, 1027030327
        %v2661 = vmul.bf16 %v2533, 1027030327
        %v2662 = vmul.bf16 %v2534, 1027030327
        %v2663 = vmul.bf16 %v2535, 1027030327
        %v2664 = vmul.bf16 %v2536, 1027030327
        %v2665 = vmul.bf16 %v2537, 1027030327
        %v2666 = vmul.bf16 %v2538, 1027030327
        %v2667 = vmul.bf16 %v2539, 1027030327
        %v2668 = vmul.bf16 %v2540, 1027030327
        %v2669 = vmul.bf16 %v2541, 1027030327
        %v2670 = vmul.bf16 %v2542, 1027030327
        %v2671 = vmul.bf16 %v2543, 1027030327
        %v2672 = vmul.bf16 %v2544, 1027030327
        %v2673 = vmul.bf16 %v2545, 1027030327
        %v2674 = vmul.bf16 %v2546, 1027030327
        %v2675 = vmul.bf16 %v2547, 1027030327
        %v2676 = vmul.bf16 %v2548, 1027030327
        %v2677 = vmul.bf16 %v2549, 1027030327
        %v2678 = vmul.bf16 %v2550, 1027030327
        %v2679 = vmul.bf16 %v2551, 1027030327
        %v2680 = vmul.bf16 %v2552, 1027030327
        %v2681 = vmul.bf16 %v2553, 1027030327
        %v2682 = vmul.bf16 %v2554, 1027030327
        %v2683 = vmul.bf16 %v2555, 1027030327
        %v2684 = vmul.bf16 %v2556, 1027030327
        %v2685 = vmul.bf16 %v2557, 1027030327
        %v2686 = vmul.bf16 %v2558, 1027030327
        %v2687 = vmul.bf16 %v2559, 1027030327
        %v2688 = vmul.bf16 %v2560, 1027030327
        %v2689 = vmul.bf16 %v2561, 1027030327
        %v2690 = vmul.bf16 %v2562, 1027030327
        %v2691 = vmul.bf16 %v2563, 1027030327
        %v2692 = vmul.bf16 %v2564, 1027030327
        %v2693 = vmul.bf16 %v2565, 1027030327
        %v2694 = vmul.bf16 %v2566, 1027030327
        %v2695 = vmul.bf16 %v2567, 1027030327
        %v2696 = vmul.bf16 %v2568, 1027030327
        %v2697 = vmul.bf16 %v2569, 1027030327
        %v2698 = vmul.bf16 %v2570, 1027030327
        %v2699 = vmul.bf16 %v2571, 1027030327
        %v2700 = vmul.bf16 %v2572, 1027030327
        %v2701 = vmul.bf16 %v2573, 1027030327
        %v2702 = vmul.bf16 %v2574, 1027030327
        %v2703 = vmul.bf16 %v2575, 1027030327
        %v2704 = vmul.bf16 %v2576, 1027030327
        %v2705 = vmul.bf16 %v2577, 1027030327
        %v2706 = vadd.bf16 %v2066, %v2578
        %v2707 = vadd.bf16 %v2067, %v2579
        %v2708 = vadd.bf16 %v2068, %v2580
        %v2709 = vadd.bf16 %v2069, %v2581
        %v2710 = vadd.bf16 %v2070, %v2582
        %v2711 = vadd.bf16 %v2071, %v2583
        %v2712 = vadd.bf16 %v2072, %v2584
        %v2713 = vadd.bf16 %v2073, %v2585
        %v2714 = vadd.bf16 %v2074, %v2586
        %v2715 = vadd.bf16 %v2075, %v2587
        %v2716 = vadd.bf16 %v2076, %v2588
        %v2717 = vadd.bf16 %v2077, %v2589
        %v2718 = vadd.bf16 %v2078, %v2590
        %v2719 = vadd.bf16 %v2079, %v2591
        %v2720 = vadd.bf16 %v2080, %v2592
        %v2721 = vadd.bf16 %v2081, %v2593
        %v2722 = vadd.bf16 %v2082, %v2594
        %v2723 = vadd.bf16 %v2083, %v2595
        %v2724 = vadd.bf16 %v2084, %v2596
        %v2725 = vadd.bf16 %v2085, %v2597
        %v2726 = vadd.bf16 %v2086, %v2598
        %v2727 = vadd.bf16 %v2087, %v2599
        %v2728 = vadd.bf16 %v2088, %v2600
        %v2729 = vadd.bf16 %v2089, %v2601
        %v2730 = vadd.bf16 %v2090, %v2602
        %v2731 = vadd.bf16 %v2091, %v2603
        %v2732 = vadd.bf16 %v2092, %v2604
        %v2733 = vadd.bf16 %v2093, %v2605
        %v2734 = vadd.bf16 %v2094, %v2606
        %v2735 = vadd.bf16 %v2095, %v2607
        %v2736 = vadd.bf16 %v2096, %v2608
        %v2737 = vadd.bf16 %v2097, %v2609
        %v2738 = vadd.bf16 %v2098, %v2610
        %v2739 = vadd.bf16 %v2099, %v2611
        %v2740 = vadd.bf16 %v2100, %v2612
        %v2741 = vadd.bf16 %v2101, %v2613
        %v2742 = vadd.bf16 %v2102, %v2614
        %v2743 = vadd.bf16 %v2103, %v2615
        %v2744 = vadd.bf16 %v2104, %v2616
        %v2745 = vadd.bf16 %v2105, %v2617
        %v2746 = vadd.bf16 %v2106, %v2618
        %v2747 = vadd.bf16 %v2107, %v2619
        %v2748 = vadd.bf16 %v2108, %v2620
        %v2749 = vadd.bf16 %v2109, %v2621
        %v2750 = vadd.bf16 %v2110, %v2622
        %v2751 = vadd.bf16 %v2111, %v2623
        %v2752 = vadd.bf16 %v2112, %v2624
        %v2753 = vadd.bf16 %v2113, %v2625
        %v2754 = vadd.bf16 %v2114, %v2626
        %v2755 = vadd.bf16 %v2115, %v2627
        %v2756 = vadd.bf16 %v2116, %v2628
        %v2757 = vadd.bf16 %v2117, %v2629
        %v2758 = vadd.bf16 %v2118, %v2630
        %v2759 = vadd.bf16 %v2119, %v2631
        %v2760 = vadd.bf16 %v2120, %v2632
        %v2761 = vadd.bf16 %v2121, %v2633
        %v2762 = vadd.bf16 %v2122, %v2634
        %v2763 = vadd.bf16 %v2123, %v2635
        %v2764 = vadd.bf16 %v2124, %v2636
        %v2765 = vadd.bf16 %v2125, %v2637
        %v2766 = vadd.bf16 %v2126, %v2638
        %v2767 = vadd.bf16 %v2127, %v2639
        %v2768 = vadd.bf16 %v2128, %v2640
        %v2769 = vadd.bf16 %v2129, %v2641
        %v2770 = vadd.bf16 %v2130, %v2642
        %v2771 = vadd.bf16 %v2131, %v2643
        %v2772 = vadd.bf16 %v2132, %v2644
        %v2773 = vadd.bf16 %v2133, %v2645
        %v2774 = vadd.bf16 %v2134, %v2646
        %v2775 = vadd.bf16 %v2135, %v2647
        %v2776 = vadd.bf16 %v2136, %v2648
        %v2777 = vadd.bf16 %v2137, %v2649
        %v2778 = vadd.bf16 %v2138, %v2650
        %v2779 = vadd.bf16 %v2139, %v2651
        %v2780 = vadd.bf16 %v2140, %v2652
        %v2781 = vadd.bf16 %v2141, %v2653
        %v2782 = vadd.bf16 %v2142, %v2654
        %v2783 = vadd.bf16 %v2143, %v2655
        %v2784 = vadd.bf16 %v2144, %v2656
        %v2785 = vadd.bf16 %v2145, %v2657
        %v2786 = vadd.bf16 %v2146, %v2658
        %v2787 = vadd.bf16 %v2147, %v2659
        %v2788 = vadd.bf16 %v2148, %v2660
        %v2789 = vadd.bf16 %v2149, %v2661
        %v2790 = vadd.bf16 %v2150, %v2662
        %v2791 = vadd.bf16 %v2151, %v2663
        %v2792 = vadd.bf16 %v2152, %v2664
        %v2793 = vadd.bf16 %v2153, %v2665
        %v2794 = vadd.bf16 %v2154, %v2666
        %v2795 = vadd.bf16 %v2155, %v2667
        %v2796 = vadd.bf16 %v2156, %v2668
        %v2797 = vadd.bf16 %v2157, %v2669
        %v2798 = vadd.bf16 %v2158, %v2670
        %v2799 = vadd.bf16 %v2159, %v2671
        %v2800 = vadd.bf16 %v2160, %v2672
        %v2801 = vadd.bf16 %v2161, %v2673
        %v2802 = vadd.bf16 %v2162, %v2674
        %v2803 = vadd.bf16 %v2163, %v2675
        %v2804 = vadd.bf16 %v2164, %v2676
        %v2805 = vadd.bf16 %v2165, %v2677
        %v2806 = vadd.bf16 %v2166, %v2678
        %v2807 = vadd.bf16 %v2167, %v2679
        %v2808 = vadd.bf16 %v2168, %v2680
        %v2809 = vadd.bf16 %v2169, %v2681
        %v2810 = vadd.bf16 %v2170, %v2682
        %v2811 = vadd.bf16 %v2171, %v2683
        %v2812 = vadd.bf16 %v2172, %v2684
        %v2813 = vadd.bf16 %v2173, %v2685
        %v2814 = vadd.bf16 %v2174, %v2686
        %v2815 = vadd.bf16 %v2175, %v2687
        %v2816 = vadd.bf16 %v2176, %v2688
        %v2817 = vadd.bf16 %v2177, %v2689
        %v2818 = vadd.bf16 %v2178, %v2690
        %v2819 = vadd.bf16 %v2179, %v2691
        %v2820 = vadd.bf16 %v2180, %v2692
        %v2821 = vadd.bf16 %v2181, %v2693
        %v2822 = vadd.bf16 %v2182, %v2694
        %v2823 = vadd.bf16 %v2183, %v2695
        %v2824 = vadd.bf16 %v2184, %v2696
        %v2825 = vadd.bf16 %v2185, %v2697
        %v2826 = vadd.bf16 %v2186, %v2698
        %v2827 = vadd.bf16 %v2187, %v2699
        %v2828 = vadd.bf16 %v2188, %v2700
        %v2829 = vadd.bf16 %v2189, %v2701
        %v2830 = vadd.bf16 %v2190, %v2702
        %v2831 = vadd.bf16 %v2191, %v2703
        %v2832 = vadd.bf16 %v2192, %v2704
        %v2833 = vadd.bf16 %v2193, %v2705
        %v2834 = vmul.bf16 %v2706, 1061961548
        %v2835 = vmul.bf16 %v2707, 1061961548
        %v2836 = vmul.bf16 %v2708, 1061961548
        %v2837 = vmul.bf16 %v2709, 1061961548
        %v2838 = vmul.bf16 %v2710, 1061961548
        %v2839 = vmul.bf16 %v2711, 1061961548
        %v2840 = vmul.bf16 %v2712, 1061961548
        %v2841 = vmul.bf16 %v2713, 1061961548
        %v2842 = vmul.bf16 %v2714, 1061961548
        %v2843 = vmul.bf16 %v2715, 1061961548
        %v2844 = vmul.bf16 %v2716, 1061961548
        %v2845 = vmul.bf16 %v2717, 1061961548
        %v2846 = vmul.bf16 %v2718, 1061961548
        %v2847 = vmul.bf16 %v2719, 1061961548
        %v2848 = vmul.bf16 %v2720, 1061961548
        %v2849 = vmul.bf16 %v2721, 1061961548
        %v2850 = vmul.bf16 %v2722, 1061961548
        %v2851 = vmul.bf16 %v2723, 1061961548
        %v2852 = vmul.bf16 %v2724, 1061961548
        %v2853 = vmul.bf16 %v2725, 1061961548
        %v2854 = vmul.bf16 %v2726, 1061961548
        %v2855 = vmul.bf16 %v2727, 1061961548
        %v2856 = vmul.bf16 %v2728, 1061961548
        %v2857 = vmul.bf16 %v2729, 1061961548
        %v2858 = vmul.bf16 %v2730, 1061961548
        %v2859 = vmul.bf16 %v2731, 1061961548
        %v2860 = vmul.bf16 %v2732, 1061961548
        %v2861 = vmul.bf16 %v2733, 1061961548
        %v2862 = vmul.bf16 %v2734, 1061961548
        %v2863 = vmul.bf16 %v2735, 1061961548
        %v2864 = vmul.bf16 %v2736, 1061961548
        %v2865 = vmul.bf16 %v2737, 1061961548
        %v2866 = vmul.bf16 %v2738, 1061961548
        %v2867 = vmul.bf16 %v2739, 1061961548
        %v2868 = vmul.bf16 %v2740, 1061961548
        %v2869 = vmul.bf16 %v2741, 1061961548
        %v2870 = vmul.bf16 %v2742, 1061961548
        %v2871 = vmul.bf16 %v2743, 1061961548
        %v2872 = vmul.bf16 %v2744, 1061961548
        %v2873 = vmul.bf16 %v2745, 1061961548
        %v2874 = vmul.bf16 %v2746, 1061961548
        %v2875 = vmul.bf16 %v2747, 1061961548
        %v2876 = vmul.bf16 %v2748, 1061961548
        %v2877 = vmul.bf16 %v2749, 1061961548
        %v2878 = vmul.bf16 %v2750, 1061961548
        %v2879 = vmul.bf16 %v2751, 1061961548
        %v2880 = vmul.bf16 %v2752, 1061961548
        %v2881 = vmul.bf16 %v2753, 1061961548
        %v2882 = vmul.bf16 %v2754, 1061961548
        %v2883 = vmul.bf16 %v2755, 1061961548
        %v2884 = vmul.bf16 %v2756, 1061961548
        %v2885 = vmul.bf16 %v2757, 1061961548
        %v2886 = vmul.bf16 %v2758, 1061961548
        %v2887 = vmul.bf16 %v2759, 1061961548
        %v2888 = vmul.bf16 %v2760, 1061961548
        %v2889 = vmul.bf16 %v2761, 1061961548
        %v2890 = vmul.bf16 %v2762, 1061961548
        %v2891 = vmul.bf16 %v2763, 1061961548
        %v2892 = vmul.bf16 %v2764, 1061961548
        %v2893 = vmul.bf16 %v2765, 1061961548
        %v2894 = vmul.bf16 %v2766, 1061961548
        %v2895 = vmul.bf16 %v2767, 1061961548
        %v2896 = vmul.bf16 %v2768, 1061961548
        %v2897 = vmul.bf16 %v2769, 1061961548
        %v2898 = vmul.bf16 %v2770, 1061961548
        %v2899 = vmul.bf16 %v2771, 1061961548
        %v2900 = vmul.bf16 %v2772, 1061961548
        %v2901 = vmul.bf16 %v2773, 1061961548
        %v2902 = vmul.bf16 %v2774, 1061961548
        %v2903 = vmul.bf16 %v2775, 1061961548
        %v2904 = vmul.bf16 %v2776, 1061961548
        %v2905 = vmul.bf16 %v2777, 1061961548
        %v2906 = vmul.bf16 %v2778, 1061961548
        %v2907 = vmul.bf16 %v2779, 1061961548
        %v2908 = vmul.bf16 %v2780, 1061961548
        %v2909 = vmul.bf16 %v2781, 1061961548
        %v2910 = vmul.bf16 %v2782, 1061961548
        %v2911 = vmul.bf16 %v2783, 1061961548
        %v2912 = vmul.bf16 %v2784, 1061961548
        %v2913 = vmul.bf16 %v2785, 1061961548
        %v2914 = vmul.bf16 %v2786, 1061961548
        %v2915 = vmul.bf16 %v2787, 1061961548
        %v2916 = vmul.bf16 %v2788, 1061961548
        %v2917 = vmul.bf16 %v2789, 1061961548
        %v2918 = vmul.bf16 %v2790, 1061961548
        %v2919 = vmul.bf16 %v2791, 1061961548
        %v2920 = vmul.bf16 %v2792, 1061961548
        %v2921 = vmul.bf16 %v2793, 1061961548
        %v2922 = vmul.bf16 %v2794, 1061961548
        %v2923 = vmul.bf16 %v2795, 1061961548
        %v2924 = vmul.bf16 %v2796, 1061961548
        %v2925 = vmul.bf16 %v2797, 1061961548
        %v2926 = vmul.bf16 %v2798, 1061961548
        %v2927 = vmul.bf16 %v2799, 1061961548
        %v2928 = vmul.bf16 %v2800, 1061961548
        %v2929 = vmul.bf16 %v2801, 1061961548
        %v2930 = vmul.bf16 %v2802, 1061961548
        %v2931 = vmul.bf16 %v2803, 1061961548
        %v2932 = vmul.bf16 %v2804, 1061961548
        %v2933 = vmul.bf16 %v2805, 1061961548
        %v2934 = vmul.bf16 %v2806, 1061961548
        %v2935 = vmul.bf16 %v2807, 1061961548
        %v2936 = vmul.bf16 %v2808, 1061961548
        %v2937 = vmul.bf16 %v2809, 1061961548
        %v2938 = vmul.bf16 %v2810, 1061961548
        %v2939 = vmul.bf16 %v2811, 1061961548
        %v2940 = vmul.bf16 %v2812, 1061961548
        %v2941 = vmul.bf16 %v2813, 1061961548
        %v2942 = vmul.bf16 %v2814, 1061961548
        %v2943 = vmul.bf16 %v2815, 1061961548
        %v2944 = vmul.bf16 %v2816, 1061961548
        %v2945 = vmul.bf16 %v2817, 1061961548
        %v2946 = vmul.bf16 %v2818, 1061961548
        %v2947 = vmul.bf16 %v2819, 1061961548
        %v2948 = vmul.bf16 %v2820, 1061961548
        %v2949 = vmul.bf16 %v2821, 1061961548
        %v2950 = vmul.bf16 %v2822, 1061961548
        %v2951 = vmul.bf16 %v2823, 1061961548
        %v2952 = vmul.bf16 %v2824, 1061961548
        %v2953 = vmul.bf16 %v2825, 1061961548
        %v2954 = vmul.bf16 %v2826, 1061961548
        %v2955 = vmul.bf16 %v2827, 1061961548
        %v2956 = vmul.bf16 %v2828, 1061961548
        %v2957 = vmul.bf16 %v2829, 1061961548
        %v2958 = vmul.bf16 %v2830, 1061961548
        %v2959 = vmul.bf16 %v2831, 1061961548
        %v2960 = vmul.bf16 %v2832, 1061961548
        %v2961 = vmul.bf16 %v2833, 1061961548
        %v2962 = vtanh.bf16.pop %v2834
        %v2963 = vtanh.bf16.pop %v2835
        %v2964 = vtanh.bf16.pop %v2836
        %v2965 = vtanh.bf16.pop %v2837
        %v2966 = vtanh.bf16.pop %v2838
        %v2967 = vtanh.bf16.pop %v2839
        %v2968 = vtanh.bf16.pop %v2840
        %v2969 = vtanh.bf16.pop %v2841
        %v2970 = vtanh.bf16.pop %v2842
        %v2971 = vtanh.bf16.pop %v2843
        %v2972 = vtanh.bf16.pop %v2844
        %v2973 = vtanh.bf16.pop %v2845
        %v2974 = vtanh.bf16.pop %v2846
        %v2975 = vtanh.bf16.pop %v2847
        %v2976 = vtanh.bf16.pop %v2848
        %v2977 = vtanh.bf16.pop %v2849
        %v2978 = vtanh.bf16.pop %v2850
        %v2979 = vtanh.bf16.pop %v2851
        %v2980 = vtanh.bf16.pop %v2852
        %v2981 = vtanh.bf16.pop %v2853
        %v2982 = vtanh.bf16.pop %v2854
        %v2983 = vtanh.bf16.pop %v2855
        %v2984 = vtanh.bf16.pop %v2856
        %v2985 = vtanh.bf16.pop %v2857
        %v2986 = vtanh.bf16.pop %v2858
        %v2987 = vtanh.bf16.pop %v2859
        %v2988 = vtanh.bf16.pop %v2860
        %v2989 = vtanh.bf16.pop %v2861
        %v2990 = vtanh.bf16.pop %v2862
        %v2991 = vtanh.bf16.pop %v2863
        %v2992 = vtanh.bf16.pop %v2864
        %v2993 = vtanh.bf16.pop %v2865
        %v2994 = vtanh.bf16.pop %v2866
        %v2995 = vtanh.bf16.pop %v2867
        %v2996 = vtanh.bf16.pop %v2868
        %v2997 = vtanh.bf16.pop %v2869
        %v2998 = vtanh.bf16.pop %v2870
        %v2999 = vtanh.bf16.pop %v2871
        %v3000 = vtanh.bf16.pop %v2872
        %v3001 = vtanh.bf16.pop %v2873
        %v3002 = vtanh.bf16.pop %v2874
        %v3003 = vtanh.bf16.pop %v2875
        %v3004 = vtanh.bf16.pop %v2876
        %v3005 = vtanh.bf16.pop %v2877
        %v3006 = vtanh.bf16.pop %v2878
        %v3007 = vtanh.bf16.pop %v2879
        %v3008 = vtanh.bf16.pop %v2880
        %v3009 = vtanh.bf16.pop %v2881
        %v3010 = vtanh.bf16.pop %v2882
        %v3011 = vtanh.bf16.pop %v2883
        %v3012 = vtanh.bf16.pop %v2884
        %v3013 = vtanh.bf16.pop %v2885
        %v3014 = vtanh.bf16.pop %v2886
        %v3015 = vtanh.bf16.pop %v2887
        %v3016 = vtanh.bf16.pop %v2888
        %v3017 = vtanh.bf16.pop %v2889
        %v3018 = vtanh.bf16.pop %v2890
        %v3019 = vtanh.bf16.pop %v2891
        %v3020 = vtanh.bf16.pop %v2892
        %v3021 = vtanh.bf16.pop %v2893
        %v3022 = vtanh.bf16.pop %v2894
        %v3023 = vtanh.bf16.pop %v2895
        %v3024 = vtanh.bf16.pop %v2896
        %v3025 = vtanh.bf16.pop %v2897
        %v3026 = vtanh.bf16.pop %v2898
        %v3027 = vtanh.bf16.pop %v2899
        %v3028 = vtanh.bf16.pop %v2900
        %v3029 = vtanh.bf16.pop %v2901
        %v3030 = vtanh.bf16.pop %v2902
        %v3031 = vtanh.bf16.pop %v2903
        %v3032 = vtanh.bf16.pop %v2904
        %v3033 = vtanh.bf16.pop %v2905
        %v3034 = vtanh.bf16.pop %v2906
        %v3035 = vtanh.bf16.pop %v2907
        %v3036 = vtanh.bf16.pop %v2908
        %v3037 = vtanh.bf16.pop %v2909
        %v3038 = vtanh.bf16.pop %v2910
        %v3039 = vtanh.bf16.pop %v2911
        %v3040 = vtanh.bf16.pop %v2912
        %v3041 = vtanh.bf16.pop %v2913
        %v3042 = vtanh.bf16.pop %v2914
        %v3043 = vtanh.bf16.pop %v2915
        %v3044 = vtanh.bf16.pop %v2916
        %v3045 = vtanh.bf16.pop %v2917
        %v3046 = vtanh.bf16.pop %v2918
        %v3047 = vtanh.bf16.pop %v2919
        %v3048 = vtanh.bf16.pop %v2920
        %v3049 = vtanh.bf16.pop %v2921
        %v3050 = vtanh.bf16.pop %v2922
        %v3051 = vtanh.bf16.pop %v2923
        %v3052 = vtanh.bf16.pop %v2924
        %v3053 = vtanh.bf16.pop %v2925
        %v3054 = vtanh.bf16.pop %v2926
        %v3055 = vtanh.bf16.pop %v2927
        %v3056 = vtanh.bf16.pop %v2928
        %v3057 = vtanh.bf16.pop %v2929
        %v3058 = vtanh.bf16.pop %v2930
        %v3059 = vtanh.bf16.pop %v2931
        %v3060 = vtanh.bf16.pop %v2932
        %v3061 = vtanh.bf16.pop %v2933
        %v3062 = vtanh.bf16.pop %v2934
        %v3063 = vtanh.bf16.pop %v2935
        %v3064 = vtanh.bf16.pop %v2936
        %v3065 = vtanh.bf16.pop %v2937
        %v3066 = vtanh.bf16.pop %v2938
        %v3067 = vtanh.bf16.pop %v2939
        %v3068 = vtanh.bf16.pop %v2940
        %v3069 = vtanh.bf16.pop %v2941
        %v3070 = vtanh.bf16.pop %v2942
        %v3071 = vtanh.bf16.pop %v2943
        %v3072 = vtanh.bf16.pop %v2944
        %v3073 = vtanh.bf16.pop %v2945
        %v3074 = vtanh.bf16.pop %v2946
        %v3075 = vtanh.bf16.pop %v2947
        %v3076 = vtanh.bf16.pop %v2948
        %v3077 = vtanh.bf16.pop %v2949
        %v3078 = vtanh.bf16.pop %v2950
        %v3079 = vtanh.bf16.pop %v2951
        %v3080 = vtanh.bf16.pop %v2952
        %v3081 = vtanh.bf16.pop %v2953
        %v3082 = vtanh.bf16.pop %v2954
        %v3083 = vtanh.bf16.pop %v2955
        %v3084 = vtanh.bf16.pop %v2956
        %v3085 = vtanh.bf16.pop %v2957
        %v3086 = vtanh.bf16.pop %v2958
        %v3087 = vtanh.bf16.pop %v2959
        %v3088 = vtanh.bf16.pop %v2960
        %v3089 = vtanh.bf16.pop %v2961
        %v3090 = vadd.bf16 %v2962, 1065369472
        %v3091 = vadd.bf16 %v2963, 1065369472
        %v3092 = vadd.bf16 %v2964, 1065369472
        %v3093 = vadd.bf16 %v2965, 1065369472
        %v3094 = vadd.bf16 %v2966, 1065369472
        %v3095 = vadd.bf16 %v2967, 1065369472
        %v3096 = vadd.bf16 %v2968, 1065369472
        %v3097 = vadd.bf16 %v2969, 1065369472
        %v3098 = vadd.bf16 %v2970, 1065369472
        %v3099 = vadd.bf16 %v2971, 1065369472
        %v3100 = vadd.bf16 %v2972, 1065369472
        %v3101 = vadd.bf16 %v2973, 1065369472
        %v3102 = vadd.bf16 %v2974, 1065369472
        %v3103 = vadd.bf16 %v2975, 1065369472
        %v3104 = vadd.bf16 %v2976, 1065369472
        %v3105 = vadd.bf16 %v2977, 1065369472
        %v3106 = vadd.bf16 %v2978, 1065369472
        %v3107 = vadd.bf16 %v2979, 1065369472
        %v3108 = vadd.bf16 %v2980, 1065369472
        %v3109 = vadd.bf16 %v2981, 1065369472
        %v3110 = vadd.bf16 %v2982, 1065369472
        %v3111 = vadd.bf16 %v2983, 1065369472
        %v3112 = vadd.bf16 %v2984, 1065369472
        %v3113 = vadd.bf16 %v2985, 1065369472
        %v3114 = vadd.bf16 %v2986, 1065369472
        %v3115 = vadd.bf16 %v2987, 1065369472
        %v3116 = vadd.bf16 %v2988, 1065369472
        %v3117 = vadd.bf16 %v2989, 1065369472
        %v3118 = vadd.bf16 %v2990, 1065369472
        %v3119 = vadd.bf16 %v2991, 1065369472
        %v3120 = vadd.bf16 %v2992, 1065369472
        %v3121 = vadd.bf16 %v2993, 1065369472
        %v3122 = vadd.bf16 %v2994, 1065369472
        %v3123 = vadd.bf16 %v2995, 1065369472
        %v3124 = vadd.bf16 %v2996, 1065369472
        %v3125 = vadd.bf16 %v2997, 1065369472
        %v3126 = vadd.bf16 %v2998, 1065369472
        %v3127 = vadd.bf16 %v2999, 1065369472
        %v3128 = vadd.bf16 %v3000, 1065369472
        %v3129 = vadd.bf16 %v3001, 1065369472
        %v3130 = vadd.bf16 %v3002, 1065369472
        %v3131 = vadd.bf16 %v3003, 1065369472
        %v3132 = vadd.bf16 %v3004, 1065369472
        %v3133 = vadd.bf16 %v3005, 1065369472
        %v3134 = vadd.bf16 %v3006, 1065369472
        %v3135 = vadd.bf16 %v3007, 1065369472
        %v3136 = vadd.bf16 %v3008, 1065369472
        %v3137 = vadd.bf16 %v3009, 1065369472
        %v3138 = vadd.bf16 %v3010, 1065369472
        %v3139 = vadd.bf16 %v3011, 1065369472
        %v3140 = vadd.bf16 %v3012, 1065369472
        %v3141 = vadd.bf16 %v3013, 1065369472
        %v3142 = vadd.bf16 %v3014, 1065369472
        %v3143 = vadd.bf16 %v3015, 1065369472
        %v3144 = vadd.bf16 %v3016, 1065369472
        %v3145 = vadd.bf16 %v3017, 1065369472
        %v3146 = vadd.bf16 %v3018, 1065369472
        %v3147 = vadd.bf16 %v3019, 1065369472
        %v3148 = vadd.bf16 %v3020, 1065369472
        %v3149 = vadd.bf16 %v3021, 1065369472
        %v3150 = vadd.bf16 %v3022, 1065369472
        %v3151 = vadd.bf16 %v3023, 1065369472
        %v3152 = vadd.bf16 %v3024, 1065369472
        %v3153 = vadd.bf16 %v3025, 1065369472
        %v3154 = vadd.bf16 %v3026, 1065369472
        %v3155 = vadd.bf16 %v3027, 1065369472
        %v3156 = vadd.bf16 %v3028, 1065369472
        %v3157 = vadd.bf16 %v3029, 1065369472
        %v3158 = vadd.bf16 %v3030, 1065369472
        %v3159 = vadd.bf16 %v3031, 1065369472
        %v3160 = vadd.bf16 %v3032, 1065369472
        %v3161 = vadd.bf16 %v3033, 1065369472
        %v3162 = vadd.bf16 %v3034, 1065369472
        %v3163 = vadd.bf16 %v3035, 1065369472
        %v3164 = vadd.bf16 %v3036, 1065369472
        %v3165 = vadd.bf16 %v3037, 1065369472
        %v3166 = vadd.bf16 %v3038, 1065369472
        %v3167 = vadd.bf16 %v3039, 1065369472
        %v3168 = vadd.bf16 %v3040, 1065369472
        %v3169 = vadd.bf16 %v3041, 1065369472
        %v3170 = vadd.bf16 %v3042, 1065369472
        %v3171 = vadd.bf16 %v3043, 1065369472
        %v3172 = vadd.bf16 %v3044, 1065369472
        %v3173 = vadd.bf16 %v3045, 1065369472
        %v3174 = vadd.bf16 %v3046, 1065369472
        %v3175 = vadd.bf16 %v3047, 1065369472
        %v3176 = vadd.bf16 %v3048, 1065369472
        %v3177 = vadd.bf16 %v3049, 1065369472
        %v3178 = vadd.bf16 %v3050, 1065369472
        %v3179 = vadd.bf16 %v3051, 1065369472
        %v3180 = vadd.bf16 %v3052, 1065369472
        %v3181 = vadd.bf16 %v3053, 1065369472
        %v3182 = vadd.bf16 %v3054, 1065369472
        %v3183 = vadd.bf16 %v3055, 1065369472
        %v3184 = vadd.bf16 %v3056, 1065369472
        %v3185 = vadd.bf16 %v3057, 1065369472
        %v3186 = vadd.bf16 %v3058, 1065369472
        %v3187 = vadd.bf16 %v3059, 1065369472
        %v3188 = vadd.bf16 %v3060, 1065369472
        %v3189 = vadd.bf16 %v3061, 1065369472
        %v3190 = vadd.bf16 %v3062, 1065369472
        %v3191 = vadd.bf16 %v3063, 1065369472
        %v3192 = vadd.bf16 %v3064, 1065369472
        %v3193 = vadd.bf16 %v3065, 1065369472
        %v3194 = vadd.bf16 %v3066, 1065369472
        %v3195 = vadd.bf16 %v3067, 1065369472
        %v3196 = vadd.bf16 %v3068, 1065369472
        %v3197 = vadd.bf16 %v3069, 1065369472
        %v3198 = vadd.bf16 %v3070, 1065369472
        %v3199 = vadd.bf16 %v3071, 1065369472
        %v3200 = vadd.bf16 %v3072, 1065369472
        %v3201 = vadd.bf16 %v3073, 1065369472
        %v3202 = vadd.bf16 %v3074, 1065369472
        %v3203 = vadd.bf16 %v3075, 1065369472
        %v3204 = vadd.bf16 %v3076, 1065369472
        %v3205 = vadd.bf16 %v3077, 1065369472
        %v3206 = vadd.bf16 %v3078, 1065369472
        %v3207 = vadd.bf16 %v3079, 1065369472
        %v3208 = vadd.bf16 %v3080, 1065369472
        %v3209 = vadd.bf16 %v3081, 1065369472
        %v3210 = vadd.bf16 %v3082, 1065369472
        %v3211 = vadd.bf16 %v3083, 1065369472
        %v3212 = vadd.bf16 %v3084, 1065369472
        %v3213 = vadd.bf16 %v3085, 1065369472
        %v3214 = vadd.bf16 %v3086, 1065369472
        %v3215 = vadd.bf16 %v3087, 1065369472
        %v3216 = vadd.bf16 %v3088, 1065369472
        %v3217 = vadd.bf16 %v3089, 1065369472
        %v3218 = vmul.bf16 %v2194, %v3090
        %v3219 = vmul.bf16 %v2195, %v3091
        %v3220 = vmul.bf16 %v2196, %v3092
        %v3221 = vmul.bf16 %v2197, %v3093
        %v3222 = vmul.bf16 %v2198, %v3094
        %v3223 = vmul.bf16 %v2199, %v3095
        %v3224 = vmul.bf16 %v2200, %v3096
        %v3225 = vmul.bf16 %v2201, %v3097
        %v3226 = vmul.bf16 %v2202, %v3098
        %v3227 = vmul.bf16 %v2203, %v3099
        %v3228 = vmul.bf16 %v2204, %v3100
        %v3229 = vmul.bf16 %v2205, %v3101
        %v3230 = vmul.bf16 %v2206, %v3102
        %v3231 = vmul.bf16 %v2207, %v3103
        %v3232 = vmul.bf16 %v2208, %v3104
        %v3233 = vmul.bf16 %v2209, %v3105
        %v3234 = vmul.bf16 %v2210, %v3106
        %v3235 = vmul.bf16 %v2211, %v3107
        %v3236 = vmul.bf16 %v2212, %v3108
        %v3237 = vmul.bf16 %v2213, %v3109
        %v3238 = vmul.bf16 %v2214, %v3110
        %v3239 = vmul.bf16 %v2215, %v3111
        %v3240 = vmul.bf16 %v2216, %v3112
        %v3241 = vmul.bf16 %v2217, %v3113
        %v3242 = vmul.bf16 %v2218, %v3114
        %v3243 = vmul.bf16 %v2219, %v3115
        %v3244 = vmul.bf16 %v2220, %v3116
        %v3245 = vmul.bf16 %v2221, %v3117
        %v3246 = vmul.bf16 %v2222, %v3118
        %v3247 = vmul.bf16 %v2223, %v3119
        %v3248 = vmul.bf16 %v2224, %v3120
        %v3249 = vmul.bf16 %v2225, %v3121
        %v3250 = vmul.bf16 %v2226, %v3122
        %v3251 = vmul.bf16 %v2227, %v3123
        %v3252 = vmul.bf16 %v2228, %v3124
        %v3253 = vmul.bf16 %v2229, %v3125
        %v3254 = vmul.bf16 %v2230, %v3126
        %v3255 = vmul.bf16 %v2231, %v3127
        %v3256 = vmul.bf16 %v2232, %v3128
        %v3257 = vmul.bf16 %v2233, %v3129
        %v3258 = vmul.bf16 %v2234, %v3130
        %v3259 = vmul.bf16 %v2235, %v3131
        %v3260 = vmul.bf16 %v2236, %v3132
        %v3261 = vmul.bf16 %v2237, %v3133
        %v3262 = vmul.bf16 %v2238, %v3134
        %v3263 = vmul.bf16 %v2239, %v3135
        %v3264 = vmul.bf16 %v2240, %v3136
        %v3265 = vmul.bf16 %v2241, %v3137
        %v3266 = vmul.bf16 %v2242, %v3138
        %v3267 = vmul.bf16 %v2243, %v3139
        %v3268 = vmul.bf16 %v2244, %v3140
        %v3269 = vmul.bf16 %v2245, %v3141
        %v3270 = vmul.bf16 %v2246, %v3142
        %v3271 = vmul.bf16 %v2247, %v3143
        %v3272 = vmul.bf16 %v2248, %v3144
        %v3273 = vmul.bf16 %v2249, %v3145
        %v3274 = vmul.bf16 %v2250, %v3146
        %v3275 = vmul.bf16 %v2251, %v3147
        %v3276 = vmul.bf16 %v2252, %v3148
        %v3277 = vmul.bf16 %v2253, %v3149
        %v3278 = vmul.bf16 %v2254, %v3150
        %v3279 = vmul.bf16 %v2255, %v3151
        %v3280 = vmul.bf16 %v2256, %v3152
        %v3281 = vmul.bf16 %v2257, %v3153
        %v3282 = vmul.bf16 %v2258, %v3154
        %v3283 = vmul.bf16 %v2259, %v3155
        %v3284 = vmul.bf16 %v2260, %v3156
        %v3285 = vmul.bf16 %v2261, %v3157
        %v3286 = vmul.bf16 %v2262, %v3158
        %v3287 = vmul.bf16 %v2263, %v3159
        %v3288 = vmul.bf16 %v2264, %v3160
        %v3289 = vmul.bf16 %v2265, %v3161
        %v3290 = vmul.bf16 %v2266, %v3162
        %v3291 = vmul.bf16 %v2267, %v3163
        %v3292 = vmul.bf16 %v2268, %v3164
        %v3293 = vmul.bf16 %v2269, %v3165
        %v3294 = vmul.bf16 %v2270, %v3166
        %v3295 = vmul.bf16 %v2271, %v3167
        %v3296 = vmul.bf16 %v2272, %v3168
        %v3297 = vmul.bf16 %v2273, %v3169
        %v3298 = vmul.bf16 %v2274, %v3170
        %v3299 = vmul.bf16 %v2275, %v3171
        %v3300 = vmul.bf16 %v2276, %v3172
        %v3301 = vmul.bf16 %v2277, %v3173
        %v3302 = vmul.bf16 %v2278, %v3174
        %v3303 = vmul.bf16 %v2279, %v3175
        %v3304 = vmul.bf16 %v2280, %v3176
        %v3305 = vmul.bf16 %v2281, %v3177
        %v3306 = vmul.bf16 %v2282, %v3178
        %v3307 = vmul.bf16 %v2283, %v3179
        %v3308 = vmul.bf16 %v2284, %v3180
        %v3309 = vmul.bf16 %v2285, %v3181
        %v3310 = vmul.bf16 %v2286, %v3182
        %v3311 = vmul.bf16 %v2287, %v3183
        %v3312 = vmul.bf16 %v2288, %v3184
        %v3313 = vmul.bf16 %v2289, %v3185
        %v3314 = vmul.bf16 %v2290, %v3186
        %v3315 = vmul.bf16 %v2291, %v3187
        %v3316 = vmul.bf16 %v2292, %v3188
        %v3317 = vmul.bf16 %v2293, %v3189
        %v3318 = vmul.bf16 %v2294, %v3190
        %v3319 = vmul.bf16 %v2295, %v3191
        %v3320 = vmul.bf16 %v2296, %v3192
        %v3321 = vmul.bf16 %v2297, %v3193
        %v3322 = vmul.bf16 %v2298, %v3194
        %v3323 = vmul.bf16 %v2299, %v3195
        %v3324 = vmul.bf16 %v2300, %v3196
        %v3325 = vmul.bf16 %v2301, %v3197
        %v3326 = vmul.bf16 %v2302, %v3198
        %v3327 = vmul.bf16 %v2303, %v3199
        %v3328 = vmul.bf16 %v2304, %v3200
        %v3329 = vmul.bf16 %v2305, %v3201
        %v3330 = vmul.bf16 %v2306, %v3202
        %v3331 = vmul.bf16 %v2307, %v3203
        %v3332 = vmul.bf16 %v2308, %v3204
        %v3333 = vmul.bf16 %v2309, %v3205
        %v3334 = vmul.bf16 %v2310, %v3206
        %v3335 = vmul.bf16 %v2311, %v3207
        %v3336 = vmul.bf16 %v2312, %v3208
        %v3337 = vmul.bf16 %v2313, %v3209
        %v3338 = vmul.bf16 %v2314, %v3210
        %v3339 = vmul.bf16 %v2315, %v3211
        %v3340 = vmul.bf16 %v2316, %v3212
        %v3341 = vmul.bf16 %v2317, %v3213
        %v3342 = vmul.bf16 %v2318, %v3214
        %v3343 = vmul.bf16 %v2319, %v3215
        %v3344 = vmul.bf16 %v2320, %v3216
        %v3345 = vmul.bf16 %v2321, %v3217
        %v3346 = vld [vmem:[#allocation8] sm:$0xff]
        %v3347 = vld [vmem:[#allocation8 + $0x8] sm:$0xff]
        %v3348 = vld [vmem:[#allocation8 + $0x10] sm:$0xff]
        %v3349 = vld [vmem:[#allocation8 + $0x18] sm:$0xff]
        %v3350 = vld [vmem:[#allocation8 + $0x20] sm:$0xff]
        %v3351 = vld [vmem:[#allocation8 + $0x28] sm:$0xff]
        %v3352 = vld [vmem:[#allocation8 + $0x30] sm:$0xff]
        %v3353 = vld [vmem:[#allocation8 + $0x38] sm:$0xff]
        %v3354 = vld [vmem:[#allocation8 + $0x40] sm:$0xff]
        %v3355 = vld [vmem:[#allocation8 + $0x48] sm:$0xff]
        %v3356 = vld [vmem:[#allocation8 + $0x50] sm:$0xff]
        %v3357 = vld [vmem:[#allocation8 + $0x58] sm:$0xff]
        %v3358 = vld [vmem:[#allocation8 + $0x60] sm:$0xff]
        %v3359 = vld [vmem:[#allocation8 + $0x68] sm:$0xff]
        %v3360 = vld [vmem:[#allocation8 + $0x70] sm:$0xff]
        %v3361 = vld [vmem:[#allocation8 + $0x78] sm:$0xff]
        %v3362 = vld [vmem:[#allocation8 + $0x80] sm:$0xff]
        %v3363 = vld [vmem:[#allocation8 + $0x88] sm:$0xff]
        %v3364 = vld [vmem:[#allocation8 + $0x90] sm:$0xff]
        %v3365 = vld [vmem:[#allocation8 + $0x98] sm:$0xff]
        %v3366 = vld [vmem:[#allocation8 + $0xa0] sm:$0xff]
        %v3367 = vld [vmem:[#allocation8 + $0xa8] sm:$0xff]
        %v3368 = vld [vmem:[#allocation8 + $0xb0] sm:$0xff]
        %v3369 = vld [vmem:[#allocation8 + $0xb8] sm:$0xff]
        %v3370 = vld [vmem:[#allocation8 + $0xc0] sm:$0xff]
        %v3371 = vld [vmem:[#allocation8 + $0xc8] sm:$0xff]
        %v3372 = vld [vmem:[#allocation8 + $0xd0] sm:$0xff]
        %v3373 = vld [vmem:[#allocation8 + $0xd8] sm:$0xff]
        %v3374 = vld [vmem:[#allocation8 + $0xe0] sm:$0xff]
        %v3375 = vld [vmem:[#allocation8 + $0xe8] sm:$0xff]
        %v3376 = vld [vmem:[#allocation8 + $0xf0] sm:$0xff]
        %v3377 = vld [vmem:[#allocation8 + $0xf8] sm:$0xff]
        %v3378 = vld [vmem:[#allocation8 + $0x100] sm:$0xff]
        %v3379 = vld [vmem:[#allocation8 + $0x108] sm:$0xff]
        %v3380 = vld [vmem:[#allocation8 + $0x110] sm:$0xff]
        %v3381 = vld [vmem:[#allocation8 + $0x118] sm:$0xff]
        %v3382 = vld [vmem:[#allocation8 + $0x120] sm:$0xff]
        %v3383 = vld [vmem:[#allocation8 + $0x128] sm:$0xff]
        %v3384 = vld [vmem:[#allocation8 + $0x130] sm:$0xff]
        %v3385 = vld [vmem:[#allocation8 + $0x138] sm:$0xff]
        %v3386 = vld [vmem:[#allocation8 + $0x140] sm:$0xff]
        %v3387 = vld [vmem:[#allocation8 + $0x148] sm:$0xff]
        %v3388 = vld [vmem:[#allocation8 + $0x150] sm:$0xff]
        %v3389 = vld [vmem:[#allocation8 + $0x158] sm:$0xff]
        %v3390 = vld [vmem:[#allocation8 + $0x160] sm:$0xff]
        %v3391 = vld [vmem:[#allocation8 + $0x168] sm:$0xff]
        %v3392 = vld [vmem:[#allocation8 + $0x170] sm:$0xff]
        %v3393 = vld [vmem:[#allocation8 + $0x178] sm:$0xff]
        %v3394 = vld [vmem:[#allocation8 + $0x180] sm:$0xff]
        %v3395 = vld [vmem:[#allocation8 + $0x188] sm:$0xff]
        %v3396 = vld [vmem:[#allocation8 + $0x190] sm:$0xff]
        %v3397 = vld [vmem:[#allocation8 + $0x198] sm:$0xff]
        %v3398 = vld [vmem:[#allocation8 + $0x1a0] sm:$0xff]
        %v3399 = vld [vmem:[#allocation8 + $0x1a8] sm:$0xff]
        %v3400 = vld [vmem:[#allocation8 + $0x1b0] sm:$0xff]
        %v3401 = vld [vmem:[#allocation8 + $0x1b8] sm:$0xff]
        %v3402 = vld [vmem:[#allocation8 + $0x1c0] sm:$0xff]
        %v3403 = vld [vmem:[#allocation8 + $0x1c8] sm:$0xff]
        %v3404 = vld [vmem:[#allocation8 + $0x1d0] sm:$0xff]
        %v3405 = vld [vmem:[#allocation8 + $0x1d8] sm:$0xff]
        %v3406 = vld [vmem:[#allocation8 + $0x1e0] sm:$0xff]
        %v3407 = vld [vmem:[#allocation8 + $0x1e8] sm:$0xff]
        %v3408 = vld [vmem:[#allocation8 + $0x1f0] sm:$0xff]
        %v3409 = vld [vmem:[#allocation8 + $0x1f8] sm:$0xff]
        %v3410 = vld [vmem:[#allocation8 + $0x200] sm:$0xff]
        %v3411 = vld [vmem:[#allocation8 + $0x208] sm:$0xff]
        %v3412 = vld [vmem:[#allocation8 + $0x210] sm:$0xff]
        %v3413 = vld [vmem:[#allocation8 + $0x218] sm:$0xff]
        %v3414 = vld [vmem:[#allocation8 + $0x220] sm:$0xff]
        %v3415 = vld [vmem:[#allocation8 + $0x228] sm:$0xff]
        %v3416 = vld [vmem:[#allocation8 + $0x230] sm:$0xff]
        %v3417 = vld [vmem:[#allocation8 + $0x238] sm:$0xff]
        %v3418 = vld [vmem:[#allocation8 + $0x240] sm:$0xff]
        %v3419 = vld [vmem:[#allocation8 + $0x248] sm:$0xff]
        %v3420 = vld [vmem:[#allocation8 + $0x250] sm:$0xff]
        %v3421 = vld [vmem:[#allocation8 + $0x258] sm:$0xff]
        %v3422 = vld [vmem:[#allocation8 + $0x260] sm:$0xff]
        %v3423 = vld [vmem:[#allocation8 + $0x268] sm:$0xff]
        %v3424 = vld [vmem:[#allocation8 + $0x270] sm:$0xff]
        %v3425 = vld [vmem:[#allocation8 + $0x278] sm:$0xff]
        %v3426 = vld [vmem:[#allocation8 + $0x280] sm:$0xff]
        %v3427 = vld [vmem:[#allocation8 + $0x288] sm:$0xff]
        %v3428 = vld [vmem:[#allocation8 + $0x290] sm:$0xff]
        %v3429 = vld [vmem:[#allocation8 + $0x298] sm:$0xff]
        %v3430 = vld [vmem:[#allocation8 + $0x2a0] sm:$0xff]
        %v3431 = vld [vmem:[#allocation8 + $0x2a8] sm:$0xff]
        %v3432 = vld [vmem:[#allocation8 + $0x2b0] sm:$0xff]
        %v3433 = vld [vmem:[#allocation8 + $0x2b8] sm:$0xff]
        %v3434 = vld [vmem:[#allocation8 + $0x2c0] sm:$0xff]
        %v3435 = vld [vmem:[#allocation8 + $0x2c8] sm:$0xff]
        %v3436 = vld [vmem:[#allocation8 + $0x2d0] sm:$0xff]
        %v3437 = vld [vmem:[#allocation8 + $0x2d8] sm:$0xff]
        %v3438 = vld [vmem:[#allocation8 + $0x2e0] sm:$0xff]
        %v3439 = vld [vmem:[#allocation8 + $0x2e8] sm:$0xff]
        %v3440 = vld [vmem:[#allocation8 + $0x2f0] sm:$0xff]
        %v3441 = vld [vmem:[#allocation8 + $0x2f8] sm:$0xff]
        %v3442 = vld [vmem:[#allocation8 + $0x300] sm:$0xff]
        %v3443 = vld [vmem:[#allocation8 + $0x308] sm:$0xff]
        %v3444 = vld [vmem:[#allocation8 + $0x310] sm:$0xff]
        %v3445 = vld [vmem:[#allocation8 + $0x318] sm:$0xff]
        %v3446 = vld [vmem:[#allocation8 + $0x320] sm:$0xff]
        %v3447 = vld [vmem:[#allocation8 + $0x328] sm:$0xff]
        %v3448 = vld [vmem:[#allocation8 + $0x330] sm:$0xff]
        %v3449 = vld [vmem:[#allocation8 + $0x338] sm:$0xff]
        %v3450 = vld [vmem:[#allocation8 + $0x340] sm:$0xff]
        %v3451 = vld [vmem:[#allocation8 + $0x348] sm:$0xff]
        %v3452 = vld [vmem:[#allocation8 + $0x350] sm:$0xff]
        %v3453 = vld [vmem:[#allocation8 + $0x358] sm:$0xff]
        %v3454 = vld [vmem:[#allocation8 + $0x360] sm:$0xff]
        %v3455 = vld [vmem:[#allocation8 + $0x368] sm:$0xff]
        %v3456 = vld [vmem:[#allocation8 + $0x370] sm:$0xff]
        %v3457 = vld [vmem:[#allocation8 + $0x378] sm:$0xff]
        %v3458 = vld [vmem:[#allocation8 + $0x380] sm:$0xff]
        %v3459 = vld [vmem:[#allocation8 + $0x388] sm:$0xff]
        %v3460 = vld [vmem:[#allocation8 + $0x390] sm:$0xff]
        %v3461 = vld [vmem:[#allocation8 + $0x398] sm:$0xff]
        %v3462 = vld [vmem:[#allocation8 + $0x3a0] sm:$0xff]
        %v3463 = vld [vmem:[#allocation8 + $0x3a8] sm:$0xff]
        %v3464 = vld [vmem:[#allocation8 + $0x3b0] sm:$0xff]
        %v3465 = vld [vmem:[#allocation8 + $0x3b8] sm:$0xff]
        %v3466 = vld [vmem:[#allocation8 + $0x3c0] sm:$0xff]
        %v3467 = vld [vmem:[#allocation8 + $0x3c8] sm:$0xff]
        %v3468 = vld [vmem:[#allocation8 + $0x3d0] sm:$0xff]
        %v3469 = vld [vmem:[#allocation8 + $0x3d8] sm:$0xff]
        %v3470 = vld [vmem:[#allocation8 + $0x3e0] sm:$0xff]
        %v3471 = vld [vmem:[#allocation8 + $0x3e8] sm:$0xff]
        %v3472 = vld [vmem:[#allocation8 + $0x3f0] sm:$0xff]
        %v3473 = vld [vmem:[#allocation8 + $0x3f8] sm:$0xff]
        %v3474 = vld [vmem:[%s4] sm:$0x3]
        %v3476 = vlaneseq
        %v3477 = vshrl.u32 %v3476, 7
        %v3478 = vsub.s32 0, %v3477
        %v3479 = vrot.slane %v3474, %v3478
        %v3480 = vlaneseq
        %v3481 = vshrl.u32 %v3480, 7
        %v3482 = vsub.s32 1, %v3481
        %v3483 = vrot.slane %v3474, %v3482
        %v3614 = vunpack.c.l.b16 %v3346
        %v3615 = vunpack.c.h.b16 %v3346
        %v3616 = vunpack.c.l.b16 %v3347
        %v3617 = vunpack.c.h.b16 %v3347
        %v3618 = vunpack.c.l.b16 %v3348
        %v3619 = vunpack.c.h.b16 %v3348
        %v3620 = vunpack.c.l.b16 %v3349
        %v3621 = vunpack.c.h.b16 %v3349
        %v3622 = vunpack.c.l.b16 %v3350
        %v3623 = vunpack.c.h.b16 %v3350
        %v3624 = vunpack.c.l.b16 %v3351
        %v3625 = vunpack.c.h.b16 %v3351
        %v3626 = vunpack.c.l.b16 %v3352
        %v3627 = vunpack.c.h.b16 %v3352
        %v3628 = vunpack.c.l.b16 %v3353
        %v3629 = vunpack.c.h.b16 %v3353
        %v3630 = vunpack.c.l.b16 %v3354
        %v3631 = vunpack.c.h.b16 %v3354
        %v3632 = vunpack.c.l.b16 %v3355
        %v3633 = vunpack.c.h.b16 %v3355
        %v3634 = vunpack.c.l.b16 %v3356
        %v3635 = vunpack.c.h.b16 %v3356
        %v3636 = vunpack.c.l.b16 %v3357
        %v3637 = vunpack.c.h.b16 %v3357
        %v3638 = vunpack.c.l.b16 %v3358
        %v3639 = vunpack.c.h.b16 %v3358
        %v3640 = vunpack.c.l.b16 %v3359
        %v3641 = vunpack.c.h.b16 %v3359
        %v3642 = vunpack.c.l.b16 %v3360
        %v3643 = vunpack.c.h.b16 %v3360
        %v3644 = vunpack.c.l.b16 %v3361
        %v3645 = vunpack.c.h.b16 %v3361
        %v3646 = vunpack.c.l.b16 %v3362
        %v3647 = vunpack.c.h.b16 %v3362
        %v3648 = vunpack.c.l.b16 %v3363
        %v3649 = vunpack.c.h.b16 %v3363
        %v3650 = vunpack.c.l.b16 %v3364
        %v3651 = vunpack.c.h.b16 %v3364
        %v3652 = vunpack.c.l.b16 %v3365
        %v3653 = vunpack.c.h.b16 %v3365
        %v3654 = vunpack.c.l.b16 %v3366
        %v3655 = vunpack.c.h.b16 %v3366
        %v3656 = vunpack.c.l.b16 %v3367
        %v3657 = vunpack.c.h.b16 %v3367
        %v3658 = vunpack.c.l.b16 %v3368
        %v3659 = vunpack.c.h.b16 %v3368
        %v3660 = vunpack.c.l.b16 %v3369
        %v3661 = vunpack.c.h.b16 %v3369
        %v3662 = vunpack.c.l.b16 %v3370
        %v3663 = vunpack.c.h.b16 %v3370
        %v3664 = vunpack.c.l.b16 %v3371
        %v3665 = vunpack.c.h.b16 %v3371
        %v3666 = vunpack.c.l.b16 %v3372
        %v3667 = vunpack.c.h.b16 %v3372
        %v3668 = vunpack.c.l.b16 %v3373
        %v3669 = vunpack.c.h.b16 %v3373
        %v3670 = vunpack.c.l.b16 %v3374
        %v3671 = vunpack.c.h.b16 %v3374
        %v3672 = vunpack.c.l.b16 %v3375
        %v3673 = vunpack.c.h.b16 %v3375
        %v3674 = vunpack.c.l.b16 %v3376
        %v3675 = vunpack.c.h.b16 %v3376
        %v3676 = vunpack.c.l.b16 %v3377
        %v3677 = vunpack.c.h.b16 %v3377
        %v3678 = vunpack.c.l.b16 %v3378
        %v3679 = vunpack.c.h.b16 %v3378
        %v3680 = vunpack.c.l.b16 %v3379
        %v3681 = vunpack.c.h.b16 %v3379
        %v3682 = vunpack.c.l.b16 %v3380
        %v3683 = vunpack.c.h.b16 %v3380
        %v3684 = vunpack.c.l.b16 %v3381
        %v3685 = vunpack.c.h.b16 %v3381
        %v3686 = vunpack.c.l.b16 %v3382
        %v3687 = vunpack.c.h.b16 %v3382
        %v3688 = vunpack.c.l.b16 %v3383
        %v3689 = vunpack.c.h.b16 %v3383
        %v3690 = vunpack.c.l.b16 %v3384
        %v3691 = vunpack.c.h.b16 %v3384
        %v3692 = vunpack.c.l.b16 %v3385
        %v3693 = vunpack.c.h.b16 %v3385
        %v3694 = vunpack.c.l.b16 %v3386
        %v3695 = vunpack.c.h.b16 %v3386
        %v3696 = vunpack.c.l.b16 %v3387
        %v3697 = vunpack.c.h.b16 %v3387
        %v3698 = vunpack.c.l.b16 %v3388
        %v3699 = vunpack.c.h.b16 %v3388
        %v3700 = vunpack.c.l.b16 %v3389
        %v3701 = vunpack.c.h.b16 %v3389
        %v3702 = vunpack.c.l.b16 %v3390
        %v3703 = vunpack.c.h.b16 %v3390
        %v3704 = vunpack.c.l.b16 %v3391
        %v3705 = vunpack.c.h.b16 %v3391
        %v3706 = vunpack.c.l.b16 %v3392
        %v3707 = vunpack.c.h.b16 %v3392
        %v3708 = vunpack.c.l.b16 %v3393
        %v3709 = vunpack.c.h.b16 %v3393
        %v3710 = vunpack.c.l.b16 %v3394
        %v3711 = vunpack.c.h.b16 %v3394
        %v3712 = vunpack.c.l.b16 %v3395
        %v3713 = vunpack.c.h.b16 %v3395
        %v3714 = vunpack.c.l.b16 %v3396
        %v3715 = vunpack.c.h.b16 %v3396
        %v3716 = vunpack.c.l.b16 %v3397
        %v3717 = vunpack.c.h.b16 %v3397
        %v3718 = vunpack.c.l.b16 %v3398
        %v3719 = vunpack.c.h.b16 %v3398
        %v3720 = vunpack.c.l.b16 %v3399
        %v3721 = vunpack.c.h.b16 %v3399
        %v3722 = vunpack.c.l.b16 %v3400
        %v3723 = vunpack.c.h.b16 %v3400
        %v3724 = vunpack.c.l.b16 %v3401
        %v3725 = vunpack.c.h.b16 %v3401
        %v3726 = vunpack.c.l.b16 %v3402
        %v3727 = vunpack.c.h.b16 %v3402
        %v3728 = vunpack.c.l.b16 %v3403
        %v3729 = vunpack.c.h.b16 %v3403
        %v3730 = vunpack.c.l.b16 %v3404
        %v3731 = vunpack.c.h.b16 %v3404
        %v3732 = vunpack.c.l.b16 %v3405
        %v3733 = vunpack.c.h.b16 %v3405
        %v3734 = vunpack.c.l.b16 %v3406
        %v3735 = vunpack.c.h.b16 %v3406
        %v3736 = vunpack.c.l.b16 %v3407
        %v3737 = vunpack.c.h.b16 %v3407
        %v3738 = vunpack.c.l.b16 %v3408
        %v3739 = vunpack.c.h.b16 %v3408
        %v3740 = vunpack.c.l.b16 %v3409
        %v3741 = vunpack.c.h.b16 %v3409
        %v3742 = vunpack.c.l.b16 %v3410
        %v3743 = vunpack.c.h.b16 %v3410
        %v3744 = vunpack.c.l.b16 %v3411
        %v3745 = vunpack.c.h.b16 %v3411
        %v3746 = vunpack.c.l.b16 %v3412
        %v3747 = vunpack.c.h.b16 %v3412
        %v3748 = vunpack.c.l.b16 %v3413
        %v3749 = vunpack.c.h.b16 %v3413
        %v3750 = vunpack.c.l.b16 %v3414
        %v3751 = vunpack.c.h.b16 %v3414
        %v3752 = vunpack.c.l.b16 %v3415
        %v3753 = vunpack.c.h.b16 %v3415
        %v3754 = vunpack.c.l.b16 %v3416
        %v3755 = vunpack.c.h.b16 %v3416
        %v3756 = vunpack.c.l.b16 %v3417
        %v3757 = vunpack.c.h.b16 %v3417
        %v3758 = vunpack.c.l.b16 %v3418
        %v3759 = vunpack.c.h.b16 %v3418
        %v3760 = vunpack.c.l.b16 %v3419
        %v3761 = vunpack.c.h.b16 %v3419
        %v3762 = vunpack.c.l.b16 %v3420
        %v3763 = vunpack.c.h.b16 %v3420
        %v3764 = vunpack.c.l.b16 %v3421
        %v3765 = vunpack.c.h.b16 %v3421
        %v3766 = vunpack.c.l.b16 %v3422
        %v3767 = vunpack.c.h.b16 %v3422
        %v3768 = vunpack.c.l.b16 %v3423
        %v3769 = vunpack.c.h.b16 %v3423
        %v3770 = vunpack.c.l.b16 %v3424
        %v3771 = vunpack.c.h.b16 %v3424
        %v3772 = vunpack.c.l.b16 %v3425
        %v3773 = vunpack.c.h.b16 %v3425
        %v3774 = vunpack.c.l.b16 %v3426
        %v3775 = vunpack.c.h.b16 %v3426
        %v3776 = vunpack.c.l.b16 %v3427
        %v3777 = vunpack.c.h.b16 %v3427
        %v3778 = vunpack.c.l.b16 %v3428
        %v3779 = vunpack.c.h.b16 %v3428
        %v3780 = vunpack.c.l.b16 %v3429
        %v3781 = vunpack.c.h.b16 %v3429
        %v3782 = vunpack.c.l.b16 %v3430
        %v3783 = vunpack.c.h.b16 %v3430
        %v3784 = vunpack.c.l.b16 %v3431
        %v3785 = vunpack.c.h.b16 %v3431
        %v3786 = vunpack.c.l.b16 %v3432
        %v3787 = vunpack.c.h.b16 %v3432
        %v3788 = vunpack.c.l.b16 %v3433
        %v3789 = vunpack.c.h.b16 %v3433
        %v3790 = vunpack.c.l.b16 %v3434
        %v3791 = vunpack.c.h.b16 %v3434
        %v3792 = vunpack.c.l.b16 %v3435
        %v3793 = vunpack.c.h.b16 %v3435
        %v3794 = vunpack.c.l.b16 %v3436
        %v3795 = vunpack.c.h.b16 %v3436
        %v3796 = vunpack.c.l.b16 %v3437
        %v3797 = vunpack.c.h.b16 %v3437
        %v3798 = vunpack.c.l.b16 %v3438
        %v3799 = vunpack.c.h.b16 %v3438
        %v3800 = vunpack.c.l.b16 %v3439
        %v3801 = vunpack.c.h.b16 %v3439
        %v3802 = vunpack.c.l.b16 %v3440
        %v3803 = vunpack.c.h.b16 %v3440
        %v3804 = vunpack.c.l.b16 %v3441
        %v3805 = vunpack.c.h.b16 %v3441
        %v3806 = vunpack.c.l.b16 %v3442
        %v3807 = vunpack.c.h.b16 %v3442
        %v3808 = vunpack.c.l.b16 %v3443
        %v3809 = vunpack.c.h.b16 %v3443
        %v3810 = vunpack.c.l.b16 %v3444
        %v3811 = vunpack.c.h.b16 %v3444
        %v3812 = vunpack.c.l.b16 %v3445
        %v3813 = vunpack.c.h.b16 %v3445
        %v3814 = vunpack.c.l.b16 %v3446
        %v3815 = vunpack.c.h.b16 %v3446
        %v3816 = vunpack.c.l.b16 %v3447
        %v3817 = vunpack.c.h.b16 %v3447
        %v3818 = vunpack.c.l.b16 %v3448
        %v3819 = vunpack.c.h.b16 %v3448
        %v3820 = vunpack.c.l.b16 %v3449
        %v3821 = vunpack.c.h.b16 %v3449
        %v3822 = vunpack.c.l.b16 %v3450
        %v3823 = vunpack.c.h.b16 %v3450
        %v3824 = vunpack.c.l.b16 %v3451
        %v3825 = vunpack.c.h.b16 %v3451
        %v3826 = vunpack.c.l.b16 %v3452
        %v3827 = vunpack.c.h.b16 %v3452
        %v3828 = vunpack.c.l.b16 %v3453
        %v3829 = vunpack.c.h.b16 %v3453
        %v3830 = vunpack.c.l.b16 %v3454
        %v3831 = vunpack.c.h.b16 %v3454
        %v3832 = vunpack.c.l.b16 %v3455
        %v3833 = vunpack.c.h.b16 %v3455
        %v3834 = vunpack.c.l.b16 %v3456
        %v3835 = vunpack.c.h.b16 %v3456
        %v3836 = vunpack.c.l.b16 %v3457
        %v3837 = vunpack.c.h.b16 %v3457
        %v3838 = vunpack.c.l.b16 %v3458
        %v3839 = vunpack.c.h.b16 %v3458
        %v3840 = vunpack.c.l.b16 %v3459
        %v3841 = vunpack.c.h.b16 %v3459
        %v3842 = vunpack.c.l.b16 %v3460
        %v3843 = vunpack.c.h.b16 %v3460
        %v3844 = vunpack.c.l.b16 %v3461
        %v3845 = vunpack.c.h.b16 %v3461
        %v3846 = vunpack.c.l.b16 %v3462
        %v3847 = vunpack.c.h.b16 %v3462
        %v3848 = vunpack.c.l.b16 %v3463
        %v3849 = vunpack.c.h.b16 %v3463
        %v3850 = vunpack.c.l.b16 %v3464
        %v3851 = vunpack.c.h.b16 %v3464
        %v3852 = vunpack.c.l.b16 %v3465
        %v3853 = vunpack.c.h.b16 %v3465
        %v3854 = vunpack.c.l.b16 %v3466
        %v3855 = vunpack.c.h.b16 %v3466
        %v3856 = vunpack.c.l.b16 %v3467
        %v3857 = vunpack.c.h.b16 %v3467
        %v3858 = vunpack.c.l.b16 %v3468
        %v3859 = vunpack.c.h.b16 %v3468
        %v3860 = vunpack.c.l.b16 %v3469
        %v3861 = vunpack.c.h.b16 %v3469
        %v3862 = vunpack.c.l.b16 %v3470
        %v3863 = vunpack.c.h.b16 %v3470
        %v3864 = vunpack.c.l.b16 %v3471
        %v3865 = vunpack.c.h.b16 %v3471
        %v3866 = vunpack.c.l.b16 %v3472
        %v3867 = vunpack.c.h.b16 %v3472
        %v3868 = vunpack.c.l.b16 %v3473
        %v3869 = vunpack.c.h.b16 %v3473
        %v3870 = vpack.c.b16 %v3616, %v3614
        %v3871 = vpack.c.b16 %v3617, %v3615
        %v3872 = vpack.c.b16 %v3620, %v3618
        %v3873 = vpack.c.b16 %v3621, %v3619
        %v3874 = vpack.c.b16 %v3624, %v3622
        %v3875 = vpack.c.b16 %v3625, %v3623
        %v3876 = vpack.c.b16 %v3628, %v3626
        %v3877 = vpack.c.b16 %v3629, %v3627
        %v3878 = vpack.c.b16 %v3632, %v3630
        %v3879 = vpack.c.b16 %v3633, %v3631
        %v3880 = vpack.c.b16 %v3636, %v3634
        %v3881 = vpack.c.b16 %v3637, %v3635
        %v3882 = vpack.c.b16 %v3640, %v3638
        %v3883 = vpack.c.b16 %v3641, %v3639
        %v3884 = vpack.c.b16 %v3644, %v3642
        %v3885 = vpack.c.b16 %v3645, %v3643
        %v3886 = vpack.c.b16 %v3648, %v3646
        %v3887 = vpack.c.b16 %v3649, %v3647
        %v3888 = vpack.c.b16 %v3652, %v3650
        %v3889 = vpack.c.b16 %v3653, %v3651
        %v3890 = vpack.c.b16 %v3656, %v3654
        %v3891 = vpack.c.b16 %v3657, %v3655
        %v3892 = vpack.c.b16 %v3660, %v3658
        %v3893 = vpack.c.b16 %v3661, %v3659
        %v3894 = vpack.c.b16 %v3664, %v3662
        %v3895 = vpack.c.b16 %v3665, %v3663
        %v3896 = vpack.c.b16 %v3668, %v3666
        %v3897 = vpack.c.b16 %v3669, %v3667
        %v3898 = vpack.c.b16 %v3672, %v3670
        %v3899 = vpack.c.b16 %v3673, %v3671
        %v3900 = vpack.c.b16 %v3676, %v3674
        %v3901 = vpack.c.b16 %v3677, %v3675
        %v3902 = vpack.c.b16 %v3680, %v3678
        %v3903 = vpack.c.b16 %v3681, %v3679
        %v3904 = vpack.c.b16 %v3684, %v3682
        %v3905 = vpack.c.b16 %v3685, %v3683
        %v3906 = vpack.c.b16 %v3688, %v3686
        %v3907 = vpack.c.b16 %v3689, %v3687
        %v3908 = vpack.c.b16 %v3692, %v3690
        %v3909 = vpack.c.b16 %v3693, %v3691
        %v3910 = vpack.c.b16 %v3696, %v3694
        %v3911 = vpack.c.b16 %v3697, %v3695
        %v3912 = vpack.c.b16 %v3700, %v3698
        %v3913 = vpack.c.b16 %v3701, %v3699
        %v3914 = vpack.c.b16 %v3704, %v3702
        %v3915 = vpack.c.b16 %v3705, %v3703
        %v3916 = vpack.c.b16 %v3708, %v3706
        %v3917 = vpack.c.b16 %v3709, %v3707
        %v3918 = vpack.c.b16 %v3712, %v3710
        %v3919 = vpack.c.b16 %v3713, %v3711
        %v3920 = vpack.c.b16 %v3716, %v3714
        %v3921 = vpack.c.b16 %v3717, %v3715
        %v3922 = vpack.c.b16 %v3720, %v3718
        %v3923 = vpack.c.b16 %v3721, %v3719
        %v3924 = vpack.c.b16 %v3724, %v3722
        %v3925 = vpack.c.b16 %v3725, %v3723
        %v3926 = vpack.c.b16 %v3728, %v3726
        %v3927 = vpack.c.b16 %v3729, %v3727
        %v3928 = vpack.c.b16 %v3732, %v3730
        %v3929 = vpack.c.b16 %v3733, %v3731
        %v3930 = vpack.c.b16 %v3736, %v3734
        %v3931 = vpack.c.b16 %v3737, %v3735
        %v3932 = vpack.c.b16 %v3740, %v3738
        %v3933 = vpack.c.b16 %v3741, %v3739
        %v3934 = vpack.c.b16 %v3744, %v3742
        %v3935 = vpack.c.b16 %v3745, %v3743
        %v3936 = vpack.c.b16 %v3748, %v3746
        %v3937 = vpack.c.b16 %v3749, %v3747
        %v3938 = vpack.c.b16 %v3752, %v3750
        %v3939 = vpack.c.b16 %v3753, %v3751
        %v3940 = vpack.c.b16 %v3756, %v3754
        %v3941 = vpack.c.b16 %v3757, %v3755
        %v3942 = vpack.c.b16 %v3760, %v3758
        %v3943 = vpack.c.b16 %v3761, %v3759
        %v3944 = vpack.c.b16 %v3764, %v3762
        %v3945 = vpack.c.b16 %v3765, %v3763
        %v3946 = vpack.c.b16 %v3768, %v3766
        %v3947 = vpack.c.b16 %v3769, %v3767
        %v3948 = vpack.c.b16 %v3772, %v3770
        %v3949 = vpack.c.b16 %v3773, %v3771
        %v3950 = vpack.c.b16 %v3776, %v3774
        %v3951 = vpack.c.b16 %v3777, %v3775
        %v3952 = vpack.c.b16 %v3780, %v3778
        %v3953 = vpack.c.b16 %v3781, %v3779
        %v3954 = vpack.c.b16 %v3784, %v3782
        %v3955 = vpack.c.b16 %v3785, %v3783
        %v3956 = vpack.c.b16 %v3788, %v3786
        %v3957 = vpack.c.b16 %v3789, %v3787
        %v3958 = vpack.c.b16 %v3792, %v3790
        %v3959 = vpack.c.b16 %v3793, %v3791
        %v3960 = vpack.c.b16 %v3796, %v3794
        %v3961 = vpack.c.b16 %v3797, %v3795
        %v3962 = vpack.c.b16 %v3800, %v3798
        %v3963 = vpack.c.b16 %v3801, %v3799
        %v3964 = vpack.c.b16 %v3804, %v3802
        %v3965 = vpack.c.b16 %v3805, %v3803
        %v3966 = vpack.c.b16 %v3808, %v3806
        %v3967 = vpack.c.b16 %v3809, %v3807
        %v3968 = vpack.c.b16 %v3812, %v3810
        %v3969 = vpack.c.b16 %v3813, %v3811
        %v3970 = vpack.c.b16 %v3816, %v3814
        %v3971 = vpack.c.b16 %v3817, %v3815
        %v3972 = vpack.c.b16 %v3820, %v3818
        %v3973 = vpack.c.b16 %v3821, %v3819
        %v3974 = vpack.c.b16 %v3824, %v3822
        %v3975 = vpack.c.b16 %v3825, %v3823
        %v3976 = vpack.c.b16 %v3828, %v3826
        %v3977 = vpack.c.b16 %v3829, %v3827
        %v3978 = vpack.c.b16 %v3832, %v3830
        %v3979 = vpack.c.b16 %v3833, %v3831
        %v3980 = vpack.c.b16 %v3836, %v3834
        %v3981 = vpack.c.b16 %v3837, %v3835
        %v3982 = vpack.c.b16 %v3840, %v3838
        %v3983 = vpack.c.b16 %v3841, %v3839
        %v3984 = vpack.c.b16 %v3844, %v3842
        %v3985 = vpack.c.b16 %v3845, %v3843
        %v3986 = vpack.c.b16 %v3848, %v3846
        %v3987 = vpack.c.b16 %v3849, %v3847
        %v3988 = vpack.c.b16 %v3852, %v3850
        %v3989 = vpack.c.b16 %v3853, %v3851
        %v3990 = vpack.c.b16 %v3856, %v3854
        %v3991 = vpack.c.b16 %v3857, %v3855
        %v3992 = vpack.c.b16 %v3860, %v3858
        %v3993 = vpack.c.b16 %v3861, %v3859
        %v3994 = vpack.c.b16 %v3864, %v3862
        %v3995 = vpack.c.b16 %v3865, %v3863
        %v3996 = vpack.c.b16 %v3868, %v3866
        %v3997 = vpack.c.b16 %v3869, %v3867
        %4126 = vmatprep.subr.bf16.mxu0 %v3871
        %4127 = vmatpush1.bf16.msra.mxu0 %v3870
        %4128 = vmatprep.subr.bf16.mxu0 %v3873
        %4129 = vmatpush1.bf16.msra.mxu0 %v3872
        %4130 = vmatprep.subr.bf16.mxu0 %v3875
        %4131 = vmatpush1.bf16.msra.mxu0 %v3874
        %4132 = vmatprep.subr.bf16.mxu0 %v3877
        %4133 = vmatpush1.bf16.msra.mxu0 %v3876
        %4134 = vmatprep.subr.bf16.mxu0 %v3879
        %4135 = vmatpush1.bf16.msra.mxu0 %v3878
        %4136 = vmatprep.subr.bf16.mxu0 %v3881
        %4137 = vmatpush1.bf16.msra.mxu0 %v3880
        %4138 = vmatprep.subr.bf16.mxu0 %v3883
        %4139 = vmatpush1.bf16.msra.mxu0 %v3882
        %4140 = vmatprep.subr.bf16.mxu0 %v3885
        %4141 = vmatpush1.bf16.msra.mxu0 %v3884
        %4142 = vmatprep.subr.bf16.mxu0 %v3887
        %4143 = vmatpush1.bf16.msra.mxu0 %v3886
        %4144 = vmatprep.subr.bf16.mxu0 %v3889
        %4145 = vmatpush1.bf16.msra.mxu0 %v3888
        %4146 = vmatprep.subr.bf16.mxu0 %v3891
        %4147 = vmatpush1.bf16.msra.mxu0 %v3890
        %4148 = vmatprep.subr.bf16.mxu0 %v3893
        %4149 = vmatpush1.bf16.msra.mxu0 %v3892
        %4150 = vmatprep.subr.bf16.mxu0 %v3895
        %4151 = vmatpush1.bf16.msra.mxu0 %v3894
        %4152 = vmatprep.subr.bf16.mxu0 %v3897
        %4153 = vmatpush1.bf16.msra.mxu0 %v3896
        %4154 = vmatprep.subr.bf16.mxu0 %v3899
        %4155 = vmatpush1.bf16.msra.mxu0 %v3898
        %4156 = vmatprep.subr.bf16.mxu0 %v3901
        %4157 = vmatpush1.bf16.msra.mxu0 %v3900
        %4158 = vmatprep.mubr.bf16.mxu0 %v3219
        %4159 = vmatmul.mubr.bf16.gmra.mrb[0].mxu0 %v3218
        %v4160 = vpop.f32.mrb[0].mxu0
        %v4161 = vadd.f32 %v3479, %v4160
        %v4162 = vpop.f32.mrb[0].mxu0
        %v4163 = vadd.f32 %v3483, %v4162
        %v4164 = vpop.f32.mrb[0].mxu0
        %v4165 = vadd.f32 %v3479, %v4164
        %v4166 = vpop.f32.mrb[0].mxu0
        %v4167 = vadd.f32 %v3483, %v4166
        %4168 = vmatprep.mubr.bf16.mxu0 %v3227
        %4169 = vmatmul.mubr.bf16.gmra.mrb[0].mxu0 %v3226
        %v4170 = vpop.f32.mrb[0].mxu0
        %v4171 = vadd.f32 %v3479, %v4170
        %v4172 = vpop.f32.mrb[0].mxu0
        %v4173 = vadd.f32 %v3483, %v4172
        %v4174 = vpop.f32.mrb[0].mxu0
        %v4175 = vadd.f32 %v3479, %v4174
        %v4176 = vpop.f32.mrb[0].mxu0
        %v4177 = vadd.f32 %v3483, %v4176
        %4178 = vmatprep.mubr.bf16.mxu0 %v3235
        %4179 = vmatmul.mubr.bf16.gmra.mrb[0].mxu0 %v3234
        %v4180 = vpop.f32.mrb[0].mxu0
        %v4181 = vadd.f32 %v3479, %v4180
        %v4182 = vpop.f32.mrb[0].mxu0
        %v4183 = vadd.f32 %v3483, %v4182
        %v4184 = vpop.f32.mrb[0].mxu0
        %v4185 = vadd.f32 %v3479, %v4184
        %v4186 = vpop.f32.mrb[0].mxu0
        %v4187 = vadd.f32 %v3483, %v4186
        %4188 = vmatprep.mubr.bf16.mxu0 %v3243
        %4189 = vmatmul.mubr.bf16.gmra.mrb[0].mxu0 %v3242
        %v4190 = vpop.f32.mrb[0].mxu0
        %v4191 = vadd.f32 %v3479, %v4190
        %v4192 = vpop.f32.mrb[0].mxu0
        %v4193 = vadd.f32 %v3483, %v4192
        %v4194 = vpop.f32.mrb[0].mxu0
        %v4195 = vadd.f32 %v3479, %v4194
        %v4196 = vpop.f32.mrb[0].mxu0
        %v4197 = vadd.f32 %v3483, %v4196
        %4198 = vmatprep.mubr.bf16.mxu0 %v3251
        %4199 = vmatmul.mubr.bf16.gmra.mrb[0].mxu0 %v3250
        %v4200 = vpop.f32.mrb[0].mxu0
        %v4201 = vadd.f32 %v3479, %v4200
        %v4202 = vpop.f32.mrb[0].mxu0
        %v4203 = vadd.f32 %v3483, %v4202
        %v4204 = vpop.f32.mrb[0].mxu0
        %v4205 = vadd.f32 %v3479, %v4204
        %v4206 = vpop.f32.mrb[0].mxu0
        %v4207 = vadd.f32 %v3483, %v4206
        %4208 = vmatprep.mubr.bf16.mxu0 %v3259
        %4209 = vmatmul.mubr.bf16.gmra.mrb[0].mxu0 %v3258
        %v4210 = vpop.f32.mrb[0].mxu0
        %v4211 = vadd.f32 %v3479, %v4210
        %v4212 = vpop.f32.mrb[0].mxu0
        %v4213 = vadd.f32 %v3483, %v4212
        %v4214 = vpop.f32.mrb[0].mxu0
        %v4215 = vadd.f32 %v3479, %v4214
        %v4216 = vpop.f32.mrb[0].mxu0
        %v4217 = vadd.f32 %v3483, %v4216
        %4218 = vmatprep.mubr.bf16.mxu0 %v3267
        %4219 = vmatmul.mubr.bf16.gmra.mrb[0].mxu0 %v3266
        %v4220 = vpop.f32.mrb[0].mxu0
        %v4221 = vadd.f32 %v3479, %v4220
        %v4222 = vpop.f32.mrb[0].mxu0
        %v4223 = vadd.f32 %v3483, %v4222
        %v4224 = vpop.f32.mrb[0].mxu0
        %v4225 = vadd.f32 %v3479, %v4224
        %v4226 = vpop.f32.mrb[0].mxu0
        %v4227 = vadd.f32 %v3483, %v4226
        %4228 = vmatprep.mubr.bf16.mxu0 %v3275
        %4229 = vmatmul.mubr.bf16.gmra.mrb[0].mxu0 %v3274
        %v4230 = vpop.f32.mrb[0].mxu0
        %v4231 = vadd.f32 %v3479, %v4230
        %v4232 = vpop.f32.mrb[0].mxu0
        %v4233 = vadd.f32 %v3483, %v4232
        %v4234 = vpop.f32.mrb[0].mxu0
        %v4235 = vadd.f32 %v3479, %v4234
        %v4236 = vpop.f32.mrb[0].mxu0
        %v4237 = vadd.f32 %v3483, %v4236
        %4238 = vmatprep.mubr.bf16.mxu0 %v3283
        %4239 = vmatmul.mubr.bf16.gmra.mrb[0].mxu0 %v3282
        %v4240 = vpop.f32.mrb[0].mxu0
        %v4241 = vadd.f32 %v3479, %v4240
        %v4242 = vpop.f32.mrb[0].mxu0
        %v4243 = vadd.f32 %v3483, %v4242
        %v4244 = vpop.f32.mrb[0].mxu0
        %v4245 = vadd.f32 %v3479, %v4244
        %v4246 = vpop.f32.mrb[0].mxu0
        %v4247 = vadd.f32 %v3483, %v4246
        %4248 = vmatprep.mubr.bf16.mxu0 %v3291
        %4249 = vmatmul.mubr.bf16.gmra.mrb[0].mxu0 %v3290
        %v4250 = vpop.f32.mrb[0].mxu0
        %v4251 = vadd.f32 %v3479, %v4250
        %v4252 = vpop.f32.mrb[0].mxu0
        %v4253 = vadd.f32 %v3483, %v4252
        %v4254 = vpop.f32.mrb[0].mxu0
        %v4255 = vadd.f32 %v3479, %v4254
        %v4256 = vpop.f32.mrb[0].mxu0
        %v4257 = vadd.f32 %v3483, %v4256
        %4258 = vmatprep.mubr.bf16.mxu0 %v3299
        %4259 = vmatmul.mubr.bf16.gmra.mrb[0].mxu0 %v3298
        %v4260 = vpop.f32.mrb[0].mxu0
        %v4261 = vadd.f32 %v3479, %v4260
        %v4262 = vpop.f32.mrb[0].mxu0
        %v4263 = vadd.f32 %v3483, %v4262
        %v4264 = vpop.f32.mrb[0].mxu0
        %v4265 = vadd.f32 %v3479, %v4264
        %v4266 = vpop.f32.mrb[0].mxu0
        %v4267 = vadd.f32 %v3483, %v4266
        %4268 = vmatprep.mubr.bf16.mxu0 %v3307
        %4269 = vmatmul.mubr.bf16.gmra.mrb[0].mxu0 %v3306
        %v4270 = vpop.f32.mrb[0].mxu0
        %v4271 = vadd.f32 %v3479, %v4270
        %v4272 = vpop.f32.mrb[0].mxu0
        %v4273 = vadd.f32 %v3483, %v4272
        %v4274 = vpop.f32.mrb[0].mxu0
        %v4275 = vadd.f32 %v3479, %v4274
        %v4276 = vpop.f32.mrb[0].mxu0
        %v4277 = vadd.f32 %v3483, %v4276
        %4278 = vmatprep.mubr.bf16.mxu0 %v3315
        %4279 = vmatmul.mubr.bf16.gmra.mrb[0].mxu0 %v3314
        %v4280 = vpop.f32.mrb[0].mxu0
        %v4281 = vadd.f32 %v3479, %v4280
        %v4282 = vpop.f32.mrb[0].mxu0
        %v4283 = vadd.f32 %v3483, %v4282
        %v4284 = vpop.f32.mrb[0].mxu0
        %v4285 = vadd.f32 %v3479, %v4284
        %v4286 = vpop.f32.mrb[0].mxu0
        %v4287 = vadd.f32 %v3483, %v4286
        %4288 = vmatprep.mubr.bf16.mxu0 %v3323
        %4289 = vmatmul.mubr.bf16.gmra.mrb[0].mxu0 %v3322
        %v4290 = vpop.f32.mrb[0].mxu0
        %v4291 = vadd.f32 %v3479, %v4290
        %v4292 = vpop.f32.mrb[0].mxu0
        %v4293 = vadd.f32 %v3483, %v4292
        %v4294 = vpop.f32.mrb[0].mxu0
        %v4295 = vadd.f32 %v3479, %v4294
        %v4296 = vpop.f32.mrb[0].mxu0
        %v4297 = vadd.f32 %v3483, %v4296
        %4298 = vmatprep.mubr.bf16.mxu0 %v3331
        %4299 = vmatmul.mubr.bf16.gmra.mrb[0].mxu0 %v3330
        %v4300 = vpop.f32.mrb[0].mxu0
        %v4301 = vadd.f32 %v3479, %v4300
        %v4302 = vpop.f32.mrb[0].mxu0
        %v4303 = vadd.f32 %v3483, %v4302
        %v4304 = vpop.f32.mrb[0].mxu0
        %v4305 = vadd.f32 %v3479, %v4304
        %v4306 = vpop.f32.mrb[0].mxu0
        %v4307 = vadd.f32 %v3483, %v4306
        %4308 = vmatprep.mubr.bf16.mxu0 %v3339
        %4309 = vmatmul.mubr.bf16.gmra.mrb[0].mxu0 %v3338
        %v4310 = vpop.f32.mrb[0].mxu0
        %v4311 = vadd.f32 %v3479, %v4310
        %v4312 = vpop.f32.mrb[0].mxu0
        %v4313 = vadd.f32 %v3483, %v4312
        %v4314 = vpop.f32.mrb[0].mxu0
        %v4315 = vadd.f32 %v3479, %v4314
        %v4316 = vpop.f32.mrb[0].mxu0
        %v4317 = vadd.f32 %v3483, %v4316
        %4318 = vdwg.mxu0
        %4319 = vmatprep.subr.bf16.mxu0 %v3903
        %4320 = vmatpush1.bf16.msra.mxu0 %v3902
        %4321 = vmatprep.subr.bf16.mxu0 %v3905
        %4322 = vmatpush1.bf16.msra.mxu0 %v3904
        %4323 = vmatprep.subr.bf16.mxu0 %v3907
        %4324 = vmatpush1.bf16.msra.mxu0 %v3906
        %4325 = vmatprep.subr.bf16.mxu0 %v3909
        %4326 = vmatpush1.bf16.msra.mxu0 %v3908
        %4327 = vmatprep.subr.bf16.mxu0 %v3911
        %4328 = vmatpush1.bf16.msra.mxu0 %v3910
        %4329 = vmatprep.subr.bf16.mxu0 %v3913
        %4330 = vmatpush1.bf16.msra.mxu0 %v3912
        %4331 = vmatprep.subr.bf16.mxu0 %v3915
        %4332 = vmatpush1.bf16.msra.mxu0 %v3914
        %4333 = vmatprep.subr.bf16.mxu0 %v3917
        %4334 = vmatpush1.bf16.msra.mxu0 %v3916
        %4335 = vmatprep.subr.bf16.mxu0 %v3919
        %4336 = vmatpush1.bf16.msra.mxu0 %v3918
        %4337 = vmatprep.subr.bf16.mxu0 %v3921
        %4338 = vmatpush1.bf16.msra.mxu0 %v3920
        %4339 = vmatprep.subr.bf16.mxu0 %v3923
        %4340 = vmatpush1.bf16.msra.mxu0 %v3922
        %4341 = vmatprep.subr.bf16.mxu0 %v3925
        %4342 = vmatpush1.bf16.msra.mxu0 %v3924
        %4343 = vmatprep.subr.bf16.mxu0 %v3927
        %4344 = vmatpush1.bf16.msra.mxu0 %v3926
        %4345 = vmatprep.subr.bf16.mxu0 %v3929
        %4346 = vmatpush1.bf16.msra.mxu0 %v3928
        %4347 = vmatprep.subr.bf16.mxu0 %v3931
        %4348 = vmatpush1.bf16.msra.mxu0 %v3930
        %4349 = vmatprep.subr.bf16.mxu0 %v3933
        %4350 = vmatpush1.bf16.msra.mxu0 %v3932
        %4351 = vmatprep.mubr.bf16.mxu0 %v3221
        %4352 = vmatmul.mubr.bf16.gmra.mrb[0].mxu0 %v3220
        %v4353 = vpop.f32.mrb[0].mxu0
        %v4354 = vadd.f32 %v4161, %v4353
        %v4355 = vpop.f32.mrb[0].mxu0
        %v4356 = vadd.f32 %v4163, %v4355
        %v4357 = vpop.f32.mrb[0].mxu0
        %v4358 = vadd.f32 %v4165, %v4357
        %v4359 = vpop.f32.mrb[0].mxu0
        %v4360 = vadd.f32 %v4167, %v4359
        %4361 = vmatprep.mubr.bf16.mxu0 %v3229
        %4362 = vmatmul.mubr.bf16.gmra.mrb[0].mxu0 %v3228
        %v4363 = vpop.f32.mrb[0].mxu0
        %v4364 = vadd.f32 %v4171, %v4363
        %v4365 = vpop.f32.mrb[0].mxu0
        %v4366 = vadd.f32 %v4173, %v4365
        %v4367 = vpop.f32.mrb[0].mxu0
        %v4368 = vadd.f32 %v4175, %v4367
        %v4369 = vpop.f32.mrb[0].mxu0
        %v4370 = vadd.f32 %v4177, %v4369
        %4371 = vmatprep.mubr.bf16.mxu0 %v3237
        %4372 = vmatmul.mubr.bf16.gmra.mrb[0].mxu0 %v3236
        %v4373 = vpop.f32.mrb[0].mxu0
        %v4374 = vadd.f32 %v4181, %v4373
        %v4375 = vpop.f32.mrb[0].mxu0
        %v4376 = vadd.f32 %v4183, %v4375
        %v4377 = vpop.f32.mrb[0].mxu0
        %v4378 = vadd.f32 %v4185, %v4377
        %v4379 = vpop.f32.mrb[0].mxu0
        %v4380 = vadd.f32 %v4187, %v4379
        %4381 = vmatprep.mubr.bf16.mxu0 %v3245
        %4382 = vmatmul.mubr.bf16.gmra.mrb[0].mxu0 %v3244
        %v4383 = vpop.f32.mrb[0].mxu0
        %v4384 = vadd.f32 %v4191, %v4383
        %v4385 = vpop.f32.mrb[0].mxu0
        %v4386 = vadd.f32 %v4193, %v4385
        %v4387 = vpop.f32.mrb[0].mxu0
        %v4388 = vadd.f32 %v4195, %v4387
        %v4389 = vpop.f32.mrb[0].mxu0
        %v4390 = vadd.f32 %v4197, %v4389
        %4391 = vmatprep.mubr.bf16.mxu0 %v3253
        %4392 = vmatmul.mubr.bf16.gmra.mrb[0].mxu0 %v3252
        %v4393 = vpop.f32.mrb[0].mxu0
        %v4394 = vadd.f32 %v4201, %v4393
        %v4395 = vpop.f32.mrb[0].mxu0
        %v4396 = vadd.f32 %v4203, %v4395
        %v4397 = vpop.f32.mrb[0].mxu0
        %v4398 = vadd.f32 %v4205, %v4397
        %v4399 = vpop.f32.mrb[0].mxu0
        %v4400 = vadd.f32 %v4207, %v4399
        %4401 = vmatprep.mubr.bf16.mxu0 %v3261
        %4402 = vmatmul.mubr.bf16.gmra.mrb[0].mxu0 %v3260
        %v4403 = vpop.f32.mrb[0].mxu0
        %v4404 = vadd.f32 %v4211, %v4403
        %v4405 = vpop.f32.mrb[0].mxu0
        %v4406 = vadd.f32 %v4213, %v4405
        %v4407 = vpop.f32.mrb[0].mxu0
        %v4408 = vadd.f32 %v4215, %v4407
        %v4409 = vpop.f32.mrb[0].mxu0
        %v4410 = vadd.f32 %v4217, %v4409
        %4411 = vmatprep.mubr.bf16.mxu0 %v3269
        %4412 = vmatmul.mubr.bf16.gmra.mrb[0].mxu0 %v3268
        %v4413 = vpop.f32.mrb[0].mxu0
        %v4414 = vadd.f32 %v4221, %v4413
        %v4415 = vpop.f32.mrb[0].mxu0
        %v4416 = vadd.f32 %v4223, %v4415
        %v4417 = vpop.f32.mrb[0].mxu0
        %v4418 = vadd.f32 %v4225, %v4417
        %v4419 = vpop.f32.mrb[0].mxu0
        %v4420 = vadd.f32 %v4227, %v4419
        %4421 = vmatprep.mubr.bf16.mxu0 %v3277
        %4422 = vmatmul.mubr.bf16.gmra.mrb[0].mxu0 %v3276
        %v4423 = vpop.f32.mrb[0].mxu0
        %v4424 = vadd.f32 %v4231, %v4423
        %v4425 = vpop.f32.mrb[0].mxu0
        %v4426 = vadd.f32 %v4233, %v4425
        %v4427 = vpop.f32.mrb[0].mxu0
        %v4428 = vadd.f32 %v4235, %v4427
        %v4429 = vpop.f32.mrb[0].mxu0
        %v4430 = vadd.f32 %v4237, %v4429
        %4431 = vmatprep.mubr.bf16.mxu0 %v3285
        %4432 = vmatmul.mubr.bf16.gmra.mrb[0].mxu0 %v3284
        %v4433 = vpop.f32.mrb[0].mxu0
        %v4434 = vadd.f32 %v4241, %v4433
        %v4435 = vpop.f32.mrb[0].mxu0
        %v4436 = vadd.f32 %v4243, %v4435
        %v4437 = vpop.f32.mrb[0].mxu0
        %v4438 = vadd.f32 %v4245, %v4437
        %v4439 = vpop.f32.mrb[0].mxu0
        %v4440 = vadd.f32 %v4247, %v4439
        %4441 = vmatprep.mubr.bf16.mxu0 %v3293
        %4442 = vmatmul.mubr.bf16.gmra.mrb[0].mxu0 %v3292
        %v4443 = vpop.f32.mrb[0].mxu0
        %v4444 = vadd.f32 %v4251, %v4443
        %v4445 = vpop.f32.mrb[0].mxu0
        %v4446 = vadd.f32 %v4253, %v4445
        %v4447 = vpop.f32.mrb[0].mxu0
        %v4448 = vadd.f32 %v4255, %v4447
        %v4449 = vpop.f32.mrb[0].mxu0
        %v4450 = vadd.f32 %v4257, %v4449
        %4451 = vmatprep.mubr.bf16.mxu0 %v3301
        %4452 = vmatmul.mubr.bf16.gmra.mrb[0].mxu0 %v3300
        %v4453 = vpop.f32.mrb[0].mxu0
        %v4454 = vadd.f32 %v4261, %v4453
        %v4455 = vpop.f32.mrb[0].mxu0
        %v4456 = vadd.f32 %v4263, %v4455
        %v4457 = vpop.f32.mrb[0].mxu0
        %v4458 = vadd.f32 %v4265, %v4457
        %v4459 = vpop.f32.mrb[0].mxu0
        %v4460 = vadd.f32 %v4267, %v4459
        %4461 = vmatprep.mubr.bf16.mxu0 %v3309
        %4462 = vmatmul.mubr.bf16.gmra.mrb[0].mxu0 %v3308
        %v4463 = vpop.f32.mrb[0].mxu0
        %v4464 = vadd.f32 %v4271, %v4463
        %v4465 = vpop.f32.mrb[0].mxu0
        %v4466 = vadd.f32 %v4273, %v4465
        %v4467 = vpop.f32.mrb[0].mxu0
        %v4468 = vadd.f32 %v4275, %v4467
        %v4469 = vpop.f32.mrb[0].mxu0
        %v4470 = vadd.f32 %v4277, %v4469
        %4471 = vmatprep.mubr.bf16.mxu0 %v3317
        %4472 = vmatmul.mubr.bf16.gmra.mrb[0].mxu0 %v3316
        %v4473 = vpop.f32.mrb[0].mxu0
        %v4474 = vadd.f32 %v4281, %v4473
        %v4475 = vpop.f32.mrb[0].mxu0
        %v4476 = vadd.f32 %v4283, %v4475
        %v4477 = vpop.f32.mrb[0].mxu0
        %v4478 = vadd.f32 %v4285, %v4477
        %v4479 = vpop.f32.mrb[0].mxu0
        %v4480 = vadd.f32 %v4287, %v4479
        %4481 = vmatprep.mubr.bf16.mxu0 %v3325
        %4482 = vmatmul.mubr.bf16.gmra.mrb[0].mxu0 %v3324
        %v4483 = vpop.f32.mrb[0].mxu0
        %v4484 = vadd.f32 %v4291, %v4483
        %v4485 = vpop.f32.mrb[0].mxu0
        %v4486 = vadd.f32 %v4293, %v4485
        %v4487 = vpop.f32.mrb[0].mxu0
        %v4488 = vadd.f32 %v4295, %v4487
        %v4489 = vpop.f32.mrb[0].mxu0
        %v4490 = vadd.f32 %v4297, %v4489
        %4491 = vmatprep.mubr.bf16.mxu0 %v3333
        %4492 = vmatmul.mubr.bf16.gmra.mrb[0].mxu0 %v3332
        %v4493 = vpop.f32.mrb[0].mxu0
        %v4494 = vadd.f32 %v4301, %v4493
        %v4495 = vpop.f32.mrb[0].mxu0
        %v4496 = vadd.f32 %v4303, %v4495
        %v4497 = vpop.f32.mrb[0].mxu0
        %v4498 = vadd.f32 %v4305, %v4497
        %v4499 = vpop.f32.mrb[0].mxu0
        %v4500 = vadd.f32 %v4307, %v4499
        %4501 = vmatprep.mubr.bf16.mxu0 %v3341
        %4502 = vmatmul.mubr.bf16.gmra.mrb[0].mxu0 %v3340
        %v4503 = vpop.f32.mrb[0].mxu0
        %v4504 = vadd.f32 %v4311, %v4503
        %v4505 = vpop.f32.mrb[0].mxu0
        %v4506 = vadd.f32 %v4313, %v4505
        %v4507 = vpop.f32.mrb[0].mxu0
        %v4508 = vadd.f32 %v4315, %v4507
        %v4509 = vpop.f32.mrb[0].mxu0
        %v4510 = vadd.f32 %v4317, %v4509
        %4511 = vdwg.mxu0
        %4512 = vmatprep.subr.bf16.mxu0 %v3935
        %4513 = vmatpush1.bf16.msra.mxu0 %v3934
        %4514 = vmatprep.subr.bf16.mxu0 %v3937
        %4515 = vmatpush1.bf16.msra.mxu0 %v3936
        %4516 = vmatprep.subr.bf16.mxu0 %v3939
        %4517 = vmatpush1.bf16.msra.mxu0 %v3938
        %4518 = vmatprep.subr.bf16.mxu0 %v3941
        %4519 = vmatpush1.bf16.msra.mxu0 %v3940
        %4520 = vmatprep.subr.bf16.mxu0 %v3943
        %4521 = vmatpush1.bf16.msra.mxu0 %v3942
        %4522 = vmatprep.subr.bf16.mxu0 %v3945
        %4523 = vmatpush1.bf16.msra.mxu0 %v3944
        %4524 = vmatprep.subr.bf16.mxu0 %v3947
        %4525 = vmatpush1.bf16.msra.mxu0 %v3946
        %4526 = vmatprep.subr.bf16.mxu0 %v3949
        %4527 = vmatpush1.bf16.msra.mxu0 %v3948
        %4528 = vmatprep.subr.bf16.mxu0 %v3951
        %4529 = vmatpush1.bf16.msra.mxu0 %v3950
        %4530 = vmatprep.subr.bf16.mxu0 %v3953
        %4531 = vmatpush1.bf16.msra.mxu0 %v3952
        %4532 = vmatprep.subr.bf16.mxu0 %v3955
        %4533 = vmatpush1.bf16.msra.mxu0 %v3954
        %4534 = vmatprep.subr.bf16.mxu0 %v3957
        %4535 = vmatpush1.bf16.msra.mxu0 %v3956
        %4536 = vmatprep.subr.bf16.mxu0 %v3959
        %4537 = vmatpush1.bf16.msra.mxu0 %v3958
        %4538 = vmatprep.subr.bf16.mxu0 %v3961
        %4539 = vmatpush1.bf16.msra.mxu0 %v3960
        %4540 = vmatprep.subr.bf16.mxu0 %v3963
        %4541 = vmatpush1.bf16.msra.mxu0 %v3962
        %4542 = vmatprep.subr.bf16.mxu0 %v3965
        %4543 = vmatpush1.bf16.msra.mxu0 %v3964
        %4544 = vmatprep.mubr.bf16.mxu0 %v3223
        %4545 = vmatmul.mubr.bf16.gmra.mrb[0].mxu0 %v3222
        %v4546 = vpop.f32.mrb[0].mxu0
        %v4547 = vadd.f32 %v4354, %v4546
        %v4548 = vpop.f32.mrb[0].mxu0
        %v4549 = vadd.f32 %v4356, %v4548
        %v4550 = vpop.f32.mrb[0].mxu0
        %v4551 = vadd.f32 %v4358, %v4550
        %v4552 = vpop.f32.mrb[0].mxu0
        %v4553 = vadd.f32 %v4360, %v4552
        %4554 = vmatprep.mubr.bf16.mxu0 %v3231
        %4555 = vmatmul.mubr.bf16.gmra.mrb[0].mxu0 %v3230
        %v4556 = vpop.f32.mrb[0].mxu0
        %v4557 = vadd.f32 %v4364, %v4556
        %v4558 = vpop.f32.mrb[0].mxu0
        %v4559 = vadd.f32 %v4366, %v4558
        %v4560 = vpop.f32.mrb[0].mxu0
        %v4561 = vadd.f32 %v4368, %v4560
        %v4562 = vpop.f32.mrb[0].mxu0
        %v4563 = vadd.f32 %v4370, %v4562
        %4564 = vmatprep.mubr.bf16.mxu0 %v3239
        %4565 = vmatmul.mubr.bf16.gmra.mrb[0].mxu0 %v3238
        %v4566 = vpop.f32.mrb[0].mxu0
        %v4567 = vadd.f32 %v4374, %v4566
        %v4568 = vpop.f32.mrb[0].mxu0
        %v4569 = vadd.f32 %v4376, %v4568
        %v4570 = vpop.f32.mrb[0].mxu0
        %v4571 = vadd.f32 %v4378, %v4570
        %v4572 = vpop.f32.mrb[0].mxu0
        %v4573 = vadd.f32 %v4380, %v4572
        %4574 = vmatprep.mubr.bf16.mxu0 %v3247
        %4575 = vmatmul.mubr.bf16.gmra.mrb[0].mxu0 %v3246
        %v4576 = vpop.f32.mrb[0].mxu0
        %v4577 = vadd.f32 %v4384, %v4576
        %v4578 = vpop.f32.mrb[0].mxu0
        %v4579 = vadd.f32 %v4386, %v4578
        %v4580 = vpop.f32.mrb[0].mxu0
        %v4581 = vadd.f32 %v4388, %v4580
        %v4582 = vpop.f32.mrb[0].mxu0
        %v4583 = vadd.f32 %v4390, %v4582
        %4584 = vmatprep.mubr.bf16.mxu0 %v3255
        %4585 = vmatmul.mubr.bf16.gmra.mrb[0].mxu0 %v3254
        %v4586 = vpop.f32.mrb[0].mxu0
        %v4587 = vadd.f32 %v4394, %v4586
        %v4588 = vpop.f32.mrb[0].mxu0
        %v4589 = vadd.f32 %v4396, %v4588
        %v4590 = vpop.f32.mrb[0].mxu0
        %v4591 = vadd.f32 %v4398, %v4590
        %v4592 = vpop.f32.mrb[0].mxu0
        %v4593 = vadd.f32 %v4400, %v4592
        %4594 = vmatprep.mubr.bf16.mxu0 %v3263
        %4595 = vmatmul.mubr.bf16.gmra.mrb[0].mxu0 %v3262
        %v4596 = vpop.f32.mrb[0].mxu0
        %v4597 = vadd.f32 %v4404, %v4596
        %v4598 = vpop.f32.mrb[0].mxu0
        %v4599 = vadd.f32 %v4406, %v4598
        %v4600 = vpop.f32.mrb[0].mxu0
        %v4601 = vadd.f32 %v4408, %v4600
        %v4602 = vpop.f32.mrb[0].mxu0
        %v4603 = vadd.f32 %v4410, %v4602
        %4604 = vmatprep.mubr.bf16.mxu0 %v3271
        %4605 = vmatmul.mubr.bf16.gmra.mrb[0].mxu0 %v3270
        %v4606 = vpop.f32.mrb[0].mxu0
        %v4607 = vadd.f32 %v4414, %v4606
        %v4608 = vpop.f32.mrb[0].mxu0
        %v4609 = vadd.f32 %v4416, %v4608
        %v4610 = vpop.f32.mrb[0].mxu0
        %v4611 = vadd.f32 %v4418, %v4610
        %v4612 = vpop.f32.mrb[0].mxu0
        %v4613 = vadd.f32 %v4420, %v4612
        %4614 = vmatprep.mubr.bf16.mxu0 %v3279
        %4615 = vmatmul.mubr.bf16.gmra.mrb[0].mxu0 %v3278
        %v4616 = vpop.f32.mrb[0].mxu0
        %v4617 = vadd.f32 %v4424, %v4616
        %v4618 = vpop.f32.mrb[0].mxu0
        %v4619 = vadd.f32 %v4426, %v4618
        %v4620 = vpop.f32.mrb[0].mxu0
        %v4621 = vadd.f32 %v4428, %v4620
        %v4622 = vpop.f32.mrb[0].mxu0
        %v4623 = vadd.f32 %v4430, %v4622
        %4624 = vmatprep.mubr.bf16.mxu0 %v3287
        %4625 = vmatmul.mubr.bf16.gmra.mrb[0].mxu0 %v3286
        %v4626 = vpop.f32.mrb[0].mxu0
        %v4627 = vadd.f32 %v4434, %v4626
        %v4628 = vpop.f32.mrb[0].mxu0
        %v4629 = vadd.f32 %v4436, %v4628
        %v4630 = vpop.f32.mrb[0].mxu0
        %v4631 = vadd.f32 %v4438, %v4630
        %v4632 = vpop.f32.mrb[0].mxu0
        %v4633 = vadd.f32 %v4440, %v4632
        %4634 = vmatprep.mubr.bf16.mxu0 %v3295
        %4635 = vmatmul.mubr.bf16.gmra.mrb[0].mxu0 %v3294
        %v4636 = vpop.f32.mrb[0].mxu0
        %v4637 = vadd.f32 %v4444, %v4636
        %v4638 = vpop.f32.mrb[0].mxu0
        %v4639 = vadd.f32 %v4446, %v4638
        %v4640 = vpop.f32.mrb[0].mxu0
        %v4641 = vadd.f32 %v4448, %v4640
        %v4642 = vpop.f32.mrb[0].mxu0
        %v4643 = vadd.f32 %v4450, %v4642
        %4644 = vmatprep.mubr.bf16.mxu0 %v3303
        %4645 = vmatmul.mubr.bf16.gmra.mrb[0].mxu0 %v3302
        %v4646 = vpop.f32.mrb[0].mxu0
        %v4647 = vadd.f32 %v4454, %v4646
        %v4648 = vpop.f32.mrb[0].mxu0
        %v4649 = vadd.f32 %v4456, %v4648
        %v4650 = vpop.f32.mrb[0].mxu0
        %v4651 = vadd.f32 %v4458, %v4650
        %v4652 = vpop.f32.mrb[0].mxu0
        %v4653 = vadd.f32 %v4460, %v4652
        %4654 = vmatprep.mubr.bf16.mxu0 %v3311
        %4655 = vmatmul.mubr.bf16.gmra.mrb[0].mxu0 %v3310
        %v4656 = vpop.f32.mrb[0].mxu0
        %v4657 = vadd.f32 %v4464, %v4656
        %v4658 = vpop.f32.mrb[0].mxu0
        %v4659 = vadd.f32 %v4466, %v4658
        %v4660 = vpop.f32.mrb[0].mxu0
        %v4661 = vadd.f32 %v4468, %v4660
        %v4662 = vpop.f32.mrb[0].mxu0
        %v4663 = vadd.f32 %v4470, %v4662
        %4664 = vmatprep.mubr.bf16.mxu0 %v3319
        %4665 = vmatmul.mubr.bf16.gmra.mrb[0].mxu0 %v3318
        %v4666 = vpop.f32.mrb[0].mxu0
        %v4667 = vadd.f32 %v4474, %v4666
        %v4668 = vpop.f32.mrb[0].mxu0
        %v4669 = vadd.f32 %v4476, %v4668
        %v4670 = vpop.f32.mrb[0].mxu0
        %v4671 = vadd.f32 %v4478, %v4670
        %v4672 = vpop.f32.mrb[0].mxu0
        %v4673 = vadd.f32 %v4480, %v4672
        %4674 = vmatprep.mubr.bf16.mxu0 %v3327
        %4675 = vmatmul.mubr.bf16.gmra.mrb[0].mxu0 %v3326
        %v4676 = vpop.f32.mrb[0].mxu0
        %v4677 = vadd.f32 %v4484, %v4676
        %v4678 = vpop.f32.mrb[0].mxu0
        %v4679 = vadd.f32 %v4486, %v4678
        %v4680 = vpop.f32.mrb[0].mxu0
        %v4681 = vadd.f32 %v4488, %v4680
        %v4682 = vpop.f32.mrb[0].mxu0
        %v4683 = vadd.f32 %v4490, %v4682
        %4684 = vmatprep.mubr.bf16.mxu0 %v3335
        %4685 = vmatmul.mubr.bf16.gmra.mrb[0].mxu0 %v3334
        %v4686 = vpop.f32.mrb[0].mxu0
        %v4687 = vadd.f32 %v4494, %v4686
        %v4688 = vpop.f32.mrb[0].mxu0
        %v4689 = vadd.f32 %v4496, %v4688
        %v4690 = vpop.f32.mrb[0].mxu0
        %v4691 = vadd.f32 %v4498, %v4690
        %v4692 = vpop.f32.mrb[0].mxu0
        %v4693 = vadd.f32 %v4500, %v4692
        %4694 = vmatprep.mubr.bf16.mxu0 %v3343
        %4695 = vmatmul.mubr.bf16.gmra.mrb[0].mxu0 %v3342
        %v4696 = vpop.f32.mrb[0].mxu0
        %v4697 = vadd.f32 %v4504, %v4696
        %v4698 = vpop.f32.mrb[0].mxu0
        %v4699 = vadd.f32 %v4506, %v4698
        %v4700 = vpop.f32.mrb[0].mxu0
        %v4701 = vadd.f32 %v4508, %v4700
        %v4702 = vpop.f32.mrb[0].mxu0
        %v4703 = vadd.f32 %v4510, %v4702
        %4704 = vdwg.mxu0
        %4705 = vmatprep.subr.bf16.mxu0 %v3967
        %4706 = vmatpush1.bf16.msra.mxu0 %v3966
        %4707 = vmatprep.subr.bf16.mxu0 %v3969
        %4708 = vmatpush1.bf16.msra.mxu0 %v3968
        %4709 = vmatprep.subr.bf16.mxu0 %v3971
        %4710 = vmatpush1.bf16.msra.mxu0 %v3970
        %4711 = vmatprep.subr.bf16.mxu0 %v3973
        %4712 = vmatpush1.bf16.msra.mxu0 %v3972
        %4713 = vmatprep.subr.bf16.mxu0 %v3975
        %4714 = vmatpush1.bf16.msra.mxu0 %v3974
        %4715 = vmatprep.subr.bf16.mxu0 %v3977
        %4716 = vmatpush1.bf16.msra.mxu0 %v3976
        %4717 = vmatprep.subr.bf16.mxu0 %v3979
        %4718 = vmatpush1.bf16.msra.mxu0 %v3978
        %4719 = vmatprep.subr.bf16.mxu0 %v3981
        %4720 = vmatpush1.bf16.msra.mxu0 %v3980
        %4721 = vmatprep.subr.bf16.mxu0 %v3983
        %4722 = vmatpush1.bf16.msra.mxu0 %v3982
        %4723 = vmatprep.subr.bf16.mxu0 %v3985
        %4724 = vmatpush1.bf16.msra.mxu0 %v3984
        %4725 = vmatprep.subr.bf16.mxu0 %v3987
        %4726 = vmatpush1.bf16.msra.mxu0 %v3986
        %4727 = vmatprep.subr.bf16.mxu0 %v3989
        %4728 = vmatpush1.bf16.msra.mxu0 %v3988
        %4729 = vmatprep.subr.bf16.mxu0 %v3991
        %4730 = vmatpush1.bf16.msra.mxu0 %v3990
        %4731 = vmatprep.subr.bf16.mxu0 %v3993
        %4732 = vmatpush1.bf16.msra.mxu0 %v3992
        %4733 = vmatprep.subr.bf16.mxu0 %v3995
        %4734 = vmatpush1.bf16.msra.mxu0 %v3994
        %4735 = vmatprep.subr.bf16.mxu0 %v3997
        %4736 = vmatpush1.bf16.msra.mxu0 %v3996
        %4737 = vmatprep.mubr.bf16.mxu0 %v3225
        %4738 = vmatmul.mubr.bf16.gmra.mrb[0].mxu0 %v3224
        %v4739 = vpop.f32.mrb[0].mxu0
        %v4740 = vadd.f32 %v4547, %v4739
        %v4741 = vpop.f32.mrb[0].mxu0
        %v4742 = vadd.f32 %v4549, %v4741
        %v4743 = vpop.f32.mrb[0].mxu0
        %v4744 = vadd.f32 %v4551, %v4743
        %v4745 = vpop.f32.mrb[0].mxu0
        %v4746 = vadd.f32 %v4553, %v4745
        %4747 = vmatprep.mubr.bf16.mxu0 %v3233
        %4748 = vmatmul.mubr.bf16.gmra.mrb[0].mxu0 %v3232
        %v4749 = vpop.f32.mrb[0].mxu0
        %v4750 = vadd.f32 %v4557, %v4749
        %v4751 = vpop.f32.mrb[0].mxu0
        %v4752 = vadd.f32 %v4559, %v4751
        %v4753 = vpop.f32.mrb[0].mxu0
        %v4754 = vadd.f32 %v4561, %v4753
        %v4755 = vpop.f32.mrb[0].mxu0
        %v4756 = vadd.f32 %v4563, %v4755
        %4757 = vmatprep.mubr.bf16.mxu0 %v3241
        %4758 = vmatmul.mubr.bf16.gmra.mrb[0].mxu0 %v3240
        %v4759 = vpop.f32.mrb[0].mxu0
        %v4760 = vadd.f32 %v4567, %v4759
        %v4761 = vpop.f32.mrb[0].mxu0
        %v4762 = vadd.f32 %v4569, %v4761
        %v4763 = vpop.f32.mrb[0].mxu0
        %v4764 = vadd.f32 %v4571, %v4763
        %v4765 = vpop.f32.mrb[0].mxu0
        %v4766 = vadd.f32 %v4573, %v4765
        %4767 = vmatprep.mubr.bf16.mxu0 %v3249
        %4768 = vmatmul.mubr.bf16.gmra.mrb[0].mxu0 %v3248
        %v4769 = vpop.f32.mrb[0].mxu0
        %v4770 = vadd.f32 %v4577, %v4769
        %v4771 = vpop.f32.mrb[0].mxu0
        %v4772 = vadd.f32 %v4579, %v4771
        %v4773 = vpop.f32.mrb[0].mxu0
        %v4774 = vadd.f32 %v4581, %v4773
        %v4775 = vpop.f32.mrb[0].mxu0
        %v4776 = vadd.f32 %v4583, %v4775
        %4777 = vmatprep.mubr.bf16.mxu0 %v3257
        %4778 = vmatmul.mubr.bf16.gmra.mrb[0].mxu0 %v3256
        %v4779 = vpop.f32.mrb[0].mxu0
        %v4780 = vadd.f32 %v4587, %v4779
        %v4781 = vpop.f32.mrb[0].mxu0
        %v4782 = vadd.f32 %v4589, %v4781
        %v4783 = vpop.f32.mrb[0].mxu0
        %v4784 = vadd.f32 %v4591, %v4783
        %v4785 = vpop.f32.mrb[0].mxu0
        %v4786 = vadd.f32 %v4593, %v4785
        %4787 = vmatprep.mubr.bf16.mxu0 %v3265
        %4788 = vmatmul.mubr.bf16.gmra.mrb[0].mxu0 %v3264
        %v4789 = vpop.f32.mrb[0].mxu0
        %v4790 = vadd.f32 %v4597, %v4789
        %v4791 = vpop.f32.mrb[0].mxu0
        %v4792 = vadd.f32 %v4599, %v4791
        %v4793 = vpop.f32.mrb[0].mxu0
        %v4794 = vadd.f32 %v4601, %v4793
        %v4795 = vpop.f32.mrb[0].mxu0
        %v4796 = vadd.f32 %v4603, %v4795
        %4797 = vmatprep.mubr.bf16.mxu0 %v3273
        %4798 = vmatmul.mubr.bf16.gmra.mrb[0].mxu0 %v3272
        %v4799 = vpop.f32.mrb[0].mxu0
        %v4800 = vadd.f32 %v4607, %v4799
        %v4801 = vpop.f32.mrb[0].mxu0
        %v4802 = vadd.f32 %v4609, %v4801
        %v4803 = vpop.f32.mrb[0].mxu0
        %v4804 = vadd.f32 %v4611, %v4803
        %v4805 = vpop.f32.mrb[0].mxu0
        %v4806 = vadd.f32 %v4613, %v4805
        %4807 = vmatprep.mubr.bf16.mxu0 %v3281
        %4808 = vmatmul.mubr.bf16.gmra.mrb[0].mxu0 %v3280
        %v4809 = vpop.f32.mrb[0].mxu0
        %v4810 = vadd.f32 %v4617, %v4809
        %v4811 = vpop.f32.mrb[0].mxu0
        %v4812 = vadd.f32 %v4619, %v4811
        %v4813 = vpop.f32.mrb[0].mxu0
        %v4814 = vadd.f32 %v4621, %v4813
        %v4815 = vpop.f32.mrb[0].mxu0
        %v4816 = vadd.f32 %v4623, %v4815
        %4817 = vmatprep.mubr.bf16.mxu0 %v3289
        %4818 = vmatmul.mubr.bf16.gmra.mrb[0].mxu0 %v3288
        %v4819 = vpop.f32.mrb[0].mxu0
        %v4820 = vadd.f32 %v4627, %v4819
        %v4821 = vpop.f32.mrb[0].mxu0
        %v4822 = vadd.f32 %v4629, %v4821
        %v4823 = vpop.f32.mrb[0].mxu0
        %v4824 = vadd.f32 %v4631, %v4823
        %v4825 = vpop.f32.mrb[0].mxu0
        %v4826 = vadd.f32 %v4633, %v4825
        %4827 = vmatprep.mubr.bf16.mxu0 %v3297
        %4828 = vmatmul.mubr.bf16.gmra.mrb[0].mxu0 %v3296
        %v4829 = vpop.f32.mrb[0].mxu0
        %v4830 = vadd.f32 %v4637, %v4829
        %v4831 = vpop.f32.mrb[0].mxu0
        %v4832 = vadd.f32 %v4639, %v4831
        %v4833 = vpop.f32.mrb[0].mxu0
        %v4834 = vadd.f32 %v4641, %v4833
        %v4835 = vpop.f32.mrb[0].mxu0
        %v4836 = vadd.f32 %v4643, %v4835
        %4837 = vmatprep.mubr.bf16.mxu0 %v3305
        %4838 = vmatmul.mubr.bf16.gmra.mrb[0].mxu0 %v3304
        %v4839 = vpop.f32.mrb[0].mxu0
        %v4840 = vadd.f32 %v4647, %v4839
        %v4841 = vpop.f32.mrb[0].mxu0
        %v4842 = vadd.f32 %v4649, %v4841
        %v4843 = vpop.f32.mrb[0].mxu0
        %v4844 = vadd.f32 %v4651, %v4843
        %v4845 = vpop.f32.mrb[0].mxu0
        %v4846 = vadd.f32 %v4653, %v4845
        %4847 = vmatprep.mubr.bf16.mxu0 %v3313
        %4848 = vmatmul.mubr.bf16.gmra.mrb[0].mxu0 %v3312
        %v4849 = vpop.f32.mrb[0].mxu0
        %v4850 = vadd.f32 %v4657, %v4849
        %v4851 = vpop.f32.mrb[0].mxu0
        %v4852 = vadd.f32 %v4659, %v4851
        %v4853 = vpop.f32.mrb[0].mxu0
        %v4854 = vadd.f32 %v4661, %v4853
        %v4855 = vpop.f32.mrb[0].mxu0
        %v4856 = vadd.f32 %v4663, %v4855
        %4857 = vmatprep.mubr.bf16.mxu0 %v3321
        %4858 = vmatmul.mubr.bf16.gmra.mrb[0].mxu0 %v3320
        %v4859 = vpop.f32.mrb[0].mxu0
        %v4860 = vadd.f32 %v4667, %v4859
        %v4861 = vpop.f32.mrb[0].mxu0
        %v4862 = vadd.f32 %v4669, %v4861
        %v4863 = vpop.f32.mrb[0].mxu0
        %v4864 = vadd.f32 %v4671, %v4863
        %v4865 = vpop.f32.mrb[0].mxu0
        %v4866 = vadd.f32 %v4673, %v4865
        %4867 = vmatprep.mubr.bf16.mxu0 %v3329
        %4868 = vmatmul.mubr.bf16.gmra.mrb[0].mxu0 %v3328
        %v4869 = vpop.f32.mrb[0].mxu0
        %v4870 = vadd.f32 %v4677, %v4869
        %v4871 = vpop.f32.mrb[0].mxu0
        %v4872 = vadd.f32 %v4679, %v4871
        %v4873 = vpop.f32.mrb[0].mxu0
        %v4874 = vadd.f32 %v4681, %v4873
        %v4875 = vpop.f32.mrb[0].mxu0
        %v4876 = vadd.f32 %v4683, %v4875
        %4877 = vmatprep.mubr.bf16.mxu0 %v3337
        %4878 = vmatmul.mubr.bf16.gmra.mrb[0].mxu0 %v3336
        %v4879 = vpop.f32.mrb[0].mxu0
        %v4880 = vadd.f32 %v4687, %v4879
        %v4881 = vpop.f32.mrb[0].mxu0
        %v4882 = vadd.f32 %v4689, %v4881
        %v4883 = vpop.f32.mrb[0].mxu0
        %v4884 = vadd.f32 %v4691, %v4883
        %v4885 = vpop.f32.mrb[0].mxu0
        %v4886 = vadd.f32 %v4693, %v4885
        %4887 = vmatprep.mubr.bf16.mxu0 %v3345
        %4888 = vmatmul.mubr.bf16.gmra.mrb[0].mxu0 %v3344
        %v4889 = vpop.f32.mrb[0].mxu0
        %v4890 = vadd.f32 %v4697, %v4889
        %v4891 = vpop.f32.mrb[0].mxu0
        %v4892 = vadd.f32 %v4699, %v4891
        %v4893 = vpop.f32.mrb[0].mxu0
        %v4894 = vadd.f32 %v4701, %v4893
        %v4895 = vpop.f32.mrb[0].mxu0
        %v4896 = vadd.f32 %v4703, %v4895
        %4897 = vdwg.mxu0
        %4898 = vst [vmem:[%s285] sm:$0xff] %v4740
        %4899 = vst [vmem:[%s285 + $0x8] sm:$0xff] %v4742
        %4900 = vst [vmem:[%s285 + $0x10] sm:$0xff] %v4744
        %4901 = vst [vmem:[%s285 + $0x18] sm:$0xff] %v4746
        %4902 = vst [vmem:[%s285 + $0x20] sm:$0xff] %v4750
        %4903 = vst [vmem:[%s285 + $0x28] sm:$0xff] %v4752
        %4904 = vst [vmem:[%s285 + $0x30] sm:$0xff] %v4754
        %4905 = vst [vmem:[%s285 + $0x38] sm:$0xff] %v4756
        %4906 = vst [vmem:[%s285 + $0x40] sm:$0xff] %v4760
        %4907 = vst [vmem:[%s285 + $0x48] sm:$0xff] %v4762
        %4908 = vst [vmem:[%s285 + $0x50] sm:$0xff] %v4764
        %4909 = vst [vmem:[%s285 + $0x58] sm:$0xff] %v4766
        %4910 = vst [vmem:[%s285 + $0x60] sm:$0xff] %v4770
        %4911 = vst [vmem:[%s285 + $0x68] sm:$0xff] %v4772
        %4912 = vst [vmem:[%s285 + $0x70] sm:$0xff] %v4774
        %4913 = vst [vmem:[%s285 + $0x78] sm:$0xff] %v4776
        %4914 = vst [vmem:[%s285 + $0x80] sm:$0xff] %v4780
        %4915 = vst [vmem:[%s285 + $0x88] sm:$0xff] %v4782
        %4916 = vst [vmem:[%s285 + $0x90] sm:$0xff] %v4784
        %4917 = vst [vmem:[%s285 + $0x98] sm:$0xff] %v4786
        %4918 = vst [vmem:[%s285 + $0xa0] sm:$0xff] %v4790
        %4919 = vst [vmem:[%s285 + $0xa8] sm:$0xff] %v4792
        %4920 = vst [vmem:[%s285 + $0xb0] sm:$0xff] %v4794
        %4921 = vst [vmem:[%s285 + $0xb8] sm:$0xff] %v4796
        %4922 = vst [vmem:[%s285 + $0xc0] sm:$0xff] %v4800
        %4923 = vst [vmem:[%s285 + $0xc8] sm:$0xff] %v4802
        %4924 = vst [vmem:[%s285 + $0xd0] sm:$0xff] %v4804
        %4925 = vst [vmem:[%s285 + $0xd8] sm:$0xff] %v4806
        %4926 = vst [vmem:[%s285 + $0xe0] sm:$0xff] %v4810
        %4927 = vst [vmem:[%s285 + $0xe8] sm:$0xff] %v4812
        %4928 = vst [vmem:[%s285 + $0xf0] sm:$0xff] %v4814
        %4929 = vst [vmem:[%s285 + $0xf8] sm:$0xff] %v4816
        %4930 = vst [vmem:[%s285 + $0x100] sm:$0xff] %v4820
        %4931 = vst [vmem:[%s285 + $0x108] sm:$0xff] %v4822
        %4932 = vst [vmem:[%s285 + $0x110] sm:$0xff] %v4824
        %4933 = vst [vmem:[%s285 + $0x118] sm:$0xff] %v4826
        %4934 = vst [vmem:[%s285 + $0x120] sm:$0xff] %v4830
        %4935 = vst [vmem:[%s285 + $0x128] sm:$0xff] %v4832
        %4936 = vst [vmem:[%s285 + $0x130] sm:$0xff] %v4834
        %4937 = vst [vmem:[%s285 + $0x138] sm:$0xff] %v4836
        %4938 = vst [vmem:[%s285 + $0x140] sm:$0xff] %v4840
        %4939 = vst [vmem:[%s285 + $0x148] sm:$0xff] %v4842
        %4940 = vst [vmem:[%s285 + $0x150] sm:$0xff] %v4844
        %4941 = vst [vmem:[%s285 + $0x158] sm:$0xff] %v4846
        %4942 = vst [vmem:[%s285 + $0x160] sm:$0xff] %v4850
        %4943 = vst [vmem:[%s285 + $0x168] sm:$0xff] %v4852
        %4944 = vst [vmem:[%s285 + $0x170] sm:$0xff] %v4854
        %4945 = vst [vmem:[%s285 + $0x178] sm:$0xff] %v4856
        %4946 = vst [vmem:[%s285 + $0x180] sm:$0xff] %v4860
        %4947 = vst [vmem:[%s285 + $0x188] sm:$0xff] %v4862
        %4948 = vst [vmem:[%s285 + $0x190] sm:$0xff] %v4864
        %4949 = vst [vmem:[%s285 + $0x198] sm:$0xff] %v4866
        %4950 = vst [vmem:[%s285 + $0x1a0] sm:$0xff] %v4870
        %4951 = vst [vmem:[%s285 + $0x1a8] sm:$0xff] %v4872
        %4952 = vst [vmem:[%s285 + $0x1b0] sm:$0xff] %v4874
        %4953 = vst [vmem:[%s285 + $0x1b8] sm:$0xff] %v4876
        %4954 = vst [vmem:[%s285 + $0x1c0] sm:$0xff] %v4880
        %4955 = vst [vmem:[%s285 + $0x1c8] sm:$0xff] %v4882
        %4956 = vst [vmem:[%s285 + $0x1d0] sm:$0xff] %v4884
        %4957 = vst [vmem:[%s285 + $0x1d8] sm:$0xff] %v4886
        %4958 = vst [vmem:[%s285 + $0x1e0] sm:$0xff] %v4890
        %4959 = vst [vmem:[%s285 + $0x1e8] sm:$0xff] %v4892
        %4960 = vst [vmem:[%s285 + $0x1f0] sm:$0xff] %v4894
        %4961 = vst [vmem:[%s285 + $0x1f8] sm:$0xff] %v4896
        %s4962 = sand.u32 %s142, 1
        %s4963 = scalar_lea.sflag [#allocation4], %s4962
        %s4964 = sand.u32 %s142, 1
        %s4965 = smul.addr %s4964, 512
        %s4966 = scalar_lea.vmem [#allocation10], %s4965
        // Predicated region
        $region57: #{tpu_custom_call.1} parent=39 // pred_check
          %p4967 = pneg %p152
        $region58: #{tpu_custom_call.1} parent=39 // pred_check_branch
          %4969 = sbr.rel (%p4967) target = $region60
        $region59: #{tpu_custom_call.1} parent=39 // pred_region
          %s4970 = smul.u32 32, %s24
          %s4972 = ssub.s32 8192, 8192
          %4973 = vsyncadd %s4963, %s4972
          %s4974 = smul.addr %s4970, 2
          %s4975 = smul.addr %s4974, 128
          %s4976 = scalar_lea.hbm %s5, %s4975
          %s4977 = sshll.u32 %s4966, 4
          %s4978 = int_to_ptr.vmem [resolvable:$true] %s4977
          %4983 = dma.vmem_to_hbm [thread:$0]  %s4978, 8192, %s4976, %s4963, 256, 256, 16
        $region60: #{tpu_custom_call.1} parent=39 // pred_fallthru
          _
      $region40: #{tpu_custom_call.1} parent=5 // pred_fallthru
        _
      %p4984 = scmp.le.s32.totalorder 2, %s19
      // Predicated region
      $region61: #{tpu_custom_call.1} parent=5 // pred_check
        %p4985 = pneg %p4984
      $region62: #{tpu_custom_call.1} parent=5 // pred_check_branch
        %4987 = sbr.rel (%p4985) target = $region64
      $region63: #{tpu_custom_call.1} parent=5 // pred_region
        %s4988 = ssub.s32 %s19, 2
        // Predicated region
        $region65: #{tpu_custom_call.1} parent=63 // pred_check
          %p4989 = pneg %p158
        $region66: #{tpu_custom_call.1} parent=63 // pred_check_branch
          %4991 = sbr.rel (%p4989) target = $region68
        $region67: #{tpu_custom_call.1} parent=63 // pred_region
          %s4992 = sand.u32 %s143, 1
          %s4993 = scalar_lea.sflag [#allocation4], %s4992
          %s4994 = sand.u32 %s143, 1
          %s4995 = smul.addr %s4994, 512
          %s4996 = scalar_lea.vmem [#allocation10], %s4995
          %4997 = dma.done %s4993, 8192
        $region68: #{tpu_custom_call.1} parent=63 // pred_fallthru
          _
      $region64: #{tpu_custom_call.1} parent=5 // pred_fallthru
        _
    $region6: #{tpu_custom_call.1} parent=1 // loop_footer
      %s23 = sadd.s32 1, %s19
    $region7: #{tpu_custom_call.1} parent=1 // loop_footer_branch
      %18 = sbr.rel target = $region3
    $region8: #{tpu_custom_call.1} parent=1 // loop_exit
      _
    %4998 = vsyncpa [#allocation3], 1
    %s4999 = scalar_lea.sflag [#allocation3], 1
    %5000 = vsyncpa %s4999, 1
    %5001 = vsyncpa [#allocation6], 1
    %5002 = vsyncpa [#allocation9], 1
    %5003 = vsyncpa [#allocation4], 1
    %s5004 = scalar_lea.sflag [#allocation4], 1
    %5005 = vsyncpa %s5004, 1

</llo_original>
